<compile_context>
chip_gen: v5e
topology: v5e:2x2
jax: 0.10.0
libtpu: 0.0.40
codegen_flags: <defaults>
</compile_context>

<pallas_src>
import functools
import math

import jax
import jax.numpy as jnp
from jax.experimental import pallas as pl
from jax.experimental.pallas import tpu as pltpu


# ----------------------------------------------------------------------------
# Small helpers
# ----------------------------------------------------------------------------
def _round_up(x, m):
    return ((x + m - 1) // m) * m


def _pad_axis(x, target, axis):
    amt = target - x.shape[axis]
    if amt <= 0:
        return x
    widths = [(0, 0)] * x.ndim
    widths[axis] = (0, amt)
    return jnp.pad(x, widths)


def _layer_norm(x, g, b, d_real, ch_mask, eps=1e-5):
    """LayerNorm over the first d_real channels of a zero-padded last dim."""
    inv_d = 1.0 / d_real
    mu = jnp.sum(x, axis=-1, keepdims=True) * inv_d      # padded channels are zero
    xc = x - mu
    if ch_mask is not None:
        xc = jnp.where(ch_mask, xc, 0.0)                  # keep padded channels at 0
    var = jnp.sum(xc * xc, axis=-1, keepdims=True) * inv_d
    return xc * jax.lax.rsqrt(var + eps) * g + b


# ----------------------------------------------------------------------------
# Fused kernel: one grid step = one encoder layer on a block of Bb sequences.
# ----------------------------------------------------------------------------
def _fused_layers_kernel(*refs, nhead, attn_mask, self_attn, d_real, lk_real):
    if self_attn:
        (xq_ref,
         ln1_g_ref, ln1_b_ref, wq_ref, bq_ref, wkv_ref, bkv_ref, wo_ref, bo_ref,
         ln2_g_ref, ln2_b_ref, w1_ref, b1_ref, w2_ref, b2_ref,
         out_ref, h_ref) = refs
        xk_ref = None
    else:
        (xq_ref, xk_ref,
         ln1_g_ref, ln1_b_ref, wq_ref, bq_ref, wkv_ref, bkv_ref, wo_ref, bo_ref,
         ln2_g_ref, ln2_b_ref, w1_ref, b1_ref, w2_ref, b2_ref,
         out_ref, h_ref) = refs

    layer = pl.program_id(1)
    n_layer = pl.num_programs(1)

    Bb, Lq, D = h_ref.shape
    Lk = Lq if self_attn else xk_ref.shape[1]
    hd = D // nhead

    # Load the embeddings into the resident activation on the first layer.
    @pl.when(layer == 0)
    def _():
        h_ref[...] = xq_ref[...]

    ch_mask = None
    if d_real != D:
        ch_mask = jax.lax.broadcasted_iota(jnp.int32, (1, D), 1) < d_real

    ln1_g = ln1_g_ref[...]
    ln1_b = ln1_b_ref[...]

    x2 = h_ref[...].reshape(Bb * Lq, D)
    # NOTE: residuals are intentionally taken from the *layernormed* tensors
    # (q_ln / x_ln) — this matches the PyTorch reference, do not "fix".
    q_ln = _layer_norm(x2, ln1_g, ln1_b, d_real, ch_mask)             # f32 (residual)
    q_ln_bf = q_ln.astype(jnp.bfloat16)
    if self_attn:
        k_ln_bf = q_ln_bf
    else:
        k_ln_bf = _layer_norm(xk_ref[...].reshape(Bb * Lk, D),
                              ln1_g, ln1_b, d_real, ch_mask).astype(jnp.bfloat16)

    # --- projections: bf16 operands, f32 accumulation (scale folded into wq/bq) ---
    q = jnp.dot(q_ln_bf, wq_ref[...], preferred_element_type=jnp.float32) + bq_ref[...]
    kv = jnp.dot(k_ln_bf, wkv_ref[...], preferred_element_type=jnp.float32) + bkv_ref[...]

    # --- head-batched attention: merged (Bb*nhead) batch axis, no per-head loop ---
    q4 = jnp.swapaxes(q.astype(jnp.bfloat16).reshape(Bb, Lq, nhead, hd), 1, 2)
    q4 = q4.reshape(Bb * nhead, Lq, hd)
    k4 = jnp.swapaxes(kv[:, :D].astype(jnp.bfloat16).reshape(Bb, Lk, nhead, hd), 1, 2)
    k4 = k4.reshape(Bb * nhead, Lk, hd)
    v4 = jnp.swapaxes(kv[:, D:].astype(jnp.bfloat16).reshape(Bb, Lk, nhead, hd), 1, 2)
    v4 = v4.reshape(Bb * nhead, Lk, hd)

    logits = jnp.einsum('bqd,bkd->bqk', q4, k4,
                        preferred_element_type=jnp.float32)           # (Bb*nhead, Lq, Lk)

    need_kpad = lk_real != Lk
    if attn_mask or need_kpad:
        row = jax.lax.broadcasted_iota(jnp.int32, (Lq, Lk), 0)
        col = jax.lax.broadcasted_iota(jnp.int32, (Lq, Lk), 1)
        if attn_mask:
            bad = col > row
            if need_kpad:
                bad = jnp.logical_or(bad, col >= lk_real)
            # get_future_mask: +1.0 on/below diagonal, -inf above (added to logits).
            mask = jnp.where(bad, -jnp.inf, 1.0)
        else:
            mask = jnp.where(col >= lk_real, -jnp.inf, 0.0)
        logits = logits + mask[None, :, :]

    logits = logits - jnp.max(logits, axis=-1, keepdims=True)
    p = jnp.exp(logits)
    p = p * pl.reciprocal(jnp.sum(p, axis=-1, keepdims=True), approx=True)

    ctx = jnp.einsum('bqk,bkd->bqd', p.astype(jnp.bfloat16), v4,
                     preferred_element_type=jnp.float32)              # (Bb*nhead, Lq, hd)
    ctx = jnp.swapaxes(ctx.astype(jnp.bfloat16).reshape(Bb, nhead, Lq, hd), 1, 2)
    ctx = ctx.reshape(Bb * Lq, D)                                     # lane-dense, no scratch

    attn = jnp.dot(ctx, wo_ref[...], preferred_element_type=jnp.float32) + bo_ref[...]

    x1 = q_ln + attn                                                  # residual from q_ln

    # --- feed-forward block -------------------------------------------------------
    x_ln = _layer_norm(x1, ln2_g_ref[...], ln2_b_ref[...], d_real, ch_mask)
    h1 = jnp.dot(x_ln.astype(jnp.bfloat16), w1_ref[...],
                 preferred_element_type=jnp.float32) + b1_ref[...]
    h1 = jnp.maximum(h1, 0.0)
    h2 = jnp.dot(h1.astype(jnp.bfloat16), w2_ref[...],
                 preferred_element_type=jnp.float32) + b2_ref[...]

    h_new = (x_ln + h2).reshape(Bb, Lq, D)                            # residual from x_ln
    h_ref[...] = h_new

    @pl.when(layer == n_layer - 1)
    def _():
        out_ref[...] = h_new.astype(out_ref.dtype)


# ----------------------------------------------------------------------------
# Wrapper: pad / stack weights, size VMEM per generation, launch one pallas_call.
# ----------------------------------------------------------------------------
def fused_transformer(xq, xk, params, *, nhead, attn_mask, b_block=None):
    """xq: (B, Lq, D) f32; xk: (B, Lk, D) f32 or None (per-layer self-attention)."""
    self_attn = xk is None
    B, Lq_real, D_real = xq.shape
    Lk_real = Lq_real if self_attn else xk.shape[1]
    layers = params["layers"]
    n_layer = len(layers)
    hd_real = D_real // nhead
    dff = layers[0]["w1"].shape[-1]

    # --- lane/sublane padding: D -> multiple of 128 (per-head aware), L -> mult of 8.
    D_pad = _round_up(D_real, 128)
    while D_pad % nhead:
        D_pad += 128
    hd_pad = D_pad // nhead
    dff_pad = _round_up(dff, 128)
    Lq_pad = _round_up(Lq_real, 8)
    Lk_pad = Lq_pad if self_attn else _round_up(Lk_real, 8)

    # --- stack + pad per-layer weights (bf16 MXU operands, f32 biases / LN params) ---
    def stack(name):
        return jnp.stack([lp[name] for lp in layers], axis=0).astype(jnp.float32)

    scale = 1.0 / math.sqrt(hd_real)

    def head_pad_cols(w):        # (L, D_real, D_real) -> (L, D_pad, D_pad), head-aware cols
        w = w.reshape(n_layer, D_real, nhead, hd_real)
        w = _pad_axis(w, hd_pad, 3).reshape(n_layer, D_real, D_pad)
        return _pad_axis(w, D_pad, 1)

    def head_pad_bias(b):        # (L, 1, D_real) -> (L, 1, D_pad)
        b = b.reshape(n_layer, 1, nhead, hd_real)
        return _pad_axis(b, hd_pad, 3).reshape(n_layer, 1, D_pad)

    # Zero-padded gammas/betas keep padded channels identically 0 through every layer.
    ln1_g = _pad_axis(stack("ln1_g"), D_pad, 2)
    ln1_b = _pad_axis(stack("ln1_b"), D_pad, 2)
    ln2_g = _pad_axis(stack("ln2_g"), D_pad, 2)
    ln2_b = _pad_axis(stack("ln2_b"), D_pad, 2)

    wq = head_pad_cols(stack("wq") * scale).astype(jnp.bfloat16)   # fold 1/sqrt(hd)
    bq = head_pad_bias(stack("bq") * scale)
    wkv = jnp.concatenate([head_pad_cols(stack("wk")),             # fused K+V matmul
                           head_pad_cols(stack("wv"))], axis=-1).astype(jnp.bfloat16)
    bkv = jnp.concatenate([head_pad_bias(stack("bk")),
                           head_pad_bias(stack("bv"))], axis=-1)

    wo = stack("wo").reshape(n_layer, nhead, hd_real, D_real)
    wo = _pad_axis(wo, hd_pad, 2).reshape(n_layer, D_pad, D_real)
    wo = _pad_axis(wo, D_pad, 2).astype(jnp.bfloat16)
    bo = _pad_axis(stack("bo"), D_pad, 2)

    w1 = _pad_axis(_pad_axis(stack("w1"), D_pad, 1), dff_pad, 2).astype(jnp.bfloat16)
    b1 = _pad_axis(stack("b1"), dff_pad, 2)
    w2 = _pad_axis(_pad_axis(stack("w2"), dff_pad, 1), D_pad, 2).astype(jnp.bfloat16)
    b2 = _pad_axis(stack("b2"), D_pad, 2)

    weights = [ln1_g, ln1_b, wq, bq, wkv, bkv, wo, bo, ln2_g, ln2_b, w1, b1, w2, b2]
    w_layer_bytes = sum(int(w.size) * w.dtype.itemsize for w in weights) // n_layer
    w_total_bytes = sum(int(w.size) * w.dtype.itemsize for w in weights)

    # --- per-generation VMEM budget & batch-block selection ---------------------------
    try:
        vmem_cap = int(pltpu.get_tpu_info().vmem_capacity_bytes)
    except Exception:  # non-TPU tracing / older runtimes
        vmem_cap = 128 * 1024 * 1024
    budget = int(0.8 * vmem_cap)        # ~51 MiB on v7x (64 MiB/TC), ~102 MiB on v5e/v6e

    f32b, bf16b = 4, 2

    def est_vmem(bb):
        io = 2 * bb * Lq_pad * D_pad * f32b                      # xq blocks (dbl-buffered)
        if not self_attn:
            io += 2 * bb * Lk_pad * D_pad * f32b                 # xk blocks
        io += 2 * bb * Lq_pad * D_pad * f32b                     # out blocks
        io += 2 * w_layer_bytes                                  # per-layer weights x2
        scr = bb * Lq_pad * D_pad * f32b                         # resident activation h
        tmp = bb * Lq_pad * D_pad * (3 * f32b + 2 * bf16b)       # q_ln/x1/x_ln + casts
        tmp += bb * Lk_pad * D_pad * (2 * f32b + bf16b)          # kv / k_ln
        tmp += bb * (Lq_pad + 2 * Lk_pad) * D_pad * bf16b        # q4/k4/v4
        tmp += bb * nhead * Lq_pad * Lk_pad * (f32b + bf16b)     # logits + probs
        tmp += bb * Lq_pad * D_pad * (f32b + bf16b)              # ctx
        tmp += bb * Lq_pad * dff_pad * (f32b + bf16b)            # FFN hidden
        return io + scr + tmp

    if b_block is None:
        b_block = 1
        for cand in range(min(B, 16), 0, -1):
            if est_vmem(cand) <= budget:
                b_block = cand
                break
        if vmem_cap <= 80 * 1024 * 1024 and B >= 2:
            # v7x-class (64 MiB VMEM / 2 TCs): keep >=2 batch chunks so the "parallel"
            # batch axis can shard across both TensorCores.
            b_block = min(b_block, -(-B // 2))

    num_bb = -(-B // b_block)
    Bpad = num_bb * b_block

    # --- pad activations --------------------------------------------------------------
    xq_p = jnp.pad(xq, ((0, Bpad - B), (0, Lq_pad - Lq_real), (0, D_pad - D_real)))
    if not self_attn:
        xk_p = jnp.pad(xk, ((0, Bpad - B), (0, Lk_pad - Lk_real), (0, D_pad - D_real)))

    def wspec(arr):
        tail = tuple(arr.shape[1:])
        nd = len(tail)
        return pl.BlockSpec((None,) + tail, lambda bb, l, _nd=nd: (l,) + (0,) * _nd)

    x_spec = pl.BlockSpec((b_block, Lq_pad, D_pad), lambda bb, l: (bb, 0, 0))
    out_spec = pl.BlockSpec((b_block, Lq_pad, D_pad), lambda bb, l: (bb, 0, 0))

    # Self-attention specialization: the key stream is the resident activation, so xk
    # is never passed (no dead HBM->VMEM DMA).
    inputs = [xq_p]
    in_specs = [x_spec]
    if not self_attn:
        inputs.append(xk_p)
        in_specs.append(pl.BlockSpec((b_block, Lk_pad, D_pad), lambda bb, l: (bb, 0, 0)))
    inputs += weights
    in_specs += [wspec(w) for w in weights]

    flops_layer = 2 * Bpad * (
        Lq_pad * D_pad * D_pad            # Q projection
        + Lk_pad * D_pad * 2 * D_pad      # fused KV projection
        + 2 * Lq_pad * Lk_pad * D_pad     # scores + probs @ V (all heads)
        + Lq_pad * D_pad * D_pad          # output projection
        + 2 * Lq_pad * D_pad * dff_pad)   # feed-forward
    cost = pl.CostEstimate(
        flops=int(n_layer * flops_layer),
        transcendentals=int(n_layer * Bpad * nhead * Lq_pad * Lk_pad),
        bytes_accessed=int(f32b * (xq_p.size + (0 if self_attn else xk_p.size)
                                   + Bpad * Lq_pad * D_pad)
                           + num_bb * w_total_bytes),
    )

    kernel = functools.partial(_fused_layers_kernel, nhead=nhead, attn_mask=attn_mask,
                               self_attn=self_attn, d_real=D_real, lk_real=Lk_real)

    out = pl.pallas_call(
        kernel,
        out_shape=jax.ShapeDtypeStruct((Bpad, Lq_pad, D_pad), jnp.float32),
        grid=(num_bb, n_layer),                       # layer axis innermost / "arbitrary"
        in_specs=in_specs,
        out_specs=out_spec,
        scratch_shapes=[pltpu.VMEM((b_block, Lq_pad, D_pad), jnp.float32)],  # resident h
        compiler_params=pltpu.CompilerParams(
            dimension_semantics=("parallel", "arbitrary"),
            vmem_limit_bytes=budget),
        cost_estimate=cost,
    )(*inputs)
    return out[:B, :Lq_real, :D_real]


# ----------------------------------------------------------------------------
# Sinusoidal positional embedding (fairseq / MulT style) — plain JAX glue.
# ----------------------------------------------------------------------------
def sinusoidal_table(num_embeddings, dim, padding_idx):
    half = dim // 2
    freq = math.log(10000.0) / (half - 1)
    freq = jnp.exp(jnp.arange(half, dtype=jnp.float32) * -freq)
    ang = jnp.arange(num_embeddings, dtype=jnp.float32)[:, None] * freq[None, :]
    emb = jnp.concatenate([jnp.sin(ang), jnp.cos(ang)], axis=1)
    if dim % 2 == 1:
        emb = jnp.concatenate([emb, jnp.zeros((num_embeddings, 1), jnp.float32)], axis=1)
    if padding_idx is not None:
        emb = emb.at[padding_idx].set(0.0)
    return emb


def positional_embedding(x_first_channel, d_model, padding_idx=0, init_size=128):
    # x_first_channel: (B, L) float values (x[:, :, 0] in the reference).
    B, L = x_first_channel.shape
    mask = (x_first_channel != padding_idx).astype(jnp.int32)
    positions = jnp.cumsum(mask, axis=1) * mask + padding_idx        # make_positions
    num_emb = max(init_size, padding_idx + 1 + L)
    table = sinusoidal_table(num_emb, d_model, padding_idx)
    return jnp.take(table, positions, axis=0)                        # (B, L, D)


# ----------------------------------------------------------------------------
# Full CrossmodalTransformer forward (eval mode: dropouts are identity).
# ----------------------------------------------------------------------------
def crossmodal_transformer(x_query, x_key, params, *, d_model, nhead, attn_mask,
                           scale_embedding=True, b_block=None):
    emb_scale = math.sqrt(d_model) if scale_embedding else 1.0
    xq = emb_scale * x_query + positional_embedding(x_query[:, :, 0], d_model)
    if x_key is None:
        xk = None
    else:
        xk = emb_scale * x_key + positional_embedding(x_key[:, :, 0], d_model)
        xk = xk.astype(jnp.float32)
    return fused_transformer(xq.astype(jnp.float32), xk, params,
                             nhead=nhead, attn_mask=attn_mask, b_block=b_block)


# ----------------------------------------------------------------------------
# Deterministic synthetic parameter init (f32 master weights).
# ----------------------------------------------------------------------------
def init_params(key, d_model, n_layer):
    dff = 4 * d_model
    layers = []
    for i in range(n_layer):
        k = jax.random.fold_in(key, i)
        ks = jax.random.split(k, 6)
        w = lambda kk, shape: (0.05 * jax.random.normal(kk, shape)).astype(jnp.float32)
        layers.append({
            "ln1_g": jnp.ones((1, d_model), jnp.float32),
            "ln1_b": jnp.zeros((1, d_model), jnp.float32),
            # projection weights stored pre-transposed: y = x @ W + b
            "wq": w(ks[0], (d_model, d_model)), "bq": jnp.zeros((1, d_model), jnp.float32),
            "wk": w(ks[1], (d_model, d_model)), "bk": jnp.zeros((1, d_model), jnp.float32),
            "wv": w(ks[2], (d_model, d_model)), "bv": jnp.zeros((1, d_model), jnp.float32),
            "wo": w(ks[3], (d_model, d_model)), "bo": jnp.zeros((1, d_model), jnp.float32),
            "ln2_g": jnp.ones((1, d_model), jnp.float32),
            "ln2_b": jnp.zeros((1, d_model), jnp.float32),
            "w1": w(ks[4], (d_model, dff)), "b1": jnp.zeros((1, dff), jnp.float32),
            "w2": w(ks[5], (dff, d_model)), "b2": jnp.zeros((1, d_model), jnp.float32),
        })
    return {"layers": layers}


# ----------------------------------------------------------------------------
# Pure-JAX f32 reference of the same math (sanity check, original unpadded dims).
# ----------------------------------------------------------------------------
def _encoder_block_ref(xq, xk, p, nhead, attn_mask):
    def ln(x, g, b):
        mu = jnp.mean(x, -1, keepdims=True)
        var = jnp.mean((x - mu) ** 2, -1, keepdims=True)
        return (x - mu) * jax.lax.rsqrt(var + 1e-5) * g + b

    def one_seq(xq1, xk1):
        Lq, D = xq1.shape
        Lk = xk1.shape[0]
        hd = D // nhead
        q_ln = ln(xq1, p["ln1_g"], p["ln1_b"])
        k_ln = ln(xk1, p["ln1_g"], p["ln1_b"])
        q = q_ln @ p["wq"] + p["bq"]
        k = k_ln @ p["wk"] + p["bk"]
        v = k_ln @ p["wv"] + p["bv"]
        row = jnp.arange(Lq)[:, None]
        col = jnp.arange(Lk)[None, :]
        mask = jnp.where(col > row, -jnp.inf, 1.0)
        outs = []
        for h in range(nhead):
            sl = slice(h * hd, (h + 1) * hd)
            logits = (q[:, sl] / math.sqrt(hd)) @ k[:, sl].T
            if attn_mask:
                logits = logits + mask
            pr = jax.nn.softmax(logits, axis=-1)
            outs.append(pr @ v[:, sl])
        attn = jnp.concatenate(outs, -1) @ p["wo"] + p["bo"]
        x = q_ln + attn
        x_ln = ln(x, p["ln2_g"], p["ln2_b"])
        h2 = jnp.maximum(x_ln @ p["w1"] + p["b1"], 0.0) @ p["w2"] + p["b2"]
        return x_ln + h2

    return jax.vmap(one_seq)(xq, xk)


def crossmodal_transformer_ref(x_query, x_key, params, *, d_model, nhead, attn_mask):
    emb_scale = math.sqrt(d_model)
    xq = emb_scale * x_query + positional_embedding(x_query[:, :, 0], d_model)
    xk = None
    if x_key is not None:
        xk = emb_scale * x_key + positional_embedding(x_key[:, :, 0], d_model)
    h = xq
    for p in params["layers"]:
        k = h if xk is None else xk
        h = _encoder_block_ref(h, k, p, nhead, attn_mask)
    return h


# ----------------------------------------------------------------------------
if __name__ == "__main__":
    # Non-multiples of 8 for L and D=32 exercise the lane/sublane padding paths.
    B, Lq, Lk, D = 2, 6, 7, 32
    NHEAD, N_LAYER = 4, 2

    key = jax.random.PRNGKey(0)
    kq, kk, kp = jax.random.split(key, 3)
    x_query = jax.random.normal(kq, (B, Lq, D), dtype=jnp.float32)
    x_key = jax.random.normal(kk, (B, Lk, D), dtype=jnp.float32)
    params = init_params(kp, D, N_LAYER)

    # 1) Cross-modal attention with the causal ("future") mask.
    fwd_cross = jax.jit(functools.partial(crossmodal_transformer, d_model=D,
                                          nhead=NHEAD, attn_mask=True))
    out_c = jax.block_until_ready(fwd_cross(x_query, x_key, params))
    ref_c = crossmodal_transformer_ref(x_query, x_key, params,
                                       d_model=D, nhead=NHEAD, attn_mask=True)
    assert out_c.shape == (B, Lq, D)
    err_c = float(jnp.max(jnp.abs(out_c - ref_c)))
    # bf16 MXU operands + approx reciprocal vs f32 reference -> loosened tolerance.
    assert jnp.allclose(out_c, ref_c, atol=3e-2, rtol=3e-2), \
        f"cross-attn mismatch vs pure-JAX reference (max abs err {err_c})"

    # 2) Self-attention path (x_key=None, no mask) — no dead xk DMA in this mode.
    fwd_self = jax.jit(functools.partial(crossmodal_transformer, d_model=D,
                                         nhead=NHEAD, attn_mask=False))
    out_s = jax.block_until_ready(fwd_self(x_query, None, params))
    ref_s = crossmodal_transformer_ref(x_query, None, params,
                                       d_model=D, nhead=NHEAD, attn_mask=False)
    err_s = float(jnp.max(jnp.abs(out_s - ref_s)))
    assert jnp.allclose(out_s, ref_s, atol=3e-2, rtol=3e-2), \
        f"self-attn mismatch vs pure-JAX reference (max abs err {err_s})"

    print("KERNEL_OK")
</pallas_src>

<mosaic_0001>
module attributes {stable_mosaic.version = 11 : i64} {
  func.func @_fused_layers_kernel(%arg0: i32, %arg1: i32, %arg2: memref<2x8x128xf32, #tpu.memory_space<vmem>>, %arg3: memref<2x8x128xf32, #tpu.memory_space<vmem>>, %arg4: memref<1x1x128xf32, #tpu.memory_space<vmem>>, %arg5: memref<1x1x128xf32, #tpu.memory_space<vmem>>, %arg6: memref<1x128x128xbf16, #tpu.memory_space<vmem>>, %arg7: memref<1x1x128xf32, #tpu.memory_space<vmem>>, %arg8: memref<1x128x256xbf16, #tpu.memory_space<vmem>>, %arg9: memref<1x1x256xf32, #tpu.memory_space<vmem>>, %arg10: memref<1x128x128xbf16, #tpu.memory_space<vmem>>, %arg11: memref<1x1x128xf32, #tpu.memory_space<vmem>>, %arg12: memref<1x1x128xf32, #tpu.memory_space<vmem>>, %arg13: memref<1x1x128xf32, #tpu.memory_space<vmem>>, %arg14: memref<1x128x128xbf16, #tpu.memory_space<vmem>>, %arg15: memref<1x1x128xf32, #tpu.memory_space<vmem>>, %arg16: memref<1x128x128xbf16, #tpu.memory_space<vmem>>, %arg17: memref<1x1x128xf32, #tpu.memory_space<vmem>>, %arg18: memref<2x8x128xf32, #tpu.memory_space<vmem>>, %arg19: memref<2x8x128xf32, #tpu.memory_space<vmem>>) attributes {dimension_semantics = [#tpu.dimension_semantics<parallel>, #tpu.dimension_semantics<arbitrary>], iteration_bounds = array<i64: 1, 2>, scalar_prefetch = 0 : i64, scratch_operands = 1 : i64, tpu.core_type = #tpu.core_type<tc>, window_params = [{transform_indices = @transform_0, window_bounds = array<i64: 2, 8, 128>}, {transform_indices = @transform_1, window_bounds = array<i64: 2, 8, 128>}, {transform_indices = @transform_2, window_bounds = array<i64: 1, 1, 128>}, {transform_indices = @transform_3, window_bounds = array<i64: 1, 1, 128>}, {transform_indices = @transform_4, window_bounds = array<i64: 1, 128, 128>}, {transform_indices = @transform_5, window_bounds = array<i64: 1, 1, 128>}, {transform_indices = @transform_6, window_bounds = array<i64: 1, 128, 256>}, {transform_indices = @transform_7, window_bounds = array<i64: 1, 1, 256>}, {transform_indices = @transform_8, window_bounds = array<i64: 1, 128, 128>}, {transform_indices = @transform_9, window_bounds = array<i64: 1, 1, 128>}, {transform_indices = @transform_10, window_bounds = array<i64: 1, 1, 128>}, {transform_indices = @transform_11, window_bounds = array<i64: 1, 1, 128>}, {transform_indices = @transform_12, window_bounds = array<i64: 1, 128, 128>}, {transform_indices = @transform_13, window_bounds = array<i64: 1, 1, 128>}, {transform_indices = @transform_14, window_bounds = array<i64: 1, 128, 128>}, {transform_indices = @transform_15, window_bounds = array<i64: 1, 1, 128>}, {transform_indices = @transform_16, window_bounds = array<i64: 2, 8, 128>}]} {
    %c0_i32 = arith.constant 0 : i32
    %0 = arith.cmpi eq, %arg1, %c0_i32 : i32
    %1 = arith.extui %0 : i1 to i32
    %c0_i32_0 = arith.constant 0 : i32
    %2 = arith.cmpi ne, %1, %c0_i32_0 : i32
    scf.if %2 {
      %c0_81 = arith.constant 0 : index
      %c0_82 = arith.constant 0 : index
      %c0_83 = arith.constant 0 : index
      %181 = vector.load %arg2[%c0_81, %c0_82, %c0_83] : memref<2x8x128xf32, #tpu.memory_space<vmem>>, vector<2x8x128xf32>
      %c0_84 = arith.constant 0 : index
      %c0_85 = arith.constant 0 : index
      %c0_86 = arith.constant 0 : index
      %182 = vector.load %arg19[%c0_84, %c0_85, %c0_86] : memref<2x8x128xf32, #tpu.memory_space<vmem>>, vector<2x8x128xf32>
      tpu.vector_store %arg19[%c0_84, %c0_85, %c0_86], %181 {strides = array<i32>} : memref<2x8x128xf32, #tpu.memory_space<vmem>>, vector<2x8x128xf32>,
    } else {
    }
    %3 = tpu.iota {dimensions = array<i32: 1>} : vector<1x128xi32>
    %c32_i32 = arith.constant 32 : i32
    %4 = vector.broadcast %c32_i32 : i32 to vector<1x128xi32>
    %5 = arith.cmpi slt, %3, %4 : vector<1x128xi32>
    %c0 = arith.constant 0 : index
    %c0_1 = arith.constant 0 : index
    %c0_2 = arith.constant 0 : index
    %6 = vector.load %arg4[%c0, %c0_1, %c0_2] : memref<1x1x128xf32, #tpu.memory_space<vmem>>, vector<1x1x128xf32>
    %7 = vector.shape_cast %6 : vector<1x1x128xf32> to vector<1x128xf32>
    %c0_3 = arith.constant 0 : index
    %c0_4 = arith.constant 0 : index
    %c0_5 = arith.constant 0 : index
    %8 = vector.load %arg5[%c0_3, %c0_4, %c0_5] : memref<1x1x128xf32, #tpu.memory_space<vmem>>, vector<1x1x128xf32>
    %9 = vector.shape_cast %8 : vector<1x1x128xf32> to vector<1x128xf32>
    %c0_6 = arith.constant 0 : index
    %c0_7 = arith.constant 0 : index
    %c0_8 = arith.constant 0 : index
    %10 = vector.load %arg19[%c0_6, %c0_7, %c0_8] : memref<2x8x128xf32, #tpu.memory_space<vmem>>, vector<2x8x128xf32>
    %11 = vector.shape_cast %10 : vector<2x8x128xf32> to vector<16x128xf32>
    %cst = arith.constant dense<0.000000e+00> : vector<16xf32>
    %12 = vector.multi_reduction <add>, %11, %cst [1] : vector<16x128xf32> to vector<16xf32>
    %13 = vector.shape_cast %12 : vector<16xf32> to vector<16x1xf32>
    %cst_9 = arith.constant 3.125000e-02 : f32
    %14 = vector.broadcast %cst_9 : f32 to vector<16x1xf32>
    %15 = arith.mulf %13, %14 : vector<16x1xf32>
    %16 = vector.broadcast %15 : vector<16x1xf32> to vector<16x128xf32>
    %17 = arith.subf %11, %16 : vector<16x128xf32>
    %cst_10 = arith.constant 0.000000e+00 : f32
    %18 = vector.shape_cast %5 : vector<1x128xi1> to vector<1x128xi1>
    %19 = vector.broadcast %18 : vector<1x128xi1> to vector<16x128xi1>
    %20 = vector.broadcast %cst_10 : f32 to vector<16x128xf32>
    %21 = arith.select %19, %17, %20 : vector<16x128xi1>, vector<16x128xf32>
    %22 = arith.mulf %21, %21 : vector<16x128xf32>
    %cst_11 = arith.constant dense<0.000000e+00> : vector<16xf32>
    %23 = vector.multi_reduction <add>, %22, %cst_11 [1] : vector<16x128xf32> to vector<16xf32>
    %24 = vector.shape_cast %23 : vector<16xf32> to vector<16x1xf32>
    %cst_12 = arith.constant 3.125000e-02 : f32
    %25 = vector.broadcast %cst_12 : f32 to vector<16x1xf32>
    %26 = arith.mulf %24, %25 : vector<16x1xf32>
    %cst_13 = arith.constant 9.99999974E-6 : f32
    %27 = vector.broadcast %cst_13 : f32 to vector<16x1xf32>
    %28 = arith.addf %26, %27 : vector<16x1xf32>
    %29 = math.rsqrt %28 : vector<16x1xf32>
    %30 = vector.broadcast %29 : vector<16x1xf32> to vector<16x128xf32>
    %31 = arith.mulf %21, %30 : vector<16x128xf32>
    %32 = vector.broadcast %7 : vector<1x128xf32> to vector<16x128xf32>
    %33 = arith.mulf %31, %32 : vector<16x128xf32>
    %34 = vector.broadcast %9 : vector<1x128xf32> to vector<16x128xf32>
    %35 = arith.addf %33, %34 : vector<16x128xf32>
    %36 = arith.truncf %35 : vector<16x128xf32> to vector<16x128xbf16>
    %c0_14 = arith.constant 0 : index
    %c0_15 = arith.constant 0 : index
    %c0_16 = arith.constant 0 : index
    %37 = vector.load %arg3[%c0_14, %c0_15, %c0_16] : memref<2x8x128xf32, #tpu.memory_space<vmem>>, vector<2x8x128xf32>
    %38 = vector.shape_cast %37 : vector<2x8x128xf32> to vector<16x128xf32>
    %cst_17 = arith.constant dense<0.000000e+00> : vector<16xf32>
    %39 = vector.multi_reduction <add>, %38, %cst_17 [1] : vector<16x128xf32> to vector<16xf32>
    %40 = vector.shape_cast %39 : vector<16xf32> to vector<16x1xf32>
    %cst_18 = arith.constant 3.125000e-02 : f32
    %41 = vector.broadcast %cst_18 : f32 to vector<16x1xf32>
    %42 = arith.mulf %40, %41 : vector<16x1xf32>
    %43 = vector.broadcast %42 : vector<16x1xf32> to vector<16x128xf32>
    %44 = arith.subf %38, %43 : vector<16x128xf32>
    %cst_19 = arith.constant 0.000000e+00 : f32
    %45 = vector.shape_cast %5 : vector<1x128xi1> to vector<1x128xi1>
    %46 = vector.broadcast %45 : vector<1x128xi1> to vector<16x128xi1>
    %47 = vector.broadcast %cst_19 : f32 to vector<16x128xf32>
    %48 = arith.select %46, %44, %47 : vector<16x128xi1>, vector<16x128xf32>
    %49 = arith.mulf %48, %48 : vector<16x128xf32>
    %cst_20 = arith.constant dense<0.000000e+00> : vector<16xf32>
    %50 = vector.multi_reduction <add>, %49, %cst_20 [1] : vector<16x128xf32> to vector<16xf32>
    %51 = vector.shape_cast %50 : vector<16xf32> to vector<16x1xf32>
    %cst_21 = arith.constant 3.125000e-02 : f32
    %52 = vector.broadcast %cst_21 : f32 to vector<16x1xf32>
    %53 = arith.mulf %51, %52 : vector<16x1xf32>
    %cst_22 = arith.constant 9.99999974E-6 : f32
    %54 = vector.broadcast %cst_22 : f32 to vector<16x1xf32>
    %55 = arith.addf %53, %54 : vector<16x1xf32>
    %56 = math.rsqrt %55 : vector<16x1xf32>
    %57 = vector.broadcast %56 : vector<16x1xf32> to vector<16x128xf32>
    %58 = arith.mulf %48, %57 : vector<16x128xf32>
    %59 = vector.broadcast %7 : vector<1x128xf32> to vector<16x128xf32>
    %60 = arith.mulf %58, %59 : vector<16x128xf32>
    %61 = vector.broadcast %9 : vector<1x128xf32> to vector<16x128xf32>
    %62 = arith.addf %60, %61 : vector<16x128xf32>
    %63 = arith.truncf %62 : vector<16x128xf32> to vector<16x128xbf16>
    %c0_23 = arith.constant 0 : index
    %c0_24 = arith.constant 0 : index
    %c0_25 = arith.constant 0 : index
    %64 = vector.load %arg6[%c0_23, %c0_24, %c0_25] : memref<1x128x128xbf16, #tpu.memory_space<vmem>>, vector<1x128x128xbf16>
    %65 = vector.shape_cast %64 : vector<1x128x128xbf16> to vector<128x128xbf16>
    %cst_26 = arith.constant dense<0.000000e+00> : vector<16x128xf32>
    %66 = tpu.matmul %36, %65, %cst_26 {dimension_numbers = #tpu.dot_dimension_numbers<[1], [0], [0], [1], [0, 0, 1, 1], [], []>} : vector<16x128xbf16>, vector<128x128xbf16>, vector<16x128xf32> -> vector<16x128xf32>
    %c0_27 = arith.constant 0 : index
    %c0_28 = arith.constant 0 : index
    %c0_29 = arith.constant 0 : index
    %67 = vector.load %arg7[%c0_27, %c0_28, %c0_29] : memref<1x1x128xf32, #tpu.memory_space<vmem>>, vector<1x1x128xf32>
    %68 = vector.shape_cast %67 : vector<1x1x128xf32> to vector<1x128xf32>
    %69 = vector.broadcast %68 : vector<1x128xf32> to vector<16x128xf32>
    %70 = arith.addf %66, %69 : vector<16x128xf32>
    %c0_30 = arith.constant 0 : index
    %c0_31 = arith.constant 0 : index
    %c0_32 = arith.constant 0 : index
    %71 = vector.load %arg8[%c0_30, %c0_31, %c0_32] : memref<1x128x256xbf16, #tpu.memory_space<vmem>>, vector<1x128x256xbf16>
    %72 = vector.shape_cast %71 : vector<1x128x256xbf16> to vector<128x256xbf16>
    %cst_33 = arith.constant dense<0.000000e+00> : vector<16x256xf32>
    %73 = tpu.matmul %63, %72, %cst_33 {dimension_numbers = #tpu.dot_dimension_numbers<[1], [0], [0], [1], [0, 0, 1, 1], [], []>} : vector<16x128xbf16>, vector<128x256xbf16>, vector<16x256xf32> -> vector<16x256xf32>
    %c0_34 = arith.constant 0 : index
    %c0_35 = arith.constant 0 : index
    %c0_36 = arith.constant 0 : index
    %74 = vector.load %arg9[%c0_34, %c0_35, %c0_36] : memref<1x1x256xf32, #tpu.memory_space<vmem>>, vector<1x1x256xf32>
    %75 = vector.shape_cast %74 : vector<1x1x256xf32> to vector<1x256xf32>
    %76 = vector.broadcast %75 : vector<1x256xf32> to vector<16x256xf32>
    %77 = arith.addf %73, %76 : vector<16x256xf32>
    %78 = arith.truncf %70 : vector<16x128xf32> to vector<16x128xbf16>
    %79 = vector.shape_cast %78 : vector<16x128xbf16> to vector<2x8x4x32xbf16>
    %80 = tpu.transpose %79, [0, 2, 1, 3] : vector<2x8x4x32xbf16> -> vector<2x4x8x32xbf16>
    %81 = vector.shape_cast %80 : vector<2x4x8x32xbf16> to vector<8x8x32xbf16>
    %82 = vector.extract_strided_slice %77 {offsets = [0, 0], sizes = [16, 128], strides = [1, 1]} : vector<16x256xf32> to vector<16x128xf32>
    %83 = arith.truncf %82 : vector<16x128xf32> to vector<16x128xbf16>
    %84 = vector.shape_cast %83 : vector<16x128xbf16> to vector<2x8x4x32xbf16>
    %85 = tpu.transpose %84, [0, 2, 1, 3] : vector<2x8x4x32xbf16> -> vector<2x4x8x32xbf16>
    %86 = vector.shape_cast %85 : vector<2x4x8x32xbf16> to vector<8x8x32xbf16>
    %87 = vector.extract_strided_slice %77 {offsets = [0, 128], sizes = [16, 128], strides = [1, 1]} : vector<16x256xf32> to vector<16x128xf32>
    %88 = arith.truncf %87 : vector<16x128xf32> to vector<16x128xbf16>
    %89 = vector.shape_cast %88 : vector<16x128xbf16> to vector<2x8x4x32xbf16>
    %90 = tpu.transpose %89, [0, 2, 1, 3] : vector<2x8x4x32xbf16> -> vector<2x4x8x32xbf16>
    %91 = vector.shape_cast %90 : vector<2x4x8x32xbf16> to vector<8x8x32xbf16>
    "tpu.trace_start"() <{level = 10 : i32, message = "bqd,bkd->bqk"}> : () -> ()
    %cst_37 = arith.constant dense<0.000000e+00> : vector<8x8x8xf32>
    %92 = tpu.matmul %81, %86, %cst_37 {dimension_numbers = #tpu.dot_dimension_numbers<[2], [2], [1], [1], [0, 0, 0, 1, 1, 1], [0], [0]>} : vector<8x8x32xbf16>, vector<8x8x32xbf16>, vector<8x8x8xf32> -> vector<8x8x8xf32>
    "tpu.trace_stop"() : () -> ()
    %93 = tpu.iota {dimensions = array<i32: 0>} : vector<8x8xi32>
    %94 = tpu.iota {dimensions = array<i32: 1>} : vector<8x8xi32>
    %95 = arith.cmpi sgt, %94, %93 : vector<8x8xi32>
    %c7_i32 = arith.constant 7 : i32
    %96 = vector.broadcast %c7_i32 : i32 to vector<8x8xi32>
    %97 = arith.cmpi sge, %94, %96 : vector<8x8xi32>
    %98 = arith.ori %95, %97 : vector<8x8xi1>
    %cst_38 = arith.constant 0xFF800000 : f32
    %cst_39 = arith.constant 1.000000e+00 : f32
    %99 = vector.broadcast %cst_38 : f32 to vector<8x8xf32>
    %100 = vector.broadcast %cst_39 : f32 to vector<8x8xf32>
    %101 = arith.select %98, %99, %100 : vector<8x8xi1>, vector<8x8xf32>
    %102 = vector.shape_cast %101 : vector<8x8xf32> to vector<1x8x8xf32>
    %103 = vector.broadcast %102 : vector<1x8x8xf32> to vector<8x8x8xf32>
    %104 = arith.addf %92, %103 : vector<8x8x8xf32>
    %cst_40 = arith.constant dense<0xFF800000> : vector<8x8xf32>
    %105 = vector.multi_reduction <maximumf>, %104, %cst_40 [2] : vector<8x8x8xf32> to vector<8x8xf32>
    %106 = vector.shape_cast %105 : vector<8x8xf32> to vector<8x8x1xf32>
    %107 = vector.broadcast %106 : vector<8x8x1xf32> to vector<8x8x8xf32>
    %108 = arith.subf %104, %107 : vector<8x8x8xf32>
    %109 = math.exp %108 : vector<8x8x8xf32>
    %cst_41 = arith.constant dense<0.000000e+00> : vector<8x8xf32>
    %110 = vector.multi_reduction <add>, %109, %cst_41 [2] : vector<8x8x8xf32> to vector<8x8xf32>
    %111 = vector.shape_cast %110 : vector<8x8xf32> to vector<8x8x1xf32>
    %112 = tpu.reciprocal %111 {approx = true} : vector<8x8x1xf32> -> vector<8x8x1xf32>
    %113 = vector.broadcast %112 : vector<8x8x1xf32> to vector<8x8x8xf32>
    %114 = arith.mulf %109, %113 : vector<8x8x8xf32>
    %115 = arith.truncf %114 : vector<8x8x8xf32> to vector<8x8x8xbf16>
    "tpu.trace_start"() <{level = 10 : i32, message = "bqk,bkd->bqd"}> : () -> ()
    %cst_42 = arith.constant dense<0.000000e+00> : vector<8x8x32xf32>
    %116 = tpu.matmul %115, %91, %cst_42 {dimension_numbers = #tpu.dot_dimension_numbers<[2], [1], [1], [2], [0, 0, 0, 1, 1, 2], [0], [0]>} : vector<8x8x8xbf16>, vector<8x8x32xbf16>, vector<8x8x32xf32> -> vector<8x8x32xf32>
    "tpu.trace_stop"() : () -> ()
    %117 = arith.truncf %116 : vector<8x8x32xf32> to vector<8x8x32xbf16>
    %118 = vector.shape_cast %117 : vector<8x8x32xbf16> to vector<2x4x8x32xbf16>
    %119 = tpu.transpose %118, [0, 2, 1, 3] : vector<2x4x8x32xbf16> -> vector<2x8x4x32xbf16>
    %120 = vector.shape_cast %119 : vector<2x8x4x32xbf16> to vector<16x128xbf16>
    %c0_43 = arith.constant 0 : index
    %c0_44 = arith.constant 0 : index
    %c0_45 = arith.constant 0 : index
    %121 = vector.load %arg10[%c0_43, %c0_44, %c0_45] : memref<1x128x128xbf16, #tpu.memory_space<vmem>>, vector<1x128x128xbf16>
    %122 = vector.shape_cast %121 : vector<1x128x128xbf16> to vector<128x128xbf16>
    %cst_46 = arith.constant dense<0.000000e+00> : vector<16x128xf32>
    %123 = tpu.matmul %120, %122, %cst_46 {dimension_numbers = #tpu.dot_dimension_numbers<[1], [0], [0], [1], [0, 0, 1, 1], [], []>} : vector<16x128xbf16>, vector<128x128xbf16>, vector<16x128xf32> -> vector<16x128xf32>
    %c0_47 = arith.constant 0 : index
    %c0_48 = arith.constant 0 : index
    %c0_49 = arith.constant 0 : index
    %124 = vector.load %arg11[%c0_47, %c0_48, %c0_49] : memref<1x1x128xf32, #tpu.memory_space<vmem>>, vector<1x1x128xf32>
    %125 = vector.shape_cast %124 : vector<1x1x128xf32> to vector<1x128xf32>
    %126 = vector.broadcast %125 : vector<1x128xf32> to vector<16x128xf32>
    %127 = arith.addf %123, %126 : vector<16x128xf32>
    %128 = arith.addf %35, %127 : vector<16x128xf32>
    %c0_50 = arith.constant 0 : index
    %c0_51 = arith.constant 0 : index
    %c0_52 = arith.constant 0 : index
    %129 = vector.load %arg12[%c0_50, %c0_51, %c0_52] : memref<1x1x128xf32, #tpu.memory_space<vmem>>, vector<1x1x128xf32>
    %130 = vector.shape_cast %129 : vector<1x1x128xf32> to vector<1x128xf32>
    %c0_53 = arith.constant 0 : index
    %c0_54 = arith.constant 0 : index
    %c0_55 = arith.constant 0 : index
    %131 = vector.load %arg13[%c0_53, %c0_54, %c0_55] : memref<1x1x128xf32, #tpu.memory_space<vmem>>, vector<1x1x128xf32>
    %132 = vector.shape_cast %131 : vector<1x1x128xf32> to vector<1x128xf32>
    %cst_56 = arith.constant dense<0.000000e+00> : vector<16xf32>
    %133 = vector.multi_reduction <add>, %128, %cst_56 [1] : vector<16x128xf32> to vector<16xf32>
    %134 = vector.shape_cast %133 : vector<16xf32> to vector<16x1xf32>
    %cst_57 = arith.constant 3.125000e-02 : f32
    %135 = vector.broadcast %cst_57 : f32 to vector<16x1xf32>
    %136 = arith.mulf %134, %135 : vector<16x1xf32>
    %137 = vector.broadcast %136 : vector<16x1xf32> to vector<16x128xf32>
    %138 = arith.subf %128, %137 : vector<16x128xf32>
    %cst_58 = arith.constant 0.000000e+00 : f32
    %139 = vector.shape_cast %5 : vector<1x128xi1> to vector<1x128xi1>
    %140 = vector.broadcast %139 : vector<1x128xi1> to vector<16x128xi1>
    %141 = vector.broadcast %cst_58 : f32 to vector<16x128xf32>
    %142 = arith.select %140, %138, %141 : vector<16x128xi1>, vector<16x128xf32>
    %143 = arith.mulf %142, %142 : vector<16x128xf32>
    %cst_59 = arith.constant dense<0.000000e+00> : vector<16xf32>
    %144 = vector.multi_reduction <add>, %143, %cst_59 [1] : vector<16x128xf32> to vector<16xf32>
    %145 = vector.shape_cast %144 : vector<16xf32> to vector<16x1xf32>
    %cst_60 = arith.constant 3.125000e-02 : f32
    %146 = vector.broadcast %cst_60 : f32 to vector<16x1xf32>
    %147 = arith.mulf %145, %146 : vector<16x1xf32>
    %cst_61 = arith.constant 9.99999974E-6 : f32
    %148 = vector.broadcast %cst_61 : f32 to vector<16x1xf32>
    %149 = arith.addf %147, %148 : vector<16x1xf32>
    %150 = math.rsqrt %149 : vector<16x1xf32>
    %151 = vector.broadcast %150 : vector<16x1xf32> to vector<16x128xf32>
    %152 = arith.mulf %142, %151 : vector<16x128xf32>
    %153 = vector.broadcast %130 : vector<1x128xf32> to vector<16x128xf32>
    %154 = arith.mulf %152, %153 : vector<16x128xf32>
    %155 = vector.broadcast %132 : vector<1x128xf32> to vector<16x128xf32>
    %156 = arith.addf %154, %155 : vector<16x128xf32>
    %157 = arith.truncf %156 : vector<16x128xf32> to vector<16x128xbf16>
    %c0_62 = arith.constant 0 : index
    %c0_63 = arith.constant 0 : index
    %c0_64 = arith.constant 0 : index
    %158 = vector.load %arg14[%c0_62, %c0_63, %c0_64] : memref<1x128x128xbf16, #tpu.memory_space<vmem>>, vector<1x128x128xbf16>
    %159 = vector.shape_cast %158 : vector<1x128x128xbf16> to vector<128x128xbf16>
    %cst_65 = arith.constant dense<0.000000e+00> : vector<16x128xf32>
    %160 = tpu.matmul %157, %159, %cst_65 {dimension_numbers = #tpu.dot_dimension_numbers<[1], [0], [0], [1], [0, 0, 1, 1], [], []>} : vector<16x128xbf16>, vector<128x128xbf16>, vector<16x128xf32> -> vector<16x128xf32>
    %c0_66 = arith.constant 0 : index
    %c0_67 = arith.constant 0 : index
    %c0_68 = arith.constant 0 : index
    %161 = vector.load %arg15[%c0_66, %c0_67, %c0_68] : memref<1x1x128xf32, #tpu.memory_space<vmem>>, vector<1x1x128xf32>
    %162 = vector.shape_cast %161 : vector<1x1x128xf32> to vector<1x128xf32>
    %163 = vector.broadcast %162 : vector<1x128xf32> to vector<16x128xf32>
    %164 = arith.addf %160, %163 : vector<16x128xf32>
    %cst_69 = arith.constant 0.000000e+00 : f32
    %165 = vector.broadcast %cst_69 : f32 to vector<16x128xf32>
    %166 = arith.maximumf %164, %165 : vector<16x128xf32>
    %167 = arith.truncf %166 : vector<16x128xf32> to vector<16x128xbf16>
    %c0_70 = arith.constant 0 : index
    %c0_71 = arith.constant 0 : index
    %c0_72 = arith.constant 0 : index
    %168 = vector.load %arg16[%c0_70, %c0_71, %c0_72] : memref<1x128x128xbf16, #tpu.memory_space<vmem>>, vector<1x128x128xbf16>
    %169 = vector.shape_cast %168 : vector<1x128x128xbf16> to vector<128x128xbf16>
    %cst_73 = arith.constant dense<0.000000e+00> : vector<16x128xf32>
    %170 = tpu.matmul %167, %169, %cst_73 {dimension_numbers = #tpu.dot_dimension_numbers<[1], [0], [0], [1], [0, 0, 1, 1], [], []>} : vector<16x128xbf16>, vector<128x128xbf16>, vector<16x128xf32> -> vector<16x128xf32>
    %c0_74 = arith.constant 0 : index
    %c0_75 = arith.constant 0 : index
    %c0_76 = arith.constant 0 : index
    %171 = vector.load %arg17[%c0_74, %c0_75, %c0_76] : memref<1x1x128xf32, #tpu.memory_space<vmem>>, vector<1x1x128xf32>
    %172 = vector.shape_cast %171 : vector<1x1x128xf32> to vector<1x128xf32>
    %173 = vector.broadcast %172 : vector<1x128xf32> to vector<16x128xf32>
    %174 = arith.addf %170, %173 : vector<16x128xf32>
    %175 = arith.addf %156, %174 : vector<16x128xf32>
    %176 = vector.shape_cast %175 : vector<16x128xf32> to vector<2x8x128xf32>
    %c0_77 = arith.constant 0 : index
    %c0_78 = arith.constant 0 : index
    %c0_79 = arith.constant 0 : index
    %177 = vector.load %arg19[%c0_77, %c0_78, %c0_79] : memref<2x8x128xf32, #tpu.memory_space<vmem>>, vector<2x8x128xf32>
    tpu.vector_store %arg19[%c0_77, %c0_78, %c0_79], %176 {strides = array<i32>} : memref<2x8x128xf32, #tpu.memory_space<vmem>>, vector<2x8x128xf32>,
    %c1_i32 = arith.constant 1 : i32
    %178 = arith.cmpi eq, %arg1, %c1_i32 : i32
    %179 = arith.extui %178 : i1 to i32
    %c0_i32_80 = arith.constant 0 : i32
    %180 = arith.cmpi ne, %179, %c0_i32_80 : i32
    scf.if %180 {
      %c0_81 = arith.constant 0 : index
      %c0_82 = arith.constant 0 : index
      %c0_83 = arith.constant 0 : index
      %181 = vector.load %arg18[%c0_81, %c0_82, %c0_83] : memref<2x8x128xf32, #tpu.memory_space<vmem>>, vector<2x8x128xf32>
      tpu.vector_store %arg18[%c0_81, %c0_82, %c0_83], %176 {strides = array<i32>} : memref<2x8x128xf32, #tpu.memory_space<vmem>>, vector<2x8x128xf32>,
    } else {
    }
    return
  }
  func.func @transform_0(%arg0: i32, %arg1: i32) -> (i32, i32, i32) {
    %c0_i32 = arith.constant 0 : i32
    %c0_i32_0 = arith.constant 0 : i32
    %c0_i32_1 = arith.constant 0 : i32
    return %arg0, %c0_i32, %c0_i32_0 : i32, i32, i32
  }
  func.func @transform_1(%arg0: i32, %arg1: i32) -> (i32, i32, i32) {
    %c0_i32 = arith.constant 0 : i32
    %c0_i32_0 = arith.constant 0 : i32
    %c0_i32_1 = arith.constant 0 : i32
    return %arg0, %c0_i32, %c0_i32_0 : i32, i32, i32
  }
  func.func @transform_2(%arg0: i32, %arg1: i32) -> (i32, i32, i32) {
    %c0_i32 = arith.constant 0 : i32
    %c0_i32_0 = arith.constant 0 : i32
    %c0_i32_1 = arith.constant 0 : i32
    return %arg1, %c0_i32, %c0_i32_0 : i32, i32, i32
  }
  func.func @transform_3(%arg0: i32, %arg1: i32) -> (i32, i32, i32) {
    %c0_i32 = arith.constant 0 : i32
    %c0_i32_0 = arith.constant 0 : i32
    %c0_i32_1 = arith.constant 0 : i32
    return %arg1, %c0_i32, %c0_i32_0 : i32, i32, i32
  }
  func.func @transform_4(%arg0: i32, %arg1: i32) -> (i32, i32, i32) {
    %c0_i32 = arith.constant 0 : i32
    %c0_i32_0 = arith.constant 0 : i32
    %c0_i32_1 = arith.constant 0 : i32
    return %arg1, %c0_i32, %c0_i32_0 : i32, i32, i32
  }
  func.func @transform_5(%arg0: i32, %arg1: i32) -> (i32, i32, i32) {
    %c0_i32 = arith.constant 0 : i32
    %c0_i32_0 = arith.constant 0 : i32
    %c0_i32_1 = arith.constant 0 : i32
    return %arg1, %c0_i32, %c0_i32_0 : i32, i32, i32
  }
  func.func @transform_6(%arg0: i32, %arg1: i32) -> (i32, i32, i32) {
    %c0_i32 = arith.constant 0 : i32
    %c0_i32_0 = arith.constant 0 : i32
    %c0_i32_1 = arith.constant 0 : i32
    return %arg1, %c0_i32, %c0_i32_0 : i32, i32, i32
  }
  func.func @transform_7(%arg0: i32, %arg1: i32) -> (i32, i32, i32) {
    %c0_i32 = arith.constant 0 : i32
    %c0_i32_0 = arith.constant 0 : i32
    %c0_i32_1 = arith.constant 0 : i32
    return %arg1, %c0_i32, %c0_i32_0 : i32, i32, i32
  }
  func.func @transform_8(%arg0: i32, %arg1: i32) -> (i32, i32, i32) {
    %c0_i32 = arith.constant 0 : i32
    %c0_i32_0 = arith.constant 0 : i32
    %c0_i32_1 = arith.constant 0 : i32
    return %arg1, %c0_i32, %c0_i32_0 : i32, i32, i32
  }
  func.func @transform_9(%arg0: i32, %arg1: i32) -> (i32, i32, i32) {
    %c0_i32 = arith.constant 0 : i32
    %c0_i32_0 = arith.constant 0 : i32
    %c0_i32_1 = arith.constant 0 : i32
    return %arg1, %c0_i32, %c0_i32_0 : i32, i32, i32
  }
  func.func @transform_10(%arg0: i32, %arg1: i32) -> (i32, i32, i32) {
    %c0_i32 = arith.constant 0 : i32
    %c0_i32_0 = arith.constant 0 : i32
    %c0_i32_1 = arith.constant 0 : i32
    return %arg1, %c0_i32, %c0_i32_0 : i32, i32, i32
  }
  func.func @transform_11(%arg0: i32, %arg1: i32) -> (i32, i32, i32) {
    %c0_i32 = arith.constant 0 : i32
    %c0_i32_0 = arith.constant 0 : i32
    %c0_i32_1 = arith.constant 0 : i32
    return %arg1, %c0_i32, %c0_i32_0 : i32, i32, i32
  }
  func.func @transform_12(%arg0: i32, %arg1: i32) -> (i32, i32, i32) {
    %c0_i32 = arith.constant 0 : i32
    %c0_i32_0 = arith.constant 0 : i32
    %c0_i32_1 = arith.constant 0 : i32
    return %arg1, %c0_i32, %c0_i32_0 : i32, i32, i32
  }
  func.func @transform_13(%arg0: i32, %arg1: i32) -> (i32, i32, i32) {
    %c0_i32 = arith.constant 0 : i32
    %c0_i32_0 = arith.constant 0 : i32
    %c0_i32_1 = arith.constant 0 : i32
    return %arg1, %c0_i32, %c0_i32_0 : i32, i32, i32
  }
  func.func @transform_14(%arg0: i32, %arg1: i32) -> (i32, i32, i32) {
    %c0_i32 = arith.constant 0 : i32
    %c0_i32_0 = arith.constant 0 : i32
    %c0_i32_1 = arith.constant 0 : i32
    return %arg1, %c0_i32, %c0_i32_0 : i32, i32, i32
  }
  func.func @transform_15(%arg0: i32, %arg1: i32) -> (i32, i32, i32) {
    %c0_i32 = arith.constant 0 : i32
    %c0_i32_0 = arith.constant 0 : i32
    %c0_i32_1 = arith.constant 0 : i32
    return %arg1, %c0_i32, %c0_i32_0 : i32, i32, i32
  }
  func.func @transform_16(%arg0: i32, %arg1: i32) -> (i32, i32, i32) {
    %c0_i32 = arith.constant 0 : i32
    %c0_i32_0 = arith.constant 0 : i32
    %c0_i32_1 = arith.constant 0 : i32
    return %arg0, %c0_i32, %c0_i32_0 : i32, i32, i32
  }
}

</mosaic_0001>

<llo_original>
// kernel: crossmodal_transformer.1
$region0: #{crossmodal_transformer.1}
  #allocation0 [shape = 'u32[]', space=smem, size = 0x4, offset = 0x4, fixed_abs, tag = 'smem constant byte address 0x4 - core index']
  #allocation1 [shape = 'u32[72,128]{1,0:T(1,128)}', space=vmem, size = 0x9000, scoped, tag = 'internal scratch']
  #allocation2 [shape = 'f32[2,8,128]{2,1,0:T(8,128)}', space=vmem, size = 0x2000, scoped, tag = 'scratch operand']
  %s0 = inlined_call_operand.vmem [shape: f32[2,8,128], index: 0, kind: input, shape index: {}]
  %s1 = inlined_call_operand.vmem [shape: f32[2,8,128], index: 1, kind: input, shape index: {}]
  %s2 = inlined_call_operand.vmem [shape: f32[2,1,128], index: 2, kind: input, shape index: {}]
  %s3 = inlined_call_operand.vmem [shape: f32[2,1,128], index: 3, kind: input, shape index: {}]
  %s4 = inlined_call_operand.vmem [shape: bf16[2,128,128], index: 4, kind: input, shape index: {}]
  %s5 = inlined_call_operand.vmem [shape: f32[2,1,128], index: 5, kind: input, shape index: {}]
  %s6 = inlined_call_operand.vmem [shape: bf16[2,128,256], index: 6, kind: input, shape index: {}]
  %s7 = inlined_call_operand.vmem [shape: f32[2,1,256], index: 7, kind: input, shape index: {}]
  %s8 = inlined_call_operand.vmem [shape: bf16[2,128,128], index: 8, kind: input, shape index: {}]
  %s9 = inlined_call_operand.vmem [shape: f32[2,1,128], index: 9, kind: input, shape index: {}]
  %s10 = inlined_call_operand.vmem [shape: f32[2,1,128], index: 10, kind: input, shape index: {}]
  %s11 = inlined_call_operand.vmem [shape: f32[2,1,128], index: 11, kind: input, shape index: {}]
  %s12 = inlined_call_operand.vmem [shape: bf16[2,128,128], index: 12, kind: input, shape index: {}]
  %s13 = inlined_call_operand.vmem [shape: f32[2,1,128], index: 13, kind: input, shape index: {}]
  %s14 = inlined_call_operand.vmem [shape: bf16[2,128,128], index: 14, kind: input, shape index: {}]
  %s15 = inlined_call_operand.vmem [shape: f32[2,1,128], index: 15, kind: input, shape index: {}]
  %s16 = inlined_call_operand.vmem [shape: f32[2,8,128], index: 16, kind: output, shape index: {}]
  %s17 = sld [smem:[#allocation0]]
  $region105: #{crossmodal_transformer.1} parent=0
    _
  %s19 = ssub.s32 1, %s17
  %s20 = scalar_select 0, %s19, %s17
  loop: start=0, step=1, limit=4
  $region2: #{crossmodal_transformer.1} parent=0 // loop_pre_header
    _
  $region3: #{crossmodal_transformer.1} parent=0 // loop_header
    %s22 = sphi 0, %s26
    %p23 = scmp.ge.s32.totalorder %s22, 4
    %s29 = sphi 0, %s41
    %s30 = sphi 0, %s37
    %s31 = sphi 0, %s29
    %s32 = sphi 0, %s30
    %s33 = sphi 0, %s31
    %s34 = sphi 0, %s32
    %s44 = sphi 0, %s46
    %s47 = sphi 0, %s44
    %s48 = sphi 0, %s47
    %s64 = sphi 0, %s48
    %s70 = sphi 0, %s72
    %s73 = sphi 0, %s70
    %s74 = sphi 0, %s73
    %s90 = sphi 0, %s74
    %s96 = sphi 0, %s98
    %s99 = sphi 0, %s96
    %s100 = sphi 0, %s99
    %s116 = sphi 0, %s100
    %s122 = sphi 0, %s124
    %s125 = sphi 0, %s122
    %s126 = sphi 0, %s125
    %s142 = sphi 0, %s126
    %s148 = sphi 0, %s150
    %s151 = sphi 0, %s148
    %s152 = sphi 0, %s151
    %s168 = sphi 0, %s152
    %s174 = sphi 0, %s176
    %s177 = sphi 0, %s174
    %s178 = sphi 0, %s177
    %s194 = sphi 0, %s178
    %s200 = sphi 0, %s202
    %s203 = sphi 0, %s200
    %s204 = sphi 0, %s203
    %s220 = sphi 0, %s204
    %s226 = sphi 0, %s228
    %s229 = sphi 0, %s226
    %s230 = sphi 0, %s229
    %s246 = sphi 0, %s230
    %s252 = sphi 0, %s254
    %s255 = sphi 0, %s252
    %s256 = sphi 0, %s255
    %s272 = sphi 0, %s256
    %s278 = sphi 0, %s280
    %s281 = sphi 0, %s278
    %s282 = sphi 0, %s281
    %s298 = sphi 0, %s282
    %s304 = sphi 0, %s306
    %s307 = sphi 0, %s304
    %s308 = sphi 0, %s307
    %s324 = sphi 0, %s308
    %s330 = sphi 0, %s332
    %s333 = sphi 0, %s330
    %s334 = sphi 0, %s333
    %s350 = sphi 0, %s334
    %s356 = sphi 0, %s358
    %s359 = sphi 0, %s356
    %s360 = sphi 0, %s359
    %s376 = sphi 0, %s360
    %s382 = sphi 0, %s384
    %s385 = sphi 0, %s382
    %s386 = sphi 0, %s385
    %s402 = sphi 0, %s386
    %s408 = sphi 0, %s410
    %s411 = sphi 0, %s408
    %s412 = sphi 0, %s411
    %s428 = sphi 0, %s412
    %s434 = sphi 0, %s436
    %s437 = sphi 0, %s434
    %s438 = sphi 0, %s437
    %s454 = sphi 0, %s438
    %s460 = sphi 0, %s462
    %s463 = sphi 0, %s460
    %s464 = sphi 0, %s463
    %s480 = sphi 0, %s464
  $region4: #{crossmodal_transformer.1} parent=0 // loop_header_branch
    %25 = sbr.rel (%p23) target = $region8
  $region5: #{crossmodal_transformer.1} parent=0 // loop_body
    %s27 = ssub.s32 %s22, 1
    %s28 = ssub.s32 %s22, 2
    %s35 = sadd.s32 1, %s30
    %p36 = scmp.ge.s32.totalorder %s35, 2
    %s37 = scalar_select %p36, 0, %s35
    %s38 = sadd.s32 1, %s29
    %s39 = scalar_select %p36, %s38, %s29
    %p40 = scmp.ge.s32.totalorder %s39, 1
    %s41 = scalar_select %p40, 0, %s39
    %s42 = ssub.s32 %s29, %s41
    %p43 = scmp.eq.s32.totalorder %s42, 0
    %s45 = sadd.s32 %s44, 1
    %s46 = scalar_select %p43, %s44, %s45
    %p49 = pneg %p43
    %p50 = scmp.eq.s32.totalorder %s22, 1
    %p51 = por %p49, %p50
    %p52 = scmp.ne.s32.totalorder %s44, %s47
    %p53 = scmp.eq.s32.totalorder %s22, 0
    %p54 = por %p52, %p53
    %p55 = scmp.ne.s32.totalorder %s44, %s47
    %p56 = scmp.eq.s32.totalorder %s27, 1
    %p57 = por %p55, %p56
    %p58 = scmp.ne.s32.totalorder %s47, %s48
    %p59 = scmp.eq.s32.totalorder %s27, 0
    %p60 = por %p58, %p59
    %p61 = scmp.ne.s32.totalorder %s47, %s48
    %p62 = scmp.eq.s32.totalorder %s28, 1
    %p63 = por %p61, %p62
    %p65 = scmp.ne.s32.totalorder %s48, %s64
    %p66 = scmp.eq.s32.totalorder %s28, 0
    %p67 = por %p65, %p66
    %s68 = ssub.s32 %s29, %s41
    %p69 = scmp.eq.s32.totalorder %s68, 0
    %s71 = sadd.s32 %s70, 1
    %s72 = scalar_select %p69, %s70, %s71
    %p75 = pneg %p69
    %p76 = scmp.eq.s32.totalorder %s22, 1
    %p77 = por %p75, %p76
    %p78 = scmp.ne.s32.totalorder %s70, %s73
    %p79 = scmp.eq.s32.totalorder %s22, 0
    %p80 = por %p78, %p79
    %p81 = scmp.ne.s32.totalorder %s70, %s73
    %p82 = scmp.eq.s32.totalorder %s27, 1
    %p83 = por %p81, %p82
    %p84 = scmp.ne.s32.totalorder %s73, %s74
    %p85 = scmp.eq.s32.totalorder %s27, 0
    %p86 = por %p84, %p85
    %p87 = scmp.ne.s32.totalorder %s73, %s74
    %p88 = scmp.eq.s32.totalorder %s28, 1
    %p89 = por %p87, %p88
    %p91 = scmp.ne.s32.totalorder %s74, %s90
    %p92 = scmp.eq.s32.totalorder %s28, 0
    %p93 = por %p91, %p92
    %s94 = ssub.s32 %s30, %s37
    %p95 = scmp.eq.s32.totalorder %s94, 0
    %s97 = sadd.s32 %s96, 1
    %s98 = scalar_select %p95, %s96, %s97
    %p101 = pneg %p95
    %p102 = scmp.eq.s32.totalorder %s22, 1
    %p103 = por %p101, %p102
    %p104 = scmp.ne.s32.totalorder %s96, %s99
    %p105 = scmp.eq.s32.totalorder %s22, 0
    %p106 = por %p104, %p105
    %p107 = scmp.ne.s32.totalorder %s96, %s99
    %p108 = scmp.eq.s32.totalorder %s27, 1
    %p109 = por %p107, %p108
    %p110 = scmp.ne.s32.totalorder %s99, %s100
    %p111 = scmp.eq.s32.totalorder %s27, 0
    %p112 = por %p110, %p111
    %p113 = scmp.ne.s32.totalorder %s99, %s100
    %p114 = scmp.eq.s32.totalorder %s28, 1
    %p115 = por %p113, %p114
    %p117 = scmp.ne.s32.totalorder %s100, %s116
    %p118 = scmp.eq.s32.totalorder %s28, 0
    %p119 = por %p117, %p118
    %s120 = ssub.s32 %s30, %s37
    %p121 = scmp.eq.s32.totalorder %s120, 0
    %s123 = sadd.s32 %s122, 1
    %s124 = scalar_select %p121, %s122, %s123
    %p127 = pneg %p121
    %p128 = scmp.eq.s32.totalorder %s22, 1
    %p129 = por %p127, %p128
    %p130 = scmp.ne.s32.totalorder %s122, %s125
    %p131 = scmp.eq.s32.totalorder %s22, 0
    %p132 = por %p130, %p131
    %p133 = scmp.ne.s32.totalorder %s122, %s125
    %p134 = scmp.eq.s32.totalorder %s27, 1
    %p135 = por %p133, %p134
    %p136 = scmp.ne.s32.totalorder %s125, %s126
    %p137 = scmp.eq.s32.totalorder %s27, 0
    %p138 = por %p136, %p137
    %p139 = scmp.ne.s32.totalorder %s125, %s126
    %p140 = scmp.eq.s32.totalorder %s28, 1
    %p141 = por %p139, %p140
    %p143 = scmp.ne.s32.totalorder %s126, %s142
    %p144 = scmp.eq.s32.totalorder %s28, 0
    %p145 = por %p143, %p144
    %s146 = ssub.s32 %s30, %s37
    %p147 = scmp.eq.s32.totalorder %s146, 0
    %s149 = sadd.s32 %s148, 1
    %s150 = scalar_select %p147, %s148, %s149
    %p153 = pneg %p147
    %p154 = scmp.eq.s32.totalorder %s22, 1
    %p155 = por %p153, %p154
    %p156 = scmp.ne.s32.totalorder %s148, %s151
    %p157 = scmp.eq.s32.totalorder %s22, 0
    %p158 = por %p156, %p157
    %p159 = scmp.ne.s32.totalorder %s148, %s151
    %p160 = scmp.eq.s32.totalorder %s27, 1
    %p161 = por %p159, %p160
    %p162 = scmp.ne.s32.totalorder %s151, %s152
    %p163 = scmp.eq.s32.totalorder %s27, 0
    %p164 = por %p162, %p163
    %p165 = scmp.ne.s32.totalorder %s151, %s152
    %p166 = scmp.eq.s32.totalorder %s28, 1
    %p167 = por %p165, %p166
    %p169 = scmp.ne.s32.totalorder %s152, %s168
    %p170 = scmp.eq.s32.totalorder %s28, 0
    %p171 = por %p169, %p170
    %s172 = ssub.s32 %s30, %s37
    %p173 = scmp.eq.s32.totalorder %s172, 0
    %s175 = sadd.s32 %s174, 1
    %s176 = scalar_select %p173, %s174, %s175
    %p179 = pneg %p173
    %p180 = scmp.eq.s32.totalorder %s22, 1
    %p181 = por %p179, %p180
    %p182 = scmp.ne.s32.totalorder %s174, %s177
    %p183 = scmp.eq.s32.totalorder %s22, 0
    %p184 = por %p182, %p183
    %p185 = scmp.ne.s32.totalorder %s174, %s177
    %p186 = scmp.eq.s32.totalorder %s27, 1
    %p187 = por %p185, %p186
    %p188 = scmp.ne.s32.totalorder %s177, %s178
    %p189 = scmp.eq.s32.totalorder %s27, 0
    %p190 = por %p188, %p189
    %p191 = scmp.ne.s32.totalorder %s177, %s178
    %p192 = scmp.eq.s32.totalorder %s28, 1
    %p193 = por %p191, %p192
    %p195 = scmp.ne.s32.totalorder %s178, %s194
    %p196 = scmp.eq.s32.totalorder %s28, 0
    %p197 = por %p195, %p196
    %s198 = ssub.s32 %s30, %s37
    %p199 = scmp.eq.s32.totalorder %s198, 0
    %s201 = sadd.s32 %s200, 1
    %s202 = scalar_select %p199, %s200, %s201
    %p205 = pneg %p199
    %p206 = scmp.eq.s32.totalorder %s22, 1
    %p207 = por %p205, %p206
    %p208 = scmp.ne.s32.totalorder %s200, %s203
    %p209 = scmp.eq.s32.totalorder %s22, 0
    %p210 = por %p208, %p209
    %p211 = scmp.ne.s32.totalorder %s200, %s203
    %p212 = scmp.eq.s32.totalorder %s27, 1
    %p213 = por %p211, %p212
    %p214 = scmp.ne.s32.totalorder %s203, %s204
    %p215 = scmp.eq.s32.totalorder %s27, 0
    %p216 = por %p214, %p215
    %p217 = scmp.ne.s32.totalorder %s203, %s204
    %p218 = scmp.eq.s32.totalorder %s28, 1
    %p219 = por %p217, %p218
    %p221 = scmp.ne.s32.totalorder %s204, %s220
    %p222 = scmp.eq.s32.totalorder %s28, 0
    %p223 = por %p221, %p222
    %s224 = ssub.s32 %s30, %s37
    %p225 = scmp.eq.s32.totalorder %s224, 0
    %s227 = sadd.s32 %s226, 1
    %s228 = scalar_select %p225, %s226, %s227
    %p231 = pneg %p225
    %p232 = scmp.eq.s32.totalorder %s22, 1
    %p233 = por %p231, %p232
    %p234 = scmp.ne.s32.totalorder %s226, %s229
    %p235 = scmp.eq.s32.totalorder %s22, 0
    %p236 = por %p234, %p235
    %p237 = scmp.ne.s32.totalorder %s226, %s229
    %p238 = scmp.eq.s32.totalorder %s27, 1
    %p239 = por %p237, %p238
    %p240 = scmp.ne.s32.totalorder %s229, %s230
    %p241 = scmp.eq.s32.totalorder %s27, 0
    %p242 = por %p240, %p241
    %p243 = scmp.ne.s32.totalorder %s229, %s230
    %p244 = scmp.eq.s32.totalorder %s28, 1
    %p245 = por %p243, %p244
    %p247 = scmp.ne.s32.totalorder %s230, %s246
    %p248 = scmp.eq.s32.totalorder %s28, 0
    %p249 = por %p247, %p248
    %s250 = ssub.s32 %s30, %s37
    %p251 = scmp.eq.s32.totalorder %s250, 0
    %s253 = sadd.s32 %s252, 1
    %s254 = scalar_select %p251, %s252, %s253
    %p257 = pneg %p251
    %p258 = scmp.eq.s32.totalorder %s22, 1
    %p259 = por %p257, %p258
    %p260 = scmp.ne.s32.totalorder %s252, %s255
    %p261 = scmp.eq.s32.totalorder %s22, 0
    %p262 = por %p260, %p261
    %p263 = scmp.ne.s32.totalorder %s252, %s255
    %p264 = scmp.eq.s32.totalorder %s27, 1
    %p265 = por %p263, %p264
    %p266 = scmp.ne.s32.totalorder %s255, %s256
    %p267 = scmp.eq.s32.totalorder %s27, 0
    %p268 = por %p266, %p267
    %p269 = scmp.ne.s32.totalorder %s255, %s256
    %p270 = scmp.eq.s32.totalorder %s28, 1
    %p271 = por %p269, %p270
    %p273 = scmp.ne.s32.totalorder %s256, %s272
    %p274 = scmp.eq.s32.totalorder %s28, 0
    %p275 = por %p273, %p274
    %s276 = ssub.s32 %s30, %s37
    %p277 = scmp.eq.s32.totalorder %s276, 0
    %s279 = sadd.s32 %s278, 1
    %s280 = scalar_select %p277, %s278, %s279
    %p283 = pneg %p277
    %p284 = scmp.eq.s32.totalorder %s22, 1
    %p285 = por %p283, %p284
    %p286 = scmp.ne.s32.totalorder %s278, %s281
    %p287 = scmp.eq.s32.totalorder %s22, 0
    %p288 = por %p286, %p287
    %p289 = scmp.ne.s32.totalorder %s278, %s281
    %p290 = scmp.eq.s32.totalorder %s27, 1
    %p291 = por %p289, %p290
    %p292 = scmp.ne.s32.totalorder %s281, %s282
    %p293 = scmp.eq.s32.totalorder %s27, 0
    %p294 = por %p292, %p293
    %p295 = scmp.ne.s32.totalorder %s281, %s282
    %p296 = scmp.eq.s32.totalorder %s28, 1
    %p297 = por %p295, %p296
    %p299 = scmp.ne.s32.totalorder %s282, %s298
    %p300 = scmp.eq.s32.totalorder %s28, 0
    %p301 = por %p299, %p300
    %s302 = ssub.s32 %s30, %s37
    %p303 = scmp.eq.s32.totalorder %s302, 0
    %s305 = sadd.s32 %s304, 1
    %s306 = scalar_select %p303, %s304, %s305
    %p309 = pneg %p303
    %p310 = scmp.eq.s32.totalorder %s22, 1
    %p311 = por %p309, %p310
    %p312 = scmp.ne.s32.totalorder %s304, %s307
    %p313 = scmp.eq.s32.totalorder %s22, 0
    %p314 = por %p312, %p313
    %p315 = scmp.ne.s32.totalorder %s304, %s307
    %p316 = scmp.eq.s32.totalorder %s27, 1
    %p317 = por %p315, %p316
    %p318 = scmp.ne.s32.totalorder %s307, %s308
    %p319 = scmp.eq.s32.totalorder %s27, 0
    %p320 = por %p318, %p319
    %p321 = scmp.ne.s32.totalorder %s307, %s308
    %p322 = scmp.eq.s32.totalorder %s28, 1
    %p323 = por %p321, %p322
    %p325 = scmp.ne.s32.totalorder %s308, %s324
    %p326 = scmp.eq.s32.totalorder %s28, 0
    %p327 = por %p325, %p326
    %s328 = ssub.s32 %s30, %s37
    %p329 = scmp.eq.s32.totalorder %s328, 0
    %s331 = sadd.s32 %s330, 1
    %s332 = scalar_select %p329, %s330, %s331
    %p335 = pneg %p329
    %p336 = scmp.eq.s32.totalorder %s22, 1
    %p337 = por %p335, %p336
    %p338 = scmp.ne.s32.totalorder %s330, %s333
    %p339 = scmp.eq.s32.totalorder %s22, 0
    %p340 = por %p338, %p339
    %p341 = scmp.ne.s32.totalorder %s330, %s333
    %p342 = scmp.eq.s32.totalorder %s27, 1
    %p343 = por %p341, %p342
    %p344 = scmp.ne.s32.totalorder %s333, %s334
    %p345 = scmp.eq.s32.totalorder %s27, 0
    %p346 = por %p344, %p345
    %p347 = scmp.ne.s32.totalorder %s333, %s334
    %p348 = scmp.eq.s32.totalorder %s28, 1
    %p349 = por %p347, %p348
    %p351 = scmp.ne.s32.totalorder %s334, %s350
    %p352 = scmp.eq.s32.totalorder %s28, 0
    %p353 = por %p351, %p352
    %s354 = ssub.s32 %s30, %s37
    %p355 = scmp.eq.s32.totalorder %s354, 0
    %s357 = sadd.s32 %s356, 1
    %s358 = scalar_select %p355, %s356, %s357
    %p361 = pneg %p355
    %p362 = scmp.eq.s32.totalorder %s22, 1
    %p363 = por %p361, %p362
    %p364 = scmp.ne.s32.totalorder %s356, %s359
    %p365 = scmp.eq.s32.totalorder %s22, 0
    %p366 = por %p364, %p365
    %p367 = scmp.ne.s32.totalorder %s356, %s359
    %p368 = scmp.eq.s32.totalorder %s27, 1
    %p369 = por %p367, %p368
    %p370 = scmp.ne.s32.totalorder %s359, %s360
    %p371 = scmp.eq.s32.totalorder %s27, 0
    %p372 = por %p370, %p371
    %p373 = scmp.ne.s32.totalorder %s359, %s360
    %p374 = scmp.eq.s32.totalorder %s28, 1
    %p375 = por %p373, %p374
    %p377 = scmp.ne.s32.totalorder %s360, %s376
    %p378 = scmp.eq.s32.totalorder %s28, 0
    %p379 = por %p377, %p378
    %s380 = ssub.s32 %s30, %s37
    %p381 = scmp.eq.s32.totalorder %s380, 0
    %s383 = sadd.s32 %s382, 1
    %s384 = scalar_select %p381, %s382, %s383
    %p387 = pneg %p381
    %p388 = scmp.eq.s32.totalorder %s22, 1
    %p389 = por %p387, %p388
    %p390 = scmp.ne.s32.totalorder %s382, %s385
    %p391 = scmp.eq.s32.totalorder %s22, 0
    %p392 = por %p390, %p391
    %p393 = scmp.ne.s32.totalorder %s382, %s385
    %p394 = scmp.eq.s32.totalorder %s27, 1
    %p395 = por %p393, %p394
    %p396 = scmp.ne.s32.totalorder %s385, %s386
    %p397 = scmp.eq.s32.totalorder %s27, 0
    %p398 = por %p396, %p397
    %p399 = scmp.ne.s32.totalorder %s385, %s386
    %p400 = scmp.eq.s32.totalorder %s28, 1
    %p401 = por %p399, %p400
    %p403 = scmp.ne.s32.totalorder %s386, %s402
    %p404 = scmp.eq.s32.totalorder %s28, 0
    %p405 = por %p403, %p404
    %s406 = ssub.s32 %s30, %s37
    %p407 = scmp.eq.s32.totalorder %s406, 0
    %s409 = sadd.s32 %s408, 1
    %s410 = scalar_select %p407, %s408, %s409
    %p413 = pneg %p407
    %p414 = scmp.eq.s32.totalorder %s22, 1
    %p415 = por %p413, %p414
    %p416 = scmp.ne.s32.totalorder %s408, %s411
    %p417 = scmp.eq.s32.totalorder %s22, 0
    %p418 = por %p416, %p417
    %p419 = scmp.ne.s32.totalorder %s408, %s411
    %p420 = scmp.eq.s32.totalorder %s27, 1
    %p421 = por %p419, %p420
    %p422 = scmp.ne.s32.totalorder %s411, %s412
    %p423 = scmp.eq.s32.totalorder %s27, 0
    %p424 = por %p422, %p423
    %p425 = scmp.ne.s32.totalorder %s411, %s412
    %p426 = scmp.eq.s32.totalorder %s28, 1
    %p427 = por %p425, %p426
    %p429 = scmp.ne.s32.totalorder %s412, %s428
    %p430 = scmp.eq.s32.totalorder %s28, 0
    %p431 = por %p429, %p430
    %s432 = ssub.s32 %s30, %s37
    %p433 = scmp.eq.s32.totalorder %s432, 0
    %s435 = sadd.s32 %s434, 1
    %s436 = scalar_select %p433, %s434, %s435
    %p439 = pneg %p433
    %p440 = scmp.eq.s32.totalorder %s22, 1
    %p441 = por %p439, %p440
    %p442 = scmp.ne.s32.totalorder %s434, %s437
    %p443 = scmp.eq.s32.totalorder %s22, 0
    %p444 = por %p442, %p443
    %p445 = scmp.ne.s32.totalorder %s434, %s437
    %p446 = scmp.eq.s32.totalorder %s27, 1
    %p447 = por %p445, %p446
    %p448 = scmp.ne.s32.totalorder %s437, %s438
    %p449 = scmp.eq.s32.totalorder %s27, 0
    %p450 = por %p448, %p449
    %p451 = scmp.ne.s32.totalorder %s437, %s438
    %p452 = scmp.eq.s32.totalorder %s28, 1
    %p453 = por %p451, %p452
    %p455 = scmp.ne.s32.totalorder %s438, %s454
    %p456 = scmp.eq.s32.totalorder %s28, 0
    %p457 = por %p455, %p456
    %s458 = ssub.s32 %s29, %s41
    %p459 = scmp.eq.s32.totalorder %s458, 0
    %s461 = sadd.s32 %s460, 1
    %s462 = scalar_select %p459, %s460, %s461
    %p465 = pneg %p459
    %p466 = scmp.eq.s32.totalorder %s22, 1
    %p467 = por %p465, %p466
    %p468 = scmp.ne.s32.totalorder %s460, %s463
    %p469 = scmp.eq.s32.totalorder %s22, 0
    %p470 = por %p468, %p469
    %p471 = scmp.ne.s32.totalorder %s460, %s463
    %p472 = scmp.eq.s32.totalorder %s27, 1
    %p473 = por %p471, %p472
    %p474 = scmp.ne.s32.totalorder %s463, %s464
    %p475 = scmp.eq.s32.totalorder %s27, 0
    %p476 = por %p474, %p475
    %p477 = scmp.ne.s32.totalorder %s463, %s464
    %p478 = scmp.eq.s32.totalorder %s28, 1
    %p479 = por %p477, %p478
    %p481 = scmp.ne.s32.totalorder %s464, %s480
    %p482 = scmp.eq.s32.totalorder %s28, 0
    %p483 = por %p481, %p482
    %p484 = scmp.le.s32.totalorder 1, %s22
    %p485 = scmp.lt.s32.totalorder %s22, 3
    %p486 = pnand %p484, %p485
    %p487 = pneg %p486
    // Predicated region
    $region9: #{crossmodal_transformer.1} parent=5 // pred_check
      _
    $region10: #{crossmodal_transformer.1} parent=5 // pred_check_branch
      %489 = sbr.rel (%p486) target = $region12
    $region11: #{crossmodal_transformer.1} parent=5 // pred_region
      %s490 = ssub.s32 %s22, 1
      // Predicated region
      $region13: #{crossmodal_transformer.1} parent=11 // pred_check
        %p491 = pneg %p60
      $region14: #{crossmodal_transformer.1} parent=11 // pred_check_branch
        %493 = sbr.rel (%p491) target = $region16
      $region15: #{crossmodal_transformer.1} parent=11 // pred_region
        %s494 = smul.u32 2, %s31
        %p495 = scmp.lt.s32.totalorder %s494, 1
        %s496 = scalar_select %p495, %s494, 1
        %s497 = smul.addr %s496, 8
        %s498 = scalar_lea.vmem %s0, %s497
        %s499 = smul.u32 2, %s31
      $region16: #{crossmodal_transformer.1} parent=11 // pred_fallthru
        _
      // Predicated region
      $region17: #{crossmodal_transformer.1} parent=11 // pred_check
        %p500 = pneg %p86
      $region18: #{crossmodal_transformer.1} parent=11 // pred_check_branch
        %502 = sbr.rel (%p500) target = $region20
      $region19: #{crossmodal_transformer.1} parent=11 // pred_region
        %s503 = smul.u32 2, %s31
        %p504 = scmp.lt.s32.totalorder %s503, 1
        %s505 = scalar_select %p504, %s503, 1
        %s506 = smul.addr %s505, 8
        %s507 = scalar_lea.vmem %s1, %s506
        %s508 = smul.u32 2, %s31
      $region20: #{crossmodal_transformer.1} parent=11 // pred_fallthru
        _
    $region12: #{crossmodal_transformer.1} parent=5 // pred_fallthru
      _
    %p509 = scmp.lt.s32.totalorder %s22, 2
    // Predicated region
    $region21: #{crossmodal_transformer.1} parent=5 // pred_check
      %p510 = pneg %p509
    $region22: #{crossmodal_transformer.1} parent=5 // pred_check_branch
      %512 = sbr.rel (%p510) target = $region24
    $region23: #{crossmodal_transformer.1} parent=5 // pred_region
      // Predicated region
      $region25: #{crossmodal_transformer.1} parent=23 // pred_check
        %p513 = pneg %p106
      $region26: #{crossmodal_transformer.1} parent=23 // pred_check_branch
        %515 = sbr.rel (%p513) target = $region28
      $region27: #{crossmodal_transformer.1} parent=23 // pred_region
        %p516 = scmp.lt.s32.totalorder %s30, 1
        %s517 = scalar_select %p516, %s30, 1
        %s518 = scalar_lea.vmem %s2, %s517
      $region28: #{crossmodal_transformer.1} parent=23 // pred_fallthru
        _
      // Predicated region
      $region29: #{crossmodal_transformer.1} parent=23 // pred_check
        %p519 = pneg %p132
      $region30: #{crossmodal_transformer.1} parent=23 // pred_check_branch
        %521 = sbr.rel (%p519) target = $region32
      $region31: #{crossmodal_transformer.1} parent=23 // pred_region
        %p522 = scmp.lt.s32.totalorder %s30, 1
        %s523 = scalar_select %p522, %s30, 1
        %s524 = scalar_lea.vmem %s3, %s523
      $region32: #{crossmodal_transformer.1} parent=23 // pred_fallthru
        _
      // Predicated region
      $region33: #{crossmodal_transformer.1} parent=23 // pred_check
        %p525 = pneg %p158
      $region34: #{crossmodal_transformer.1} parent=23 // pred_check_branch
        %527 = sbr.rel (%p525) target = $region36
      $region35: #{crossmodal_transformer.1} parent=23 // pred_region
        %p528 = scmp.lt.s32.totalorder %s30, 1
        %s529 = scalar_select %p528, %s30, 1
        %s530 = smul.addr %s529, 16
        %s531 = smul.addr %s530, 4
        %s532 = scalar_lea.vmem %s4, %s531
      $region36: #{crossmodal_transformer.1} parent=23 // pred_fallthru
        _
      // Predicated region
      $region37: #{crossmodal_transformer.1} parent=23 // pred_check
        %p533 = pneg %p184
      $region38: #{crossmodal_transformer.1} parent=23 // pred_check_branch
        %535 = sbr.rel (%p533) target = $region40
      $region39: #{crossmodal_transformer.1} parent=23 // pred_region
        %p536 = scmp.lt.s32.totalorder %s30, 1
        %s537 = scalar_select %p536, %s30, 1
        %s538 = scalar_lea.vmem %s5, %s537
      $region40: #{crossmodal_transformer.1} parent=23 // pred_fallthru
        _
      // Predicated region
      $region41: #{crossmodal_transformer.1} parent=23 // pred_check
        %p539 = pneg %p210
      $region42: #{crossmodal_transformer.1} parent=23 // pred_check_branch
        %541 = sbr.rel (%p539) target = $region44
      $region43: #{crossmodal_transformer.1} parent=23 // pred_region
        %p542 = scmp.lt.s32.totalorder %s30, 1
        %s543 = scalar_select %p542, %s30, 1
        %s544 = smul.addr %s543, 32
        %s545 = smul.addr %s544, 4
        %s546 = scalar_lea.vmem %s6, %s545
      $region44: #{crossmodal_transformer.1} parent=23 // pred_fallthru
        _
      // Predicated region
      $region45: #{crossmodal_transformer.1} parent=23 // pred_check
        %p547 = pneg %p236
      $region46: #{crossmodal_transformer.1} parent=23 // pred_check_branch
        %549 = sbr.rel (%p547) target = $region48
      $region47: #{crossmodal_transformer.1} parent=23 // pred_region
        %p550 = scmp.lt.s32.totalorder %s30, 1
        %s551 = scalar_select %p550, %s30, 1
        %s552 = smul.addr %s551, 2
        %s553 = scalar_lea.vmem %s7, %s552
      $region48: #{crossmodal_transformer.1} parent=23 // pred_fallthru
        _
      // Predicated region
      $region49: #{crossmodal_transformer.1} parent=23 // pred_check
        %p554 = pneg %p262
      $region50: #{crossmodal_transformer.1} parent=23 // pred_check_branch
        %556 = sbr.rel (%p554) target = $region52
      $region51: #{crossmodal_transformer.1} parent=23 // pred_region
        %p557 = scmp.lt.s32.totalorder %s30, 1
        %s558 = scalar_select %p557, %s30, 1
        %s559 = smul.addr %s558, 16
        %s560 = smul.addr %s559, 4
        %s561 = scalar_lea.vmem %s8, %s560
      $region52: #{crossmodal_transformer.1} parent=23 // pred_fallthru
        _
      // Predicated region
      $region53: #{crossmodal_transformer.1} parent=23 // pred_check
        %p562 = pneg %p288
      $region54: #{crossmodal_transformer.1} parent=23 // pred_check_branch
        %564 = sbr.rel (%p562) target = $region56
      $region55: #{crossmodal_transformer.1} parent=23 // pred_region
        %p565 = scmp.lt.s32.totalorder %s30, 1
        %s566 = scalar_select %p565, %s30, 1
        %s567 = scalar_lea.vmem %s9, %s566
      $region56: #{crossmodal_transformer.1} parent=23 // pred_fallthru
        _
      // Predicated region
      $region57: #{crossmodal_transformer.1} parent=23 // pred_check
        %p568 = pneg %p314
      $region58: #{crossmodal_transformer.1} parent=23 // pred_check_branch
        %570 = sbr.rel (%p568) target = $region60
      $region59: #{crossmodal_transformer.1} parent=23 // pred_region
        %p571 = scmp.lt.s32.totalorder %s30, 1
        %s572 = scalar_select %p571, %s30, 1
        %s573 = scalar_lea.vmem %s10, %s572
      $region60: #{crossmodal_transformer.1} parent=23 // pred_fallthru
        _
      // Predicated region
      $region61: #{crossmodal_transformer.1} parent=23 // pred_check
        %p574 = pneg %p340
      $region62: #{crossmodal_transformer.1} parent=23 // pred_check_branch
        %576 = sbr.rel (%p574) target = $region64
      $region63: #{crossmodal_transformer.1} parent=23 // pred_region
        %p577 = scmp.lt.s32.totalorder %s30, 1
        %s578 = scalar_select %p577, %s30, 1
        %s579 = scalar_lea.vmem %s11, %s578
      $region64: #{crossmodal_transformer.1} parent=23 // pred_fallthru
        _
      // Predicated region
      $region65: #{crossmodal_transformer.1} parent=23 // pred_check
        %p580 = pneg %p366
      $region66: #{crossmodal_transformer.1} parent=23 // pred_check_branch
        %582 = sbr.rel (%p580) target = $region68
      $region67: #{crossmodal_transformer.1} parent=23 // pred_region
        %p583 = scmp.lt.s32.totalorder %s30, 1
        %s584 = scalar_select %p583, %s30, 1
        %s585 = smul.addr %s584, 16
        %s586 = smul.addr %s585, 4
        %s587 = scalar_lea.vmem %s12, %s586
      $region68: #{crossmodal_transformer.1} parent=23 // pred_fallthru
        _
      // Predicated region
      $region69: #{crossmodal_transformer.1} parent=23 // pred_check
        %p588 = pneg %p392
      $region70: #{crossmodal_transformer.1} parent=23 // pred_check_branch
        %590 = sbr.rel (%p588) target = $region72
      $region71: #{crossmodal_transformer.1} parent=23 // pred_region
        %p591 = scmp.lt.s32.totalorder %s30, 1
        %s592 = scalar_select %p591, %s30, 1
        %s593 = scalar_lea.vmem %s13, %s592
      $region72: #{crossmodal_transformer.1} parent=23 // pred_fallthru
        _
      // Predicated region
      $region73: #{crossmodal_transformer.1} parent=23 // pred_check
        %p594 = pneg %p418
      $region74: #{crossmodal_transformer.1} parent=23 // pred_check_branch
        %596 = sbr.rel (%p594) target = $region76
      $region75: #{crossmodal_transformer.1} parent=23 // pred_region
        %p597 = scmp.lt.s32.totalorder %s30, 1
        %s598 = scalar_select %p597, %s30, 1
        %s599 = smul.addr %s598, 16
        %s600 = smul.addr %s599, 4
        %s601 = scalar_lea.vmem %s14, %s600
      $region76: #{crossmodal_transformer.1} parent=23 // pred_fallthru
        _
      // Predicated region
      $region77: #{crossmodal_transformer.1} parent=23 // pred_check
        %p602 = pneg %p444
      $region78: #{crossmodal_transformer.1} parent=23 // pred_check_branch
        %604 = sbr.rel (%p602) target = $region80
      $region79: #{crossmodal_transformer.1} parent=23 // pred_region
        %p605 = scmp.lt.s32.totalorder %s30, 1
        %s606 = scalar_select %p605, %s30, 1
        %s607 = scalar_lea.vmem %s15, %s606
      $region80: #{crossmodal_transformer.1} parent=23 // pred_fallthru
        _
    $region24: #{crossmodal_transformer.1} parent=5 // pred_fallthru
      _
    %p608 = scmp.le.s32.totalorder 1, %s22
    %p609 = scmp.lt.s32.totalorder %s22, 3
    %p610 = pnand %p608, %p609
    %p611 = pneg %p610
    // Predicated region
    $region81: #{crossmodal_transformer.1} parent=5 // pred_check
      _
    $region82: #{crossmodal_transformer.1} parent=5 // pred_check_branch
      %613 = sbr.rel (%p610) target = $region84
    $region83: #{crossmodal_transformer.1} parent=5 // pred_region
      %s614 = ssub.s32 %s22, 1
      %s615 = smul.u32 2, %s31
      %p616 = scmp.lt.s32.totalorder %s615, 1
      %s617 = scalar_select %p616, %s615, 1
      %s618 = smul.addr %s617, 8
      %s619 = scalar_lea.vmem %s0, %s618
      %p620 = pneg %p60
      %p621 = pneg %p57
      %s622 = smul.u32 2, %s31
      %p623 = scmp.lt.s32.totalorder %s622, 1
      %s624 = scalar_select %p623, %s622, 1
      %s625 = smul.addr %s624, 8
      %s626 = scalar_lea.vmem %s1, %s625
      %p627 = pneg %p86
      %p628 = pneg %p83
      %p629 = scmp.lt.s32.totalorder %s32, 1
      %s630 = scalar_select %p629, %s32, 1
      %s631 = scalar_lea.vmem %s2, %s630
      %p632 = pneg %p112
      %p633 = pneg %p109
      %p634 = scmp.lt.s32.totalorder %s32, 1
      %s635 = scalar_select %p634, %s32, 1
      %s636 = scalar_lea.vmem %s3, %s635
      %p637 = pneg %p138
      %p638 = pneg %p135
      %p639 = scmp.lt.s32.totalorder %s32, 1
      %s640 = scalar_select %p639, %s32, 1
      %s641 = smul.addr %s640, 16
      %s642 = smul.addr %s641, 4
      %s643 = scalar_lea.vmem %s4, %s642
      %p644 = pneg %p164
      %p645 = pneg %p161
      %p646 = scmp.lt.s32.totalorder %s32, 1
      %s647 = scalar_select %p646, %s32, 1
      %s648 = scalar_lea.vmem %s5, %s647
      %p649 = pneg %p190
      %p650 = pneg %p187
      %p651 = scmp.lt.s32.totalorder %s32, 1
      %s652 = scalar_select %p651, %s32, 1
      %s653 = smul.addr %s652, 32
      %s654 = smul.addr %s653, 4
      %s655 = scalar_lea.vmem %s6, %s654
      %p656 = pneg %p216
      %p657 = pneg %p213
      %p658 = scmp.lt.s32.totalorder %s32, 1
      %s659 = scalar_select %p658, %s32, 1
      %s660 = smul.addr %s659, 2
      %s661 = scalar_lea.vmem %s7, %s660
      %p662 = pneg %p242
      %p663 = pneg %p239
      %p664 = scmp.lt.s32.totalorder %s32, 1
      %s665 = scalar_select %p664, %s32, 1
      %s666 = smul.addr %s665, 16
      %s667 = smul.addr %s666, 4
      %s668 = scalar_lea.vmem %s8, %s667
      %p669 = pneg %p268
      %p670 = pneg %p265
      %p671 = scmp.lt.s32.totalorder %s32, 1
      %s672 = scalar_select %p671, %s32, 1
      %s673 = scalar_lea.vmem %s9, %s672
      %p674 = pneg %p294
      %p675 = pneg %p291
      %p676 = scmp.lt.s32.totalorder %s32, 1
      %s677 = scalar_select %p676, %s32, 1
      %s678 = scalar_lea.vmem %s10, %s677
      %p679 = pneg %p320
      %p680 = pneg %p317
      %p681 = scmp.lt.s32.totalorder %s32, 1
      %s682 = scalar_select %p681, %s32, 1
      %s683 = scalar_lea.vmem %s11, %s682
      %p684 = pneg %p346
      %p685 = pneg %p343
      %p686 = scmp.lt.s32.totalorder %s32, 1
      %s687 = scalar_select %p686, %s32, 1
      %s688 = smul.addr %s687, 16
      %s689 = smul.addr %s688, 4
      %s690 = scalar_lea.vmem %s12, %s689
      %p691 = pneg %p372
      %p692 = pneg %p369
      %p693 = scmp.lt.s32.totalorder %s32, 1
      %s694 = scalar_select %p693, %s32, 1
      %s695 = scalar_lea.vmem %s13, %s694
      %p696 = pneg %p398
      %p697 = pneg %p395
      %p698 = scmp.lt.s32.totalorder %s32, 1
      %s699 = scalar_select %p698, %s32, 1
      %s700 = smul.addr %s699, 16
      %s701 = smul.addr %s700, 4
      %s702 = scalar_lea.vmem %s14, %s701
      %p703 = pneg %p424
      %p704 = pneg %p421
      %p705 = scmp.lt.s32.totalorder %s32, 1
      %s706 = scalar_select %p705, %s32, 1
      %s707 = scalar_lea.vmem %s15, %s706
      %p708 = pneg %p450
      %p709 = pneg %p447
      %p710 = pneg %p476
      %p711 = pneg %p473
      %s712 = smul.u32 2, %s31
      %p713 = scmp.lt.s32.totalorder %s712, 1
      %s714 = scalar_select %p713, %s712, 1
      %s715 = smul.addr %s714, 8
      %s716 = scalar_lea.vmem %s16, %s715
      %s717 = smul.u32 2, %s31
      %p718 = scmp.lt.s32.totalorder %s717, 1
      %s719 = scalar_select %p718, %s717, 1
      %s720 = smul.addr %s719, 8
      %s721 = scalar_lea.vmem %s0, %s720
      %s722 = smul.u32 2, %s31
      %s723 = smul.u32 2, %s31
      %p724 = scmp.lt.s32.totalorder %s723, 1
      %s725 = scalar_select %p724, %s723, 1
      %s726 = smul.addr %s725, 8
      %s727 = scalar_lea.vmem %s1, %s726
      %s728 = smul.u32 2, %s31
      %p729 = scmp.lt.s32.totalorder %s32, 1
      %s730 = scalar_select %p729, %s32, 1
      %s731 = scalar_lea.vmem %s2, %s730
      %p732 = scmp.lt.s32.totalorder %s32, 1
      %s733 = scalar_select %p732, %s32, 1
      %s734 = scalar_lea.vmem %s3, %s733
      %p735 = scmp.lt.s32.totalorder %s32, 1
      %s736 = scalar_select %p735, %s32, 1
      %s737 = smul.addr %s736, 16
      %s738 = smul.addr %s737, 4
      %s739 = scalar_lea.vmem %s4, %s738
      %p740 = scmp.lt.s32.totalorder %s32, 1
      %s741 = scalar_select %p740, %s32, 1
      %s742 = scalar_lea.vmem %s5, %s741
      %p743 = scmp.lt.s32.totalorder %s32, 1
      %s744 = scalar_select %p743, %s32, 1
      %s745 = smul.addr %s744, 32
      %s746 = smul.addr %s745, 4
      %s747 = scalar_lea.vmem %s6, %s746
      %p748 = scmp.lt.s32.totalorder %s32, 1
      %s749 = scalar_select %p748, %s32, 1
      %s750 = smul.addr %s749, 2
      %s751 = scalar_lea.vmem %s7, %s750
      %p752 = scmp.lt.s32.totalorder %s32, 1
      %s753 = scalar_select %p752, %s32, 1
      %s754 = smul.addr %s753, 16
      %s755 = smul.addr %s754, 4
      %s756 = scalar_lea.vmem %s8, %s755
      %p757 = scmp.lt.s32.totalorder %s32, 1
      %s758 = scalar_select %p757, %s32, 1
      %s759 = scalar_lea.vmem %s9, %s758
      %p760 = scmp.lt.s32.totalorder %s32, 1
      %s761 = scalar_select %p760, %s32, 1
      %s762 = scalar_lea.vmem %s10, %s761
      %p763 = scmp.lt.s32.totalorder %s32, 1
      %s764 = scalar_select %p763, %s32, 1
      %s765 = scalar_lea.vmem %s11, %s764
      %p766 = scmp.lt.s32.totalorder %s32, 1
      %s767 = scalar_select %p766, %s32, 1
      %s768 = smul.addr %s767, 16
      %s769 = smul.addr %s768, 4
      %s770 = scalar_lea.vmem %s12, %s769
      %p771 = scmp.lt.s32.totalorder %s32, 1
      %s772 = scalar_select %p771, %s32, 1
      %s773 = scalar_lea.vmem %s13, %s772
      %p774 = scmp.lt.s32.totalorder %s32, 1
      %s775 = scalar_select %p774, %s32, 1
      %s776 = smul.addr %s775, 16
      %s777 = smul.addr %s776, 4
      %s778 = scalar_lea.vmem %s14, %s777
      %p779 = scmp.lt.s32.totalorder %s32, 1
      %s780 = scalar_select %p779, %s32, 1
      %s781 = scalar_lea.vmem %s15, %s780
      %s782 = smul.u32 2, %s31
      %p783 = scmp.lt.s32.totalorder %s782, 1
      %s784 = scalar_select %p783, %s782, 1
      %s785 = smul.addr %s784, 8
      %s786 = scalar_lea.vmem %s16, %s785
      %s787 = smul.u32 2, %s31
      %p789 = scmp.eq.s32.totalorder %s32, 0
      // Predicated region
      $region85: #{crossmodal_transformer.1} parent=83 // pred_check
        %p790 = pneg %p789
      $region86: #{crossmodal_transformer.1} parent=83 // pred_check_branch
        %792 = sbr.rel (%p790) target = $region88
      $region87: #{crossmodal_transformer.1} parent=83 // pred_region
        %v793 = vld [vmem:[%s721] sm:$0xff]
        %v794 = vld [vmem:[%s721 + $0x8] sm:$0xff]
        %795 = vst [vmem:[#allocation2] sm:$0xff] %v793
        %796 = vst [vmem:[#allocation2 + $0x8] sm:$0xff] %v794
      $region88: #{crossmodal_transformer.1} parent=83 // pred_fallthru
        _
      %v797 = vlaneseq
      %v798 = vand.u32 %v797, 127
      %vm799 = vcmp.lt.s32.totalorder %v798, 32
      %v800 = vld [vmem:[%s731] sm:$0x1]
      %v801 = vld [vmem:[%s734] sm:$0x1]
      %v802 = vld [vmem:[#allocation2] sm:$0xff]
      %v803 = vld [vmem:[#allocation2 + $0x8] sm:$0xff]
      %804 = vadd.xlane.f32.xlu0 %v802
      %v805 = vpop.xlane.xlu0 %804
      %806 = vadd.xlane.f32.xlu0 %v803
      %v807 = vpop.xlane.xlu0 %806
      %v808 = vmul.f32 %v805, 0.03125
      %v809 = vmul.f32 %v807, 0.03125
      %v810 = vsub.f32 %v802, %v808
      %v811 = vsub.f32 %v803, %v809
      %v812 = vsel %vm799, 1, 0
      %vm813 = vcmp.eq.s32.totalorder %v812, 1
      %v814 = vsel %vm813, %v810, 0.0
      %v815 = vsel %vm813, %v811, 0.0
      %v816 = vmul.f32 %v814, %v814
      %v817 = vmul.f32 %v815, %v815
      %818 = vadd.xlane.f32.xlu0 %v816
      %v819 = vpop.xlane.xlu0 %818
      %820 = vadd.xlane.f32.xlu0 %v817
      %v821 = vpop.xlane.xlu0 %820
      %v822 = vmul.f32 %v819, 0.03125
      %v823 = vmul.f32 %v821, 0.03125
      %v824 = vadd.f32 %v822, 1e-05
      %v825 = vadd.f32 %v823, 1e-05
      %v826 = vrsqrt.pop %v824
      %v827 = vmul.f32 %v826, %v824
      %v828 = vmul.f32 %v827, %v826
      %v829 = vmul.f32 0.5, %v828
      %v830 = vsub.f32 1.5, %v829
      %v831 = vmul.f32 %v826, %v830
      %vm832 = vweird.f32 %v824
      %vm833 = vweird.f32 %v826
      %vm834 = vmor %vm832, %vm833
      %v835 = vsel %vm834, %v826, %v831
      %v836 = vrsqrt.pop %v825
      %v837 = vmul.f32 %v836, %v825
      %v838 = vmul.f32 %v837, %v836
      %v839 = vmul.f32 0.5, %v838
      %v840 = vsub.f32 1.5, %v839
      %v841 = vmul.f32 %v836, %v840
      %vm842 = vweird.f32 %v825
      %vm843 = vweird.f32 %v836
      %vm844 = vmor %vm842, %vm843
      %v845 = vsel %vm844, %v836, %v841
      %v846 = vmul.f32 %v814, %v835
      %v847 = vmul.f32 %v815, %v845
      %v849 = vperm.slane %v800, 0
      %v851 = vmul.f32 %v846, %v849
      %v852 = vmul.f32 %v847, %v849
      %v854 = vperm.slane %v801, 0
      %v856 = vadd.f32 %v851, %v854
      %v857 = vadd.f32 %v852, %v854
      %v858 = vpack.c.bf16 %v857, %v856
      %v859 = vld [vmem:[%s727] sm:$0xff]
      %v860 = vld [vmem:[%s727 + $0x8] sm:$0xff]
      %861 = vadd.xlane.f32.xlu0 %v859
      %v862 = vpop.xlane.xlu0 %861
      %863 = vadd.xlane.f32.xlu0 %v860
      %v864 = vpop.xlane.xlu0 %863
      %v865 = vmul.f32 %v862, 0.03125
      %v866 = vmul.f32 %v864, 0.03125
      %v867 = vsub.f32 %v859, %v865
      %v868 = vsub.f32 %v860, %v866
      %v869 = vsel %vm813, %v867, 0.0
      %v870 = vsel %vm813, %v868, 0.0
      %v871 = vmul.f32 %v869, %v869
      %v872 = vmul.f32 %v870, %v870
      %873 = vadd.xlane.f32.xlu0 %v871
      %v874 = vpop.xlane.xlu0 %873
      %875 = vadd.xlane.f32.xlu0 %v872
      %v876 = vpop.xlane.xlu0 %875
      %v877 = vmul.f32 %v874, 0.03125
      %v878 = vmul.f32 %v876, 0.03125
      %v879 = vadd.f32 %v877, 1e-05
      %v880 = vadd.f32 %v878, 1e-05
      %v881 = vrsqrt.pop %v879
      %v882 = vmul.f32 %v881, %v879
      %v883 = vmul.f32 %v882, %v881
      %v884 = vmul.f32 0.5, %v883
      %v885 = vsub.f32 1.5, %v884
      %v886 = vmul.f32 %v881, %v885
      %vm887 = vweird.f32 %v879
      %vm888 = vweird.f32 %v881
      %vm889 = vmor %vm887, %vm888
      %v890 = vsel %vm889, %v881, %v886
      %v891 = vrsqrt.pop %v880
      %v892 = vmul.f32 %v891, %v880
      %v893 = vmul.f32 %v892, %v891
      %v894 = vmul.f32 0.5, %v893
      %v895 = vsub.f32 1.5, %v894
      %v896 = vmul.f32 %v891, %v895
      %vm897 = vweird.f32 %v880
      %vm898 = vweird.f32 %v891
      %vm899 = vmor %vm897, %vm898
      %v900 = vsel %vm899, %v891, %v896
      %v901 = vmul.f32 %v869, %v890
      %v902 = vmul.f32 %v870, %v900
      %v903 = vmul.f32 %v901, %v849
      %v904 = vmul.f32 %v902, %v849
      %v905 = vadd.f32 %v903, %v854
      %v906 = vadd.f32 %v904, %v854
      %v907 = vpack.c.bf16 %v906, %v905
      %v908 = vld [vmem:[%s739] sm:$0xf]
      %v909 = vld [vmem:[%s739 + $0x4] sm:$0xf]
      %v910 = vld [vmem:[%s739 + $0x8] sm:$0xf]
      %v911 = vld [vmem:[%s739 + $0xc] sm:$0xf]
      %v912 = vld [vmem:[%s739 + $0x10] sm:$0xf]
      %v913 = vld [vmem:[%s739 + $0x14] sm:$0xf]
      %v914 = vld [vmem:[%s739 + $0x18] sm:$0xf]
      %v915 = vld [vmem:[%s739 + $0x1c] sm:$0xf]
      %v916 = vld [vmem:[%s739 + $0x20] sm:$0xf]
      %v917 = vld [vmem:[%s739 + $0x24] sm:$0xf]
      %v918 = vld [vmem:[%s739 + $0x28] sm:$0xf]
      %v919 = vld [vmem:[%s739 + $0x2c] sm:$0xf]
      %v920 = vld [vmem:[%s739 + $0x30] sm:$0xf]
      %v921 = vld [vmem:[%s739 + $0x34] sm:$0xf]
      %v922 = vld [vmem:[%s739 + $0x38] sm:$0xf]
      %v923 = vld [vmem:[%s739 + $0x3c] sm:$0xf]
      %v924 = vld [vmem:[%s742] sm:$0x1]
      %v926 = vperm.slane %v924, 0
      %v944 = vunpack.c.l.b16 %v908
      %v945 = vunpack.c.l.b16 %v909
      %v946 = vunpack.c.l.b16 %v910
      %v947 = vunpack.c.l.b16 %v911
      %v948 = vunpack.c.l.b16 %v912
      %v949 = vunpack.c.l.b16 %v913
      %v950 = vunpack.c.l.b16 %v914
      %v951 = vunpack.c.l.b16 %v915
      %v952 = vunpack.c.l.b16 %v916
      %v953 = vunpack.c.l.b16 %v917
      %v954 = vunpack.c.l.b16 %v918
      %v955 = vunpack.c.l.b16 %v919
      %v956 = vunpack.c.l.b16 %v920
      %v957 = vunpack.c.l.b16 %v921
      %v958 = vunpack.c.l.b16 %v922
      %v959 = vunpack.c.l.b16 %v923
      %v960 = vpack.c.b16 %v945, %v944
      %v961 = vpack.c.b16 %v947, %v946
      %v962 = vpack.c.b16 %v949, %v948
      %v963 = vpack.c.b16 %v951, %v950
      %v964 = vpack.c.b16 %v953, %v952
      %v965 = vpack.c.b16 %v955, %v954
      %v966 = vpack.c.b16 %v957, %v956
      %v967 = vpack.c.b16 %v959, %v958
      %976 = vmatpush.bf16.msra.mxu0 %v967
      %977 = vmatpush.bf16.msra.mxu0 %v966
      %978 = vmatpush.bf16.msra.mxu0 %v965
      %979 = vmatpush.bf16.msra.mxu0 %v964
      %980 = vmatpush.bf16.msra.mxu0 %v963
      %981 = vmatpush.bf16.msra.mxu0 %v962
      %982 = vmatpush.bf16.msra.mxu0 %v961
      %983 = vmatpush.bf16.msra.mxu0 %v960
      %984 = vmatmul.bf16.gmra.mxu0 %v858
      %v985 = vpop.f32.mrf.mxu0
      %v986 = vadd.f32 %v926, %v985
      %v987 = vpop.f32.mrf.mxu0
      %v988 = vadd.f32 %v926, %v987
      %989 = vdwg.mxu0
      %v990 = vld [vmem:[%s747] sm:$0xff]
      %v991 = vld [vmem:[%s747 + $0x8] sm:$0xff]
      %v992 = vld [vmem:[%s747 + $0x10] sm:$0xff]
      %v993 = vld [vmem:[%s747 + $0x18] sm:$0xff]
      %v994 = vld [vmem:[%s747 + $0x20] sm:$0xff]
      %v995 = vld [vmem:[%s747 + $0x28] sm:$0xff]
      %v996 = vld [vmem:[%s747 + $0x30] sm:$0xff]
      %v997 = vld [vmem:[%s747 + $0x38] sm:$0xff]
      %v998 = vld [vmem:[%s747 + $0x40] sm:$0xff]
      %v999 = vld [vmem:[%s747 + $0x48] sm:$0xff]
      %v1000 = vld [vmem:[%s747 + $0x50] sm:$0xff]
      %v1001 = vld [vmem:[%s747 + $0x58] sm:$0xff]
      %v1002 = vld [vmem:[%s747 + $0x60] sm:$0xff]
      %v1003 = vld [vmem:[%s747 + $0x68] sm:$0xff]
      %v1004 = vld [vmem:[%s747 + $0x70] sm:$0xff]
      %v1005 = vld [vmem:[%s747 + $0x78] sm:$0xff]
      %v1006 = vld [vmem:[%s751] sm:$0x3]
      %v1008 = vperm.slane %v1006, 0
      %v1009 = vperm.slane %v1006, 1
      %v1028 = vunpack.c.l.b16 %v990
      %v1029 = vunpack.c.h.b16 %v990
      %v1030 = vunpack.c.l.b16 %v991
      %v1031 = vunpack.c.h.b16 %v991
      %v1032 = vunpack.c.l.b16 %v992
      %v1033 = vunpack.c.h.b16 %v992
      %v1034 = vunpack.c.l.b16 %v993
      %v1035 = vunpack.c.h.b16 %v993
      %v1036 = vunpack.c.l.b16 %v994
      %v1037 = vunpack.c.h.b16 %v994
      %v1038 = vunpack.c.l.b16 %v995
      %v1039 = vunpack.c.h.b16 %v995
      %v1040 = vunpack.c.l.b16 %v996
      %v1041 = vunpack.c.h.b16 %v996
      %v1042 = vunpack.c.l.b16 %v997
      %v1043 = vunpack.c.h.b16 %v997
      %v1044 = vunpack.c.l.b16 %v998
      %v1045 = vunpack.c.h.b16 %v998
      %v1046 = vunpack.c.l.b16 %v999
      %v1047 = vunpack.c.h.b16 %v999
      %v1048 = vunpack.c.l.b16 %v1000
      %v1049 = vunpack.c.h.b16 %v1000
      %v1050 = vunpack.c.l.b16 %v1001
      %v1051 = vunpack.c.h.b16 %v1001
      %v1052 = vunpack.c.l.b16 %v1002
      %v1053 = vunpack.c.h.b16 %v1002
      %v1054 = vunpack.c.l.b16 %v1003
      %v1055 = vunpack.c.h.b16 %v1003
      %v1056 = vunpack.c.l.b16 %v1004
      %v1057 = vunpack.c.h.b16 %v1004
      %v1058 = vunpack.c.l.b16 %v1005
      %v1059 = vunpack.c.h.b16 %v1005
      %v1060 = vpack.c.b16 %v1030, %v1028
      %v1061 = vpack.c.b16 %v1031, %v1029
      %v1062 = vpack.c.b16 %v1034, %v1032
      %v1063 = vpack.c.b16 %v1035, %v1033
      %v1064 = vpack.c.b16 %v1038, %v1036
      %v1065 = vpack.c.b16 %v1039, %v1037
      %v1066 = vpack.c.b16 %v1042, %v1040
      %v1067 = vpack.c.b16 %v1043, %v1041
      %v1068 = vpack.c.b16 %v1046, %v1044
      %v1069 = vpack.c.b16 %v1047, %v1045
      %v1070 = vpack.c.b16 %v1050, %v1048
      %v1071 = vpack.c.b16 %v1051, %v1049
      %v1072 = vpack.c.b16 %v1054, %v1052
      %v1073 = vpack.c.b16 %v1055, %v1053
      %v1074 = vpack.c.b16 %v1058, %v1056
      %v1075 = vpack.c.b16 %v1059, %v1057
      %1092 = vmatpush.bf16.msra.mxu0 %v1074
      %1093 = vmatpush.bf16.msra.mxu0 %v1072
      %1094 = vmatpush.bf16.msra.mxu0 %v1070
      %1095 = vmatpush.bf16.msra.mxu0 %v1068
      %1096 = vmatpush.bf16.msra.mxu0 %v1066
      %1097 = vmatpush.bf16.msra.mxu0 %v1064
      %1098 = vmatpush.bf16.msra.mxu0 %v1062
      %1099 = vmatpush.bf16.msra.mxu0 %v1060
      %1100 = vmatmul.bf16.gmra.mxu0 %v907
      %v1101 = vpop.f32.mrf.mxu0
      %v1102 = vadd.f32 %v1008, %v1101
      %v1103 = vpop.f32.mrf.mxu0
      %v1104 = vadd.f32 %v1008, %v1103
      %1105 = vdwg.mxu0
      %1106 = vmatpush.bf16.msra.mxu0 %v1075
      %1107 = vmatpush.bf16.msra.mxu0 %v1073
      %1108 = vmatpush.bf16.msra.mxu0 %v1071
      %1109 = vmatpush.bf16.msra.mxu0 %v1069
      %1110 = vmatpush.bf16.msra.mxu0 %v1067
      %1111 = vmatpush.bf16.msra.mxu0 %v1065
      %1112 = vmatpush.bf16.msra.mxu0 %v1063
      %1113 = vmatpush.bf16.msra.mxu0 %v1061
      %1114 = vmatmul.bf16.gmra.mxu0 %v907
      %v1115 = vpop.f32.mrf.mxu0
      %v1116 = vadd.f32 %v1009, %v1115
      %v1117 = vpop.f32.mrf.mxu0
      %v1118 = vadd.f32 %v1009, %v1117
      %1119 = vdwg.mxu0
      %v1120 = vpack.c.bf16 %v986, %v986
      %v1121 = vpack.c.bf16 %v988, %v988
      %1124 = vrot.lane.b32.xlu0 %v1120, 96
      %v1125 = vpop.permute.xlu0 %1124
      %1126 = vrot.lane.b32.xlu0 %v1121, 96
      %v1127 = vpop.permute.xlu0 %1126
      %1128 = vrot.lane.b32.xlu0 %v1120, 64
      %v1129 = vpop.permute.xlu0 %1128
      %1130 = vrot.lane.b32.xlu0 %v1121, 64
      %v1131 = vpop.permute.xlu0 %1130
      %1132 = vrot.lane.b32.xlu0 %v1120, 32
      %v1133 = vpop.permute.xlu0 %1132
      %1134 = vrot.lane.b32.xlu0 %v1121, 32
      %v1135 = vpop.permute.xlu0 %1134
      %v1138 = vpack.i.b16 %v1125, %v1120
      %v1139 = vshrl.u32 %v1120, 16
      %v1140 = vshrl.u32 %v1125, 16
      %v1141 = vpack.i.b16 %v1140, %v1139
      %v1144 = vpack.i.b16 %v1133, %v1129
      %v1145 = vshrl.u32 %v1129, 16
      %v1146 = vshrl.u32 %v1133, 16
      %v1147 = vpack.i.b16 %v1146, %v1145
      %v1150 = vpack.i.b16 %v1127, %v1121
      %v1151 = vshrl.u32 %v1121, 16
      %v1152 = vshrl.u32 %v1127, 16
      %v1153 = vpack.i.b16 %v1152, %v1151
      %v1156 = vpack.i.b16 %v1135, %v1131
      %v1157 = vshrl.u32 %v1131, 16
      %v1158 = vshrl.u32 %v1135, 16
      %v1159 = vpack.i.b16 %v1158, %v1157
      %v1162 = vunpack.c.l.s4 1983009808
      %v1163 = vunpack.c.0.s8 %v1162
      %v1164 = vperm.slane %v1138, %v1163
      %v1167 = vunpack.c.l.s4 1983009808
      %v1168 = vunpack.c.0.s8 %v1167
      %v1169 = vperm.slane %v1144, %v1168
      %v1170 = vrot.slane %v1169, 4
      %vm1171 = vcmask 1047556
      %v1172 = vsel %vm1171, %v1170, %v1164
      %v1173 = vrot.slane %v1164, 4
      %v1174 = vsel %vm1171, %v1169, %v1173
      %v1176 = vunpack.c.l.s4 1934713408
      %v1177 = vunpack.c.0.s8 %v1176
      %v1178 = vperm.slane %v1172, %v1177
      %v1180 = vunpack.c.l.s4 1934713408
      %v1181 = vunpack.c.0.s8 %v1180
      %v1182 = vperm.slane %v1174, %v1181
      %v1183 = vrot.slane %v1178, 4
      %v1184 = vsel %vm1171, 0, %v1183
      %v1185 = vrot.slane %v1182, 4
      %v1186 = vsel %vm1171, 0, %v1185
      %v1189 = vunpack.c.l.s4 1983009808
      %v1190 = vunpack.c.0.s8 %v1189
      %v1191 = vperm.slane %v1141, %v1190
      %v1194 = vunpack.c.l.s4 1983009808
      %v1195 = vunpack.c.0.s8 %v1194
      %v1196 = vperm.slane %v1147, %v1195
      %v1197 = vrot.slane %v1196, 4
      %v1198 = vsel %vm1171, %v1197, %v1191
      %v1199 = vrot.slane %v1191, 4
      %v1200 = vsel %vm1171, %v1196, %v1199
      %v1202 = vunpack.c.l.s4 1934713408
      %v1203 = vunpack.c.0.s8 %v1202
      %v1204 = vperm.slane %v1198, %v1203
      %v1206 = vunpack.c.l.s4 1934713408
      %v1207 = vunpack.c.0.s8 %v1206
      %v1208 = vperm.slane %v1200, %v1207
      %v1209 = vrot.slane %v1204, 4
      %v1210 = vsel %vm1171, 0, %v1209
      %v1211 = vrot.slane %v1208, 4
      %v1212 = vsel %vm1171, 0, %v1211
      %v1215 = vunpack.c.l.s4 1983009808
      %v1216 = vunpack.c.0.s8 %v1215
      %v1217 = vperm.slane %v1150, %v1216
      %v1220 = vunpack.c.l.s4 1983009808
      %v1221 = vunpack.c.0.s8 %v1220
      %v1222 = vperm.slane %v1156, %v1221
      %v1223 = vrot.slane %v1222, 4
      %v1224 = vsel %vm1171, %v1223, %v1217
      %v1225 = vrot.slane %v1217, 4
      %v1226 = vsel %vm1171, %v1222, %v1225
      %v1228 = vunpack.c.l.s4 1934713408
      %v1229 = vunpack.c.0.s8 %v1228
      %v1230 = vperm.slane %v1224, %v1229
      %v1232 = vunpack.c.l.s4 1934713408
      %v1233 = vunpack.c.0.s8 %v1232
      %v1234 = vperm.slane %v1226, %v1233
      %v1235 = vrot.slane %v1230, 4
      %v1236 = vsel %vm1171, 0, %v1235
      %v1237 = vrot.slane %v1234, 4
      %v1238 = vsel %vm1171, 0, %v1237
      %v1241 = vunpack.c.l.s4 1983009808
      %v1242 = vunpack.c.0.s8 %v1241
      %v1243 = vperm.slane %v1153, %v1242
      %v1246 = vunpack.c.l.s4 1983009808
      %v1247 = vunpack.c.0.s8 %v1246
      %v1248 = vperm.slane %v1159, %v1247
      %v1249 = vrot.slane %v1248, 4
      %v1250 = vsel %vm1171, %v1249, %v1243
      %v1251 = vrot.slane %v1243, 4
      %v1252 = vsel %vm1171, %v1248, %v1251
      %v1254 = vunpack.c.l.s4 1934713408
      %v1255 = vunpack.c.0.s8 %v1254
      %v1256 = vperm.slane %v1250, %v1255
      %v1258 = vunpack.c.l.s4 1934713408
      %v1259 = vunpack.c.0.s8 %v1258
      %v1260 = vperm.slane %v1252, %v1259
      %v1261 = vrot.slane %v1256, 4
      %v1262 = vsel %vm1171, 0, %v1261
      %v1263 = vrot.slane %v1260, 4
      %v1264 = vsel %vm1171, 0, %v1263
      %v1265 = vsel %vm1171, %v1185, %v1178
      %v1267 = vunpack.c.l.s4 1983009808
      %v1268 = vunpack.c.0.s8 %v1267
      %v1269 = vperm.slane %v1265, %v1268
      %v1270 = vrot.slane %v1186, 4
      %v1271 = vsel %vm1171, %v1270, %v1184
      %v1273 = vunpack.c.l.s4 1983009808
      %v1274 = vunpack.c.0.s8 %v1273
      %v1275 = vperm.slane %v1271, %v1274
      %v1276 = vrot.slane %v1275, 4
      %v1277 = vsel %vm1171, %v1276, %v1269
      %v1279 = vunpack.c.l.s4 1934713408
      %v1280 = vunpack.c.0.s8 %v1279
      %v1281 = vperm.slane %v1277, %v1280
      %v1282 = vrot.slane %v1281, 4
      %v1283 = vsel %vm1171, 0, %v1282
      %v1284 = vsel %vm1171, %v1211, %v1204
      %v1286 = vunpack.c.l.s4 1983009808
      %v1287 = vunpack.c.0.s8 %v1286
      %v1288 = vperm.slane %v1284, %v1287
      %v1289 = vrot.slane %v1212, 4
      %v1290 = vsel %vm1171, %v1289, %v1210
      %v1292 = vunpack.c.l.s4 1983009808
      %v1293 = vunpack.c.0.s8 %v1292
      %v1294 = vperm.slane %v1290, %v1293
      %v1295 = vrot.slane %v1294, 4
      %v1296 = vsel %vm1171, %v1295, %v1288
      %v1298 = vunpack.c.l.s4 1934713408
      %v1299 = vunpack.c.0.s8 %v1298
      %v1300 = vperm.slane %v1296, %v1299
      %v1301 = vrot.slane %v1300, 4
      %v1302 = vsel %vm1171, 0, %v1301
      %v1303 = vsel %vm1171, %v1237, %v1230
      %v1305 = vunpack.c.l.s4 1983009808
      %v1306 = vunpack.c.0.s8 %v1305
      %v1307 = vperm.slane %v1303, %v1306
      %v1308 = vrot.slane %v1238, 4
      %v1309 = vsel %vm1171, %v1308, %v1236
      %v1311 = vunpack.c.l.s4 1983009808
      %v1312 = vunpack.c.0.s8 %v1311
      %v1313 = vperm.slane %v1309, %v1312
      %v1314 = vrot.slane %v1313, 4
      %v1315 = vsel %vm1171, %v1314, %v1307
      %v1317 = vunpack.c.l.s4 1934713408
      %v1318 = vunpack.c.0.s8 %v1317
      %v1319 = vperm.slane %v1315, %v1318
      %v1320 = vrot.slane %v1319, 4
      %v1321 = vsel %vm1171, 0, %v1320
      %v1322 = vsel %vm1171, %v1263, %v1256
      %v1324 = vunpack.c.l.s4 1983009808
      %v1325 = vunpack.c.0.s8 %v1324
      %v1326 = vperm.slane %v1322, %v1325
      %v1327 = vrot.slane %v1264, 4
      %v1328 = vsel %vm1171, %v1327, %v1262
      %v1330 = vunpack.c.l.s4 1983009808
      %v1331 = vunpack.c.0.s8 %v1330
      %v1332 = vperm.slane %v1328, %v1331
      %v1333 = vrot.slane %v1332, 4
      %v1334 = vsel %vm1171, %v1333, %v1326
      %v1336 = vunpack.c.l.s4 1934713408
      %v1337 = vunpack.c.0.s8 %v1336
      %v1338 = vperm.slane %v1334, %v1337
      %v1339 = vrot.slane %v1338, 4
      %v1340 = vsel %vm1171, 0, %v1339
      %v1343 = vpack.i.b16 %v1300, %v1281
      %v1344 = vshrl.u32 %v1281, 16
      %v1345 = vshrl.u32 %v1300, 16
      %v1346 = vpack.i.b16 %v1345, %v1344
      %v1349 = vpack.i.b16 %v1302, %v1283
      %v1350 = vshrl.u32 %v1283, 16
      %v1351 = vshrl.u32 %v1302, 16
      %v1352 = vpack.i.b16 %v1351, %v1350
      %v1355 = vpack.i.b16 %v1338, %v1319
      %v1356 = vshrl.u32 %v1319, 16
      %v1357 = vshrl.u32 %v1338, 16
      %v1358 = vpack.i.b16 %v1357, %v1356
      %v1361 = vpack.i.b16 %v1340, %v1321
      %v1362 = vshrl.u32 %v1321, 16
      %v1363 = vshrl.u32 %v1340, 16
      %v1364 = vpack.i.b16 %v1363, %v1362
      %v1365 = vpack.c.bf16 %v1102, %v1102
      %v1366 = vpack.c.bf16 %v1104, %v1104
      %1369 = vrot.lane.b32.xlu0 %v1365, 96
      %v1370 = vpop.permute.xlu0 %1369
      %1371 = vrot.lane.b32.xlu0 %v1366, 96
      %v1372 = vpop.permute.xlu0 %1371
      %1373 = vrot.lane.b32.xlu0 %v1365, 64
      %v1374 = vpop.permute.xlu0 %1373
      %1375 = vrot.lane.b32.xlu0 %v1366, 64
      %v1376 = vpop.permute.xlu0 %1375
      %1377 = vrot.lane.b32.xlu0 %v1365, 32
      %v1378 = vpop.permute.xlu0 %1377
      %1379 = vrot.lane.b32.xlu0 %v1366, 32
      %v1380 = vpop.permute.xlu0 %1379
      %v1383 = vpack.i.b16 %v1370, %v1365
      %v1384 = vshrl.u32 %v1365, 16
      %v1385 = vshrl.u32 %v1370, 16
      %v1386 = vpack.i.b16 %v1385, %v1384
      %v1389 = vpack.i.b16 %v1378, %v1374
      %v1390 = vshrl.u32 %v1374, 16
      %v1391 = vshrl.u32 %v1378, 16
      %v1392 = vpack.i.b16 %v1391, %v1390
      %v1395 = vpack.i.b16 %v1372, %v1366
      %v1396 = vshrl.u32 %v1366, 16
      %v1397 = vshrl.u32 %v1372, 16
      %v1398 = vpack.i.b16 %v1397, %v1396
      %v1401 = vpack.i.b16 %v1380, %v1376
      %v1402 = vshrl.u32 %v1376, 16
      %v1403 = vshrl.u32 %v1380, 16
      %v1404 = vpack.i.b16 %v1403, %v1402
      %v1407 = vunpack.c.l.s4 1983009808
      %v1408 = vunpack.c.0.s8 %v1407
      %v1409 = vperm.slane %v1383, %v1408
      %v1412 = vunpack.c.l.s4 1983009808
      %v1413 = vunpack.c.0.s8 %v1412
      %v1414 = vperm.slane %v1389, %v1413
      %v1415 = vrot.slane %v1414, 4
      %v1416 = vsel %vm1171, %v1415, %v1409
      %v1417 = vrot.slane %v1409, 4
      %v1418 = vsel %vm1171, %v1414, %v1417
      %v1420 = vunpack.c.l.s4 1934713408
      %v1421 = vunpack.c.0.s8 %v1420
      %v1422 = vperm.slane %v1416, %v1421
      %v1424 = vunpack.c.l.s4 1934713408
      %v1425 = vunpack.c.0.s8 %v1424
      %v1426 = vperm.slane %v1418, %v1425
      %v1427 = vrot.slane %v1422, 4
      %v1428 = vsel %vm1171, 0, %v1427
      %v1429 = vrot.slane %v1426, 4
      %v1430 = vsel %vm1171, 0, %v1429
      %v1433 = vunpack.c.l.s4 1983009808
      %v1434 = vunpack.c.0.s8 %v1433
      %v1435 = vperm.slane %v1386, %v1434
      %v1438 = vunpack.c.l.s4 1983009808
      %v1439 = vunpack.c.0.s8 %v1438
      %v1440 = vperm.slane %v1392, %v1439
      %v1441 = vrot.slane %v1440, 4
      %v1442 = vsel %vm1171, %v1441, %v1435
      %v1443 = vrot.slane %v1435, 4
      %v1444 = vsel %vm1171, %v1440, %v1443
      %v1446 = vunpack.c.l.s4 1934713408
      %v1447 = vunpack.c.0.s8 %v1446
      %v1448 = vperm.slane %v1442, %v1447
      %v1450 = vunpack.c.l.s4 1934713408
      %v1451 = vunpack.c.0.s8 %v1450
      %v1452 = vperm.slane %v1444, %v1451
      %v1453 = vrot.slane %v1448, 4
      %v1454 = vsel %vm1171, 0, %v1453
      %v1455 = vrot.slane %v1452, 4
      %v1456 = vsel %vm1171, 0, %v1455
      %v1459 = vunpack.c.l.s4 1983009808
      %v1460 = vunpack.c.0.s8 %v1459
      %v1461 = vperm.slane %v1395, %v1460
      %v1464 = vunpack.c.l.s4 1983009808
      %v1465 = vunpack.c.0.s8 %v1464
      %v1466 = vperm.slane %v1401, %v1465
      %v1467 = vrot.slane %v1466, 4
      %v1468 = vsel %vm1171, %v1467, %v1461
      %v1469 = vrot.slane %v1461, 4
      %v1470 = vsel %vm1171, %v1466, %v1469
      %v1472 = vunpack.c.l.s4 1934713408
      %v1473 = vunpack.c.0.s8 %v1472
      %v1474 = vperm.slane %v1468, %v1473
      %v1476 = vunpack.c.l.s4 1934713408
      %v1477 = vunpack.c.0.s8 %v1476
      %v1478 = vperm.slane %v1470, %v1477
      %v1479 = vrot.slane %v1474, 4
      %v1480 = vsel %vm1171, 0, %v1479
      %v1481 = vrot.slane %v1478, 4
      %v1482 = vsel %vm1171, 0, %v1481
      %v1485 = vunpack.c.l.s4 1983009808
      %v1486 = vunpack.c.0.s8 %v1485
      %v1487 = vperm.slane %v1398, %v1486
      %v1490 = vunpack.c.l.s4 1983009808
      %v1491 = vunpack.c.0.s8 %v1490
      %v1492 = vperm.slane %v1404, %v1491
      %v1493 = vrot.slane %v1492, 4
      %v1494 = vsel %vm1171, %v1493, %v1487
      %v1495 = vrot.slane %v1487, 4
      %v1496 = vsel %vm1171, %v1492, %v1495
      %v1498 = vunpack.c.l.s4 1934713408
      %v1499 = vunpack.c.0.s8 %v1498
      %v1500 = vperm.slane %v1494, %v1499
      %v1502 = vunpack.c.l.s4 1934713408
      %v1503 = vunpack.c.0.s8 %v1502
      %v1504 = vperm.slane %v1496, %v1503
      %v1505 = vrot.slane %v1500, 4
      %v1506 = vsel %vm1171, 0, %v1505
      %v1507 = vrot.slane %v1504, 4
      %v1508 = vsel %vm1171, 0, %v1507
      %v1509 = vsel %vm1171, %v1429, %v1422
      %v1511 = vunpack.c.l.s4 1983009808
      %v1512 = vunpack.c.0.s8 %v1511
      %v1513 = vperm.slane %v1509, %v1512
      %v1514 = vrot.slane %v1430, 4
      %v1515 = vsel %vm1171, %v1514, %v1428
      %v1517 = vunpack.c.l.s4 1983009808
      %v1518 = vunpack.c.0.s8 %v1517
      %v1519 = vperm.slane %v1515, %v1518
      %v1520 = vrot.slane %v1519, 4
      %v1521 = vsel %vm1171, %v1520, %v1513
      %v1523 = vunpack.c.l.s4 1934713408
      %v1524 = vunpack.c.0.s8 %v1523
      %v1525 = vperm.slane %v1521, %v1524
      %v1526 = vrot.slane %v1525, 4
      %v1527 = vsel %vm1171, 0, %v1526
      %v1528 = vsel %vm1171, %v1455, %v1448
      %v1530 = vunpack.c.l.s4 1983009808
      %v1531 = vunpack.c.0.s8 %v1530
      %v1532 = vperm.slane %v1528, %v1531
      %v1533 = vrot.slane %v1456, 4
      %v1534 = vsel %vm1171, %v1533, %v1454
      %v1536 = vunpack.c.l.s4 1983009808
      %v1537 = vunpack.c.0.s8 %v1536
      %v1538 = vperm.slane %v1534, %v1537
      %v1539 = vrot.slane %v1538, 4
      %v1540 = vsel %vm1171, %v1539, %v1532
      %v1542 = vunpack.c.l.s4 1934713408
      %v1543 = vunpack.c.0.s8 %v1542
      %v1544 = vperm.slane %v1540, %v1543
      %v1545 = vrot.slane %v1544, 4
      %v1546 = vsel %vm1171, 0, %v1545
      %v1547 = vsel %vm1171, %v1481, %v1474
      %v1549 = vunpack.c.l.s4 1983009808
      %v1550 = vunpack.c.0.s8 %v1549
      %v1551 = vperm.slane %v1547, %v1550
      %v1552 = vrot.slane %v1482, 4
      %v1553 = vsel %vm1171, %v1552, %v1480
      %v1555 = vunpack.c.l.s4 1983009808
      %v1556 = vunpack.c.0.s8 %v1555
      %v1557 = vperm.slane %v1553, %v1556
      %v1558 = vrot.slane %v1557, 4
      %v1559 = vsel %vm1171, %v1558, %v1551
      %v1561 = vunpack.c.l.s4 1934713408
      %v1562 = vunpack.c.0.s8 %v1561
      %v1563 = vperm.slane %v1559, %v1562
      %v1564 = vrot.slane %v1563, 4
      %v1565 = vsel %vm1171, 0, %v1564
      %v1566 = vsel %vm1171, %v1507, %v1500
      %v1568 = vunpack.c.l.s4 1983009808
      %v1569 = vunpack.c.0.s8 %v1568
      %v1570 = vperm.slane %v1566, %v1569
      %v1571 = vrot.slane %v1508, 4
      %v1572 = vsel %vm1171, %v1571, %v1506
      %v1574 = vunpack.c.l.s4 1983009808
      %v1575 = vunpack.c.0.s8 %v1574
      %v1576 = vperm.slane %v1572, %v1575
      %v1577 = vrot.slane %v1576, 4
      %v1578 = vsel %vm1171, %v1577, %v1570
      %v1580 = vunpack.c.l.s4 1934713408
      %v1581 = vunpack.c.0.s8 %v1580
      %v1582 = vperm.slane %v1578, %v1581
      %v1583 = vrot.slane %v1582, 4
      %v1584 = vsel %vm1171, 0, %v1583
      %v1587 = vpack.i.b16 %v1544, %v1525
      %v1588 = vshrl.u32 %v1525, 16
      %v1589 = vshrl.u32 %v1544, 16
      %v1590 = vpack.i.b16 %v1589, %v1588
      %v1593 = vpack.i.b16 %v1546, %v1527
      %v1594 = vshrl.u32 %v1527, 16
      %v1595 = vshrl.u32 %v1546, 16
      %v1596 = vpack.i.b16 %v1595, %v1594
      %v1599 = vpack.i.b16 %v1582, %v1563
      %v1600 = vshrl.u32 %v1563, 16
      %v1601 = vshrl.u32 %v1582, 16
      %v1602 = vpack.i.b16 %v1601, %v1600
      %v1605 = vpack.i.b16 %v1584, %v1565
      %v1606 = vshrl.u32 %v1565, 16
      %v1607 = vshrl.u32 %v1584, 16
      %v1608 = vpack.i.b16 %v1607, %v1606
      %v1609 = vpack.c.bf16 %v1116, %v1116
      %v1610 = vpack.c.bf16 %v1118, %v1118
      %1613 = vrot.lane.b32.xlu0 %v1609, 96
      %v1614 = vpop.permute.xlu0 %1613
      %1615 = vrot.lane.b32.xlu0 %v1610, 96
      %v1616 = vpop.permute.xlu0 %1615
      %1617 = vrot.lane.b32.xlu0 %v1609, 64
      %v1618 = vpop.permute.xlu0 %1617
      %1619 = vrot.lane.b32.xlu0 %v1610, 64
      %v1620 = vpop.permute.xlu0 %1619
      %1621 = vrot.lane.b32.xlu0 %v1609, 32
      %v1622 = vpop.permute.xlu0 %1621
      %1623 = vrot.lane.b32.xlu0 %v1610, 32
      %v1624 = vpop.permute.xlu0 %1623
      %v1627 = vpack.i.b16 %v1614, %v1609
      %v1628 = vshrl.u32 %v1609, 16
      %v1629 = vshrl.u32 %v1614, 16
      %v1630 = vpack.i.b16 %v1629, %v1628
      %v1633 = vpack.i.b16 %v1622, %v1618
      %v1634 = vshrl.u32 %v1618, 16
      %v1635 = vshrl.u32 %v1622, 16
      %v1636 = vpack.i.b16 %v1635, %v1634
      %v1639 = vpack.i.b16 %v1616, %v1610
      %v1640 = vshrl.u32 %v1610, 16
      %v1641 = vshrl.u32 %v1616, 16
      %v1642 = vpack.i.b16 %v1641, %v1640
      %v1645 = vpack.i.b16 %v1624, %v1620
      %v1646 = vshrl.u32 %v1620, 16
      %v1647 = vshrl.u32 %v1624, 16
      %v1648 = vpack.i.b16 %v1647, %v1646
      %v1651 = vunpack.c.l.s4 1983009808
      %v1652 = vunpack.c.0.s8 %v1651
      %v1653 = vperm.slane %v1627, %v1652
      %v1656 = vunpack.c.l.s4 1983009808
      %v1657 = vunpack.c.0.s8 %v1656
      %v1658 = vperm.slane %v1633, %v1657
      %v1659 = vrot.slane %v1658, 4
      %v1660 = vsel %vm1171, %v1659, %v1653
      %v1661 = vrot.slane %v1653, 4
      %v1662 = vsel %vm1171, %v1658, %v1661
      %v1664 = vunpack.c.l.s4 1934713408
      %v1665 = vunpack.c.0.s8 %v1664
      %v1666 = vperm.slane %v1660, %v1665
      %v1668 = vunpack.c.l.s4 1934713408
      %v1669 = vunpack.c.0.s8 %v1668
      %v1670 = vperm.slane %v1662, %v1669
      %v1671 = vrot.slane %v1666, 4
      %v1672 = vsel %vm1171, 0, %v1671
      %v1673 = vrot.slane %v1670, 4
      %v1674 = vsel %vm1171, 0, %v1673
      %v1677 = vunpack.c.l.s4 1983009808
      %v1678 = vunpack.c.0.s8 %v1677
      %v1679 = vperm.slane %v1630, %v1678
      %v1682 = vunpack.c.l.s4 1983009808
      %v1683 = vunpack.c.0.s8 %v1682
      %v1684 = vperm.slane %v1636, %v1683
      %v1685 = vrot.slane %v1684, 4
      %v1686 = vsel %vm1171, %v1685, %v1679
      %v1687 = vrot.slane %v1679, 4
      %v1688 = vsel %vm1171, %v1684, %v1687
      %v1690 = vunpack.c.l.s4 1934713408
      %v1691 = vunpack.c.0.s8 %v1690
      %v1692 = vperm.slane %v1686, %v1691
      %v1694 = vunpack.c.l.s4 1934713408
      %v1695 = vunpack.c.0.s8 %v1694
      %v1696 = vperm.slane %v1688, %v1695
      %v1697 = vrot.slane %v1692, 4
      %v1698 = vsel %vm1171, 0, %v1697
      %v1699 = vrot.slane %v1696, 4
      %v1700 = vsel %vm1171, 0, %v1699
      %v1703 = vunpack.c.l.s4 1983009808
      %v1704 = vunpack.c.0.s8 %v1703
      %v1705 = vperm.slane %v1639, %v1704
      %v1708 = vunpack.c.l.s4 1983009808
      %v1709 = vunpack.c.0.s8 %v1708
      %v1710 = vperm.slane %v1645, %v1709
      %v1711 = vrot.slane %v1710, 4
      %v1712 = vsel %vm1171, %v1711, %v1705
      %v1713 = vrot.slane %v1705, 4
      %v1714 = vsel %vm1171, %v1710, %v1713
      %v1716 = vunpack.c.l.s4 1934713408
      %v1717 = vunpack.c.0.s8 %v1716
      %v1718 = vperm.slane %v1712, %v1717
      %v1720 = vunpack.c.l.s4 1934713408
      %v1721 = vunpack.c.0.s8 %v1720
      %v1722 = vperm.slane %v1714, %v1721
      %v1723 = vrot.slane %v1718, 4
      %v1724 = vsel %vm1171, 0, %v1723
      %v1725 = vrot.slane %v1722, 4
      %v1726 = vsel %vm1171, 0, %v1725
      %v1729 = vunpack.c.l.s4 1983009808
      %v1730 = vunpack.c.0.s8 %v1729
      %v1731 = vperm.slane %v1642, %v1730
      %v1734 = vunpack.c.l.s4 1983009808
      %v1735 = vunpack.c.0.s8 %v1734
      %v1736 = vperm.slane %v1648, %v1735
      %v1737 = vrot.slane %v1736, 4
      %v1738 = vsel %vm1171, %v1737, %v1731
      %v1739 = vrot.slane %v1731, 4
      %v1740 = vsel %vm1171, %v1736, %v1739
      %v1742 = vunpack.c.l.s4 1934713408
      %v1743 = vunpack.c.0.s8 %v1742
      %v1744 = vperm.slane %v1738, %v1743
      %v1746 = vunpack.c.l.s4 1934713408
      %v1747 = vunpack.c.0.s8 %v1746
      %v1748 = vperm.slane %v1740, %v1747
      %v1749 = vrot.slane %v1744, 4
      %v1750 = vsel %vm1171, 0, %v1749
      %v1751 = vrot.slane %v1748, 4
      %v1752 = vsel %vm1171, 0, %v1751
      %v1753 = vsel %vm1171, %v1673, %v1666
      %v1755 = vunpack.c.l.s4 1983009808
      %v1756 = vunpack.c.0.s8 %v1755
      %v1757 = vperm.slane %v1753, %v1756
      %v1758 = vrot.slane %v1674, 4
      %v1759 = vsel %vm1171, %v1758, %v1672
      %v1761 = vunpack.c.l.s4 1983009808
      %v1762 = vunpack.c.0.s8 %v1761
      %v1763 = vperm.slane %v1759, %v1762
      %v1764 = vrot.slane %v1763, 4
      %v1765 = vsel %vm1171, %v1764, %v1757
      %v1767 = vunpack.c.l.s4 1934713408
      %v1768 = vunpack.c.0.s8 %v1767
      %v1769 = vperm.slane %v1765, %v1768
      %v1770 = vrot.slane %v1769, 4
      %v1771 = vsel %vm1171, 0, %v1770
      %v1772 = vsel %vm1171, %v1699, %v1692
      %v1774 = vunpack.c.l.s4 1983009808
      %v1775 = vunpack.c.0.s8 %v1774
      %v1776 = vperm.slane %v1772, %v1775
      %v1777 = vrot.slane %v1700, 4
      %v1778 = vsel %vm1171, %v1777, %v1698
      %v1780 = vunpack.c.l.s4 1983009808
      %v1781 = vunpack.c.0.s8 %v1780
      %v1782 = vperm.slane %v1778, %v1781
      %v1783 = vrot.slane %v1782, 4
      %v1784 = vsel %vm1171, %v1783, %v1776
      %v1786 = vunpack.c.l.s4 1934713408
      %v1787 = vunpack.c.0.s8 %v1786
      %v1788 = vperm.slane %v1784, %v1787
      %v1789 = vrot.slane %v1788, 4
      %v1790 = vsel %vm1171, 0, %v1789
      %v1791 = vsel %vm1171, %v1725, %v1718
      %v1793 = vunpack.c.l.s4 1983009808
      %v1794 = vunpack.c.0.s8 %v1793
      %v1795 = vperm.slane %v1791, %v1794
      %v1796 = vrot.slane %v1726, 4
      %v1797 = vsel %vm1171, %v1796, %v1724
      %v1799 = vunpack.c.l.s4 1983009808
      %v1800 = vunpack.c.0.s8 %v1799
      %v1801 = vperm.slane %v1797, %v1800
      %v1802 = vrot.slane %v1801, 4
      %v1803 = vsel %vm1171, %v1802, %v1795
      %v1805 = vunpack.c.l.s4 1934713408
      %v1806 = vunpack.c.0.s8 %v1805
      %v1807 = vperm.slane %v1803, %v1806
      %v1808 = vrot.slane %v1807, 4
      %v1809 = vsel %vm1171, 0, %v1808
      %v1810 = vsel %vm1171, %v1751, %v1744
      %v1812 = vunpack.c.l.s4 1983009808
      %v1813 = vunpack.c.0.s8 %v1812
      %v1814 = vperm.slane %v1810, %v1813
      %v1815 = vrot.slane %v1752, 4
      %v1816 = vsel %vm1171, %v1815, %v1750
      %v1818 = vunpack.c.l.s4 1983009808
      %v1819 = vunpack.c.0.s8 %v1818
      %v1820 = vperm.slane %v1816, %v1819
      %v1821 = vrot.slane %v1820, 4
      %v1822 = vsel %vm1171, %v1821, %v1814
      %v1824 = vunpack.c.l.s4 1934713408
      %v1825 = vunpack.c.0.s8 %v1824
      %v1826 = vperm.slane %v1822, %v1825
      %v1827 = vrot.slane %v1826, 4
      %v1828 = vsel %vm1171, 0, %v1827
      %v1831 = vpack.i.b16 %v1788, %v1769
      %v1832 = vshrl.u32 %v1769, 16
      %v1833 = vshrl.u32 %v1788, 16
      %v1834 = vpack.i.b16 %v1833, %v1832
      %v1837 = vpack.i.b16 %v1790, %v1771
      %v1838 = vshrl.u32 %v1771, 16
      %v1839 = vshrl.u32 %v1790, 16
      %v1840 = vpack.i.b16 %v1839, %v1838
      %v1843 = vpack.i.b16 %v1826, %v1807
      %v1844 = vshrl.u32 %v1807, 16
      %v1845 = vshrl.u32 %v1826, 16
      %v1846 = vpack.i.b16 %v1845, %v1844
      %v1849 = vpack.i.b16 %v1828, %v1809
      %v1850 = vshrl.u32 %v1809, 16
      %v1851 = vshrl.u32 %v1828, 16
      %v1852 = vpack.i.b16 %v1851, %v1850
      %v1853 = vlaneseq
      %v1854 = vshrl.u32 %v1853, 7
      %vm1855 = vcmp.gt.s32.totalorder %v798, %v1854
      %vm1856 = vcmp.ge.s32.totalorder %v798, 7
      %vm1857 = vmor %vm1855, %vm1856
      %v1858 = vsel %vm1857, -inf, 1.0
      %vm1859 = vcmask 261120
      %v1861 = vsel %vm1859, %v1343, 0
      %v1864 = vsel %vm1859, %v1587, 0
      %1866 = vmatpush.bf16.xpose.msra.mxu0 0
      %1867 = vmatpush.bf16.xpose.msra.mxu0 0
      %1868 = vmatpush.bf16.xpose.msra.mxu0 0
      %1869 = vmatpush.bf16.xpose.msra.mxu0 0
      %1870 = vmatpush.bf16.xpose.msra.mxu0 0
      %1871 = vmatpush.bf16.xpose.msra.mxu0 0
      %1872 = vmatpush.bf16.xpose.msra.mxu0 0
      %1873 = vmatpush.bf16.xpose.msra.mxu0 %v1864
      %1874 = vmatmul.bf16.gmra.mxu0 %v1861
      %v1875 = vpop.f32.mrf.mxu0
      %v1876 = vadd.f32 %v1858, %v1875
      %v1877 = vpop.f32.mrf.mxu0
      %1878 = vdwg.mxu0
      %v1880 = vsel %vm1859, %v1346, 0
      %v1883 = vsel %vm1859, %v1590, 0
      %1885 = vmatpush.bf16.xpose.msra.mxu0 0
      %1886 = vmatpush.bf16.xpose.msra.mxu0 0
      %1887 = vmatpush.bf16.xpose.msra.mxu0 0
      %1888 = vmatpush.bf16.xpose.msra.mxu0 0
      %1889 = vmatpush.bf16.xpose.msra.mxu0 0
      %1890 = vmatpush.bf16.xpose.msra.mxu0 0
      %1891 = vmatpush.bf16.xpose.msra.mxu0 0
      %1892 = vmatpush.bf16.xpose.msra.mxu0 %v1883
      %1893 = vmatmul.bf16.gmra.mxu0 %v1880
      %v1894 = vpop.f32.mrf.mxu0
      %v1895 = vadd.f32 %v1858, %v1894
      %v1896 = vpop.f32.mrf.mxu0
      %1897 = vdwg.mxu0
      %v1899 = vsel %vm1859, %v1349, 0
      %v1902 = vsel %vm1859, %v1593, 0
      %1904 = vmatpush.bf16.xpose.msra.mxu0 0
      %1905 = vmatpush.bf16.xpose.msra.mxu0 0
      %1906 = vmatpush.bf16.xpose.msra.mxu0 0
      %1907 = vmatpush.bf16.xpose.msra.mxu0 0
      %1908 = vmatpush.bf16.xpose.msra.mxu0 0
      %1909 = vmatpush.bf16.xpose.msra.mxu0 0
      %1910 = vmatpush.bf16.xpose.msra.mxu0 0
      %1911 = vmatpush.bf16.xpose.msra.mxu0 %v1902
      %1912 = vmatmul.bf16.gmra.mxu0 %v1899
      %v1913 = vpop.f32.mrf.mxu0
      %v1914 = vadd.f32 %v1858, %v1913
      %v1915 = vpop.f32.mrf.mxu0
      %1916 = vdwg.mxu0
      %v1918 = vsel %vm1859, %v1352, 0
      %v1921 = vsel %vm1859, %v1596, 0
      %1923 = vmatpush.bf16.xpose.msra.mxu0 0
      %1924 = vmatpush.bf16.xpose.msra.mxu0 0
      %1925 = vmatpush.bf16.xpose.msra.mxu0 0
      %1926 = vmatpush.bf16.xpose.msra.mxu0 0
      %1927 = vmatpush.bf16.xpose.msra.mxu0 0
      %1928 = vmatpush.bf16.xpose.msra.mxu0 0
      %1929 = vmatpush.bf16.xpose.msra.mxu0 0
      %1930 = vmatpush.bf16.xpose.msra.mxu0 %v1921
      %1931 = vmatmul.bf16.gmra.mxu0 %v1918
      %v1932 = vpop.f32.mrf.mxu0
      %v1933 = vadd.f32 %v1858, %v1932
      %v1934 = vpop.f32.mrf.mxu0
      %1935 = vdwg.mxu0
      %v1937 = vsel %vm1859, %v1355, 0
      %v1940 = vsel %vm1859, %v1599, 0
      %1942 = vmatpush.bf16.xpose.msra.mxu0 0
      %1943 = vmatpush.bf16.xpose.msra.mxu0 0
      %1944 = vmatpush.bf16.xpose.msra.mxu0 0
      %1945 = vmatpush.bf16.xpose.msra.mxu0 0
      %1946 = vmatpush.bf16.xpose.msra.mxu0 0
      %1947 = vmatpush.bf16.xpose.msra.mxu0 0
      %1948 = vmatpush.bf16.xpose.msra.mxu0 0
      %1949 = vmatpush.bf16.xpose.msra.mxu0 %v1940
      %1950 = vmatmul.bf16.gmra.mxu0 %v1937
      %v1951 = vpop.f32.mrf.mxu0
      %v1952 = vadd.f32 %v1858, %v1951
      %v1953 = vpop.f32.mrf.mxu0
      %1954 = vdwg.mxu0
      %v1956 = vsel %vm1859, %v1358, 0
      %v1959 = vsel %vm1859, %v1602, 0
      %1961 = vmatpush.bf16.xpose.msra.mxu0 0
      %1962 = vmatpush.bf16.xpose.msra.mxu0 0
      %1963 = vmatpush.bf16.xpose.msra.mxu0 0
      %1964 = vmatpush.bf16.xpose.msra.mxu0 0
      %1965 = vmatpush.bf16.xpose.msra.mxu0 0
      %1966 = vmatpush.bf16.xpose.msra.mxu0 0
      %1967 = vmatpush.bf16.xpose.msra.mxu0 0
      %1968 = vmatpush.bf16.xpose.msra.mxu0 %v1959
      %1969 = vmatmul.bf16.gmra.mxu0 %v1956
      %v1970 = vpop.f32.mrf.mxu0
      %v1971 = vadd.f32 %v1858, %v1970
      %v1972 = vpop.f32.mrf.mxu0
      %1973 = vdwg.mxu0
      %v1975 = vsel %vm1859, %v1361, 0
      %v1978 = vsel %vm1859, %v1605, 0
      %1980 = vmatpush.bf16.xpose.msra.mxu0 0
      %1981 = vmatpush.bf16.xpose.msra.mxu0 0
      %1982 = vmatpush.bf16.xpose.msra.mxu0 0
      %1983 = vmatpush.bf16.xpose.msra.mxu0 0
      %1984 = vmatpush.bf16.xpose.msra.mxu0 0
      %1985 = vmatpush.bf16.xpose.msra.mxu0 0
      %1986 = vmatpush.bf16.xpose.msra.mxu0 0
      %1987 = vmatpush.bf16.xpose.msra.mxu0 %v1978
      %1988 = vmatmul.bf16.gmra.mxu0 %v1975
      %v1989 = vpop.f32.mrf.mxu0
      %v1990 = vadd.f32 %v1858, %v1989
      %v1991 = vpop.f32.mrf.mxu0
      %1992 = vdwg.mxu0
      %v1994 = vsel %vm1859, %v1364, 0
      %v1997 = vsel %vm1859, %v1608, 0
      %1999 = vmatpush.bf16.xpose.msra.mxu0 0
      %2000 = vmatpush.bf16.xpose.msra.mxu0 0
      %2001 = vmatpush.bf16.xpose.msra.mxu0 0
      %2002 = vmatpush.bf16.xpose.msra.mxu0 0
      %2003 = vmatpush.bf16.xpose.msra.mxu0 0
      %2004 = vmatpush.bf16.xpose.msra.mxu0 0
      %2005 = vmatpush.bf16.xpose.msra.mxu0 0
      %2006 = vmatpush.bf16.xpose.msra.mxu0 %v1997
      %2007 = vmatmul.bf16.gmra.mxu0 %v1994
      %v2008 = vpop.f32.mrf.mxu0
      %v2009 = vadd.f32 %v1858, %v2008
      %v2010 = vpop.f32.mrf.mxu0
      %2011 = vdwg.mxu0
      %vm2012 = vcmask 64512
      %v2013 = vsel %vm2012, %v1876, -inf
      %2014 = vmax.xlane.f32.xlu0 %v2013
      %v2015 = vpop.xlane.xlu0 %2014
      %v2016 = vsel %vm2012, %v1895, -inf
      %2017 = vmax.xlane.f32.xlu0 %v2016
      %v2018 = vpop.xlane.xlu0 %2017
      %v2019 = vsel %vm2012, %v1914, -inf
      %2020 = vmax.xlane.f32.xlu0 %v2019
      %v2021 = vpop.xlane.xlu0 %2020
      %v2022 = vsel %vm2012, %v1933, -inf
      %2023 = vmax.xlane.f32.xlu0 %v2022
      %v2024 = vpop.xlane.xlu0 %2023
      %v2025 = vsel %vm2012, %v1952, -inf
      %2026 = vmax.xlane.f32.xlu0 %v2025
      %v2027 = vpop.xlane.xlu0 %2026
      %v2028 = vsel %vm2012, %v1971, -inf
      %2029 = vmax.xlane.f32.xlu0 %v2028
      %v2030 = vpop.xlane.xlu0 %2029
      %v2031 = vsel %vm2012, %v1990, -inf
      %2032 = vmax.xlane.f32.xlu0 %v2031
      %v2033 = vpop.xlane.xlu0 %2032
      %v2034 = vsel %vm2012, %v2009, -inf
      %2035 = vmax.xlane.f32.xlu0 %v2034
      %v2036 = vpop.xlane.xlu0 %2035
      %v2037 = vsub.f32 %v1876, %v2015
      %v2038 = vsub.f32 %v1895, %v2018
      %v2039 = vsub.f32 %v1914, %v2021
      %v2040 = vsub.f32 %v1933, %v2024
      %v2041 = vsub.f32 %v1952, %v2027
      %v2042 = vsub.f32 %v1971, %v2030
      %v2043 = vsub.f32 %v1990, %v2033
      %v2044 = vsub.f32 %v2009, %v2036
      %v2045 = vmul.f32 %v2037, 1.442695
      %v2046 = vpow.pop %v2045
      %v2047 = vmul.f32 %v2038, 1.442695
      %v2048 = vpow.pop %v2047
      %v2049 = vmul.f32 %v2039, 1.442695
      %v2050 = vpow.pop %v2049
      %v2051 = vmul.f32 %v2040, 1.442695
      %v2052 = vpow.pop %v2051
      %v2053 = vmul.f32 %v2041, 1.442695
      %v2054 = vpow.pop %v2053
      %v2055 = vmul.f32 %v2042, 1.442695
      %v2056 = vpow.pop %v2055
      %v2057 = vmul.f32 %v2043, 1.442695
      %v2058 = vpow.pop %v2057
      %v2059 = vmul.f32 %v2044, 1.442695
      %v2060 = vpow.pop %v2059
      %v2061 = vsel %vm2012, %v2046, 0.0
      %2062 = vadd.xlane.f32.xlu0 %v2061
      %v2063 = vpop.xlane.xlu0 %2062
      %v2064 = vsel %vm2012, %v2048, 0.0
      %2065 = vadd.xlane.f32.xlu0 %v2064
      %v2066 = vpop.xlane.xlu0 %2065
      %v2067 = vsel %vm2012, %v2050, 0.0
      %2068 = vadd.xlane.f32.xlu0 %v2067
      %v2069 = vpop.xlane.xlu0 %2068
      %v2070 = vsel %vm2012, %v2052, 0.0
      %2071 = vadd.xlane.f32.xlu0 %v2070
      %v2072 = vpop.xlane.xlu0 %2071
      %v2073 = vsel %vm2012, %v2054, 0.0
      %2074 = vadd.xlane.f32.xlu0 %v2073
      %v2075 = vpop.xlane.xlu0 %2074
      %v2076 = vsel %vm2012, %v2056, 0.0
      %2077 = vadd.xlane.f32.xlu0 %v2076
      %v2078 = vpop.xlane.xlu0 %2077
      %v2079 = vsel %vm2012, %v2058, 0.0
      %2080 = vadd.xlane.f32.xlu0 %v2079
      %v2081 = vpop.xlane.xlu0 %2080
      %v2082 = vsel %vm2012, %v2060, 0.0
      %2083 = vadd.xlane.f32.xlu0 %v2082
      %v2084 = vpop.xlane.xlu0 %2083
      %v2085 = vrcp.pop %v2063
      %v2086 = vrcp.pop %v2066
      %v2087 = vrcp.pop %v2069
      %v2088 = vrcp.pop %v2072
      %v2089 = vrcp.pop %v2075
      %v2090 = vrcp.pop %v2078
      %v2091 = vrcp.pop %v2081
      %v2092 = vrcp.pop %v2084
      %v2093 = vmul.f32 %v2046, %v2085
      %v2094 = vmul.f32 %v2048, %v2086
      %v2095 = vmul.f32 %v2050, %v2087
      %v2096 = vmul.f32 %v2052, %v2088
      %v2097 = vmul.f32 %v2054, %v2089
      %v2098 = vmul.f32 %v2056, %v2090
      %v2099 = vmul.f32 %v2058, %v2091
      %v2100 = vmul.f32 %v2060, %v2092
      %v2101 = vpack.c.bf16 %v2093, %v2093
      %v2102 = vpack.c.bf16 %v2094, %v2094
      %v2103 = vpack.c.bf16 %v2095, %v2095
      %v2104 = vpack.c.bf16 %v2096, %v2096
      %v2105 = vpack.c.bf16 %v2097, %v2097
      %v2106 = vpack.c.bf16 %v2098, %v2098
      %v2107 = vpack.c.bf16 %v2099, %v2099
      %v2108 = vpack.c.bf16 %v2100, %v2100
      %v2110 = vsel %vm2012, %v2101, 0
      %vm2112 = vcmask 1043456
      %v2114 = vsel %vm2112, %v1831, 0
      %2116 = vmatpush.bf16.msra.mxu0 0
      %2117 = vmatpush.bf16.msra.mxu0 0
      %2118 = vmatpush.bf16.msra.mxu0 0
      %2119 = vmatpush.bf16.msra.mxu0 0
      %2120 = vmatpush.bf16.msra.mxu0 0
      %2121 = vmatpush.bf16.msra.mxu0 0
      %2122 = vmatpush.bf16.msra.mxu0 0
      %2123 = vmatpush.bf16.msra.mxu0 %v2114
      %2124 = vmatmul.bf16.gmra.mxu0 %v2110
      %v2125 = vpop.f32.mrf.mxu0
      %v2126 = vadd.f32 0.0, %v2125
      %v2127 = vpop.f32.mrf.mxu0
      %2128 = vdwg.mxu0
      %v2130 = vsel %vm2012, %v2102, 0
      %v2133 = vsel %vm2112, %v1834, 0
      %2135 = vmatpush.bf16.msra.mxu0 0
      %2136 = vmatpush.bf16.msra.mxu0 0
      %2137 = vmatpush.bf16.msra.mxu0 0
      %2138 = vmatpush.bf16.msra.mxu0 0
      %2139 = vmatpush.bf16.msra.mxu0 0
      %2140 = vmatpush.bf16.msra.mxu0 0
      %2141 = vmatpush.bf16.msra.mxu0 0
      %2142 = vmatpush.bf16.msra.mxu0 %v2133
      %2143 = vmatmul.bf16.gmra.mxu0 %v2130
      %v2144 = vpop.f32.mrf.mxu0
      %v2145 = vadd.f32 0.0, %v2144
      %v2146 = vpop.f32.mrf.mxu0
      %2147 = vdwg.mxu0
      %v2149 = vsel %vm2012, %v2103, 0
      %v2152 = vsel %vm2112, %v1837, 0
      %2154 = vmatpush.bf16.msra.mxu0 0
      %2155 = vmatpush.bf16.msra.mxu0 0
      %2156 = vmatpush.bf16.msra.mxu0 0
      %2157 = vmatpush.bf16.msra.mxu0 0
      %2158 = vmatpush.bf16.msra.mxu0 0
      %2159 = vmatpush.bf16.msra.mxu0 0
      %2160 = vmatpush.bf16.msra.mxu0 0
      %2161 = vmatpush.bf16.msra.mxu0 %v2152
      %2162 = vmatmul.bf16.gmra.mxu0 %v2149
      %v2163 = vpop.f32.mrf.mxu0
      %v2164 = vadd.f32 0.0, %v2163
      %v2165 = vpop.f32.mrf.mxu0
      %2166 = vdwg.mxu0
      %v2168 = vsel %vm2012, %v2104, 0
      %v2171 = vsel %vm2112, %v1840, 0
      %2173 = vmatpush.bf16.msra.mxu0 0
      %2174 = vmatpush.bf16.msra.mxu0 0
      %2175 = vmatpush.bf16.msra.mxu0 0
      %2176 = vmatpush.bf16.msra.mxu0 0
      %2177 = vmatpush.bf16.msra.mxu0 0
      %2178 = vmatpush.bf16.msra.mxu0 0
      %2179 = vmatpush.bf16.msra.mxu0 0
      %2180 = vmatpush.bf16.msra.mxu0 %v2171
      %2181 = vmatmul.bf16.gmra.mxu0 %v2168
      %v2182 = vpop.f32.mrf.mxu0
      %v2183 = vadd.f32 0.0, %v2182
      %v2184 = vpop.f32.mrf.mxu0
      %2185 = vdwg.mxu0
      %v2187 = vsel %vm2012, %v2105, 0
      %v2190 = vsel %vm2112, %v1843, 0
      %2192 = vmatpush.bf16.msra.mxu0 0
      %2193 = vmatpush.bf16.msra.mxu0 0
      %2194 = vmatpush.bf16.msra.mxu0 0
      %2195 = vmatpush.bf16.msra.mxu0 0
      %2196 = vmatpush.bf16.msra.mxu0 0
      %2197 = vmatpush.bf16.msra.mxu0 0
      %2198 = vmatpush.bf16.msra.mxu0 0
      %2199 = vmatpush.bf16.msra.mxu0 %v2190
      %2200 = vmatmul.bf16.gmra.mxu0 %v2187
      %v2201 = vpop.f32.mrf.mxu0
      %v2202 = vadd.f32 0.0, %v2201
      %v2203 = vpop.f32.mrf.mxu0
      %2204 = vdwg.mxu0
      %v2206 = vsel %vm2012, %v2106, 0
      %v2209 = vsel %vm2112, %v1846, 0
      %2211 = vmatpush.bf16.msra.mxu0 0
      %2212 = vmatpush.bf16.msra.mxu0 0
      %2213 = vmatpush.bf16.msra.mxu0 0
      %2214 = vmatpush.bf16.msra.mxu0 0
      %2215 = vmatpush.bf16.msra.mxu0 0
      %2216 = vmatpush.bf16.msra.mxu0 0
      %2217 = vmatpush.bf16.msra.mxu0 0
      %2218 = vmatpush.bf16.msra.mxu0 %v2209
      %2219 = vmatmul.bf16.gmra.mxu0 %v2206
      %v2220 = vpop.f32.mrf.mxu0
      %v2221 = vadd.f32 0.0, %v2220
      %v2222 = vpop.f32.mrf.mxu0
      %2223 = vdwg.mxu0
      %v2225 = vsel %vm2012, %v2107, 0
      %v2228 = vsel %vm2112, %v1849, 0
      %2230 = vmatpush.bf16.msra.mxu0 0
      %2231 = vmatpush.bf16.msra.mxu0 0
      %2232 = vmatpush.bf16.msra.mxu0 0
      %2233 = vmatpush.bf16.msra.mxu0 0
      %2234 = vmatpush.bf16.msra.mxu0 0
      %2235 = vmatpush.bf16.msra.mxu0 0
      %2236 = vmatpush.bf16.msra.mxu0 0
      %2237 = vmatpush.bf16.msra.mxu0 %v2228
      %2238 = vmatmul.bf16.gmra.mxu0 %v2225
      %v2239 = vpop.f32.mrf.mxu0
      %v2240 = vadd.f32 0.0, %v2239
      %v2241 = vpop.f32.mrf.mxu0
      %2242 = vdwg.mxu0
      %v2244 = vsel %vm2012, %v2108, 0
      %v2247 = vsel %vm2112, %v1852, 0
      %2249 = vmatpush.bf16.msra.mxu0 0
      %2250 = vmatpush.bf16.msra.mxu0 0
      %2251 = vmatpush.bf16.msra.mxu0 0
      %2252 = vmatpush.bf16.msra.mxu0 0
      %2253 = vmatpush.bf16.msra.mxu0 0
      %2254 = vmatpush.bf16.msra.mxu0 0
      %2255 = vmatpush.bf16.msra.mxu0 0
      %2256 = vmatpush.bf16.msra.mxu0 %v2247
      %2257 = vmatmul.bf16.gmra.mxu0 %v2244
      %v2258 = vpop.f32.mrf.mxu0
      %v2259 = vadd.f32 0.0, %v2258
      %v2260 = vpop.f32.mrf.mxu0
      %2261 = vdwg.mxu0
      %v2262 = vpack.c.bf16 %v2126, %v2126
      %v2263 = vpack.c.bf16 %v2145, %v2145
      %v2264 = vpack.c.bf16 %v2164, %v2164
      %v2265 = vpack.c.bf16 %v2183, %v2183
      %v2266 = vpack.c.bf16 %v2202, %v2202
      %v2267 = vpack.c.bf16 %v2221, %v2221
      %v2268 = vpack.c.bf16 %v2240, %v2240
      %v2269 = vpack.c.bf16 %v2259, %v2259
      %v2272 = vpack.i.b16 %v2263, %v2262
      %v2273 = vshrl.u32 %v2262, 16
      %v2274 = vshrl.u32 %v2263, 16
      %v2275 = vpack.i.b16 %v2274, %v2273
      %v2278 = vpack.i.b16 %v2265, %v2264
      %v2279 = vshrl.u32 %v2264, 16
      %v2280 = vshrl.u32 %v2265, 16
      %v2281 = vpack.i.b16 %v2280, %v2279
      %v2284 = vpack.i.b16 %v2267, %v2266
      %v2285 = vshrl.u32 %v2266, 16
      %v2286 = vshrl.u32 %v2267, 16
      %v2287 = vpack.i.b16 %v2286, %v2285
      %v2290 = vpack.i.b16 %v2269, %v2268
      %v2291 = vshrl.u32 %v2268, 16
      %v2292 = vshrl.u32 %v2269, 16
      %v2293 = vpack.i.b16 %v2292, %v2291
      %v2296 = vunpack.c.l.s4 1983009808
      %v2297 = vunpack.c.0.s8 %v2296
      %v2298 = vperm.slane %v2272, %v2297
      %v2301 = vunpack.c.l.s4 1983009808
      %v2302 = vunpack.c.0.s8 %v2301
      %v2303 = vperm.slane %v2278, %v2302
      %v2304 = vrot.slane %v2303, 4
      %v2305 = vsel %vm1171, %v2304, %v2298
      %v2306 = vrot.slane %v2298, 4
      %v2307 = vsel %vm1171, %v2303, %v2306
      %v2309 = vunpack.c.l.s4 1934713408
      %v2310 = vunpack.c.0.s8 %v2309
      %v2311 = vperm.slane %v2305, %v2310
      %v2313 = vunpack.c.l.s4 1934713408
      %v2314 = vunpack.c.0.s8 %v2313
      %v2315 = vperm.slane %v2307, %v2314
      %v2316 = vrot.slane %v2311, 4
      %v2317 = vsel %vm1171, 0, %v2316
      %v2318 = vrot.slane %v2315, 4
      %v2319 = vsel %vm1171, 0, %v2318
      %v2322 = vunpack.c.l.s4 1983009808
      %v2323 = vunpack.c.0.s8 %v2322
      %v2324 = vperm.slane %v2275, %v2323
      %v2327 = vunpack.c.l.s4 1983009808
      %v2328 = vunpack.c.0.s8 %v2327
      %v2329 = vperm.slane %v2281, %v2328
      %v2330 = vrot.slane %v2329, 4
      %v2331 = vsel %vm1171, %v2330, %v2324
      %v2332 = vrot.slane %v2324, 4
      %v2333 = vsel %vm1171, %v2329, %v2332
      %v2335 = vunpack.c.l.s4 1934713408
      %v2336 = vunpack.c.0.s8 %v2335
      %v2337 = vperm.slane %v2331, %v2336
      %v2339 = vunpack.c.l.s4 1934713408
      %v2340 = vunpack.c.0.s8 %v2339
      %v2341 = vperm.slane %v2333, %v2340
      %v2342 = vrot.slane %v2337, 4
      %v2343 = vsel %vm1171, 0, %v2342
      %v2344 = vrot.slane %v2341, 4
      %v2345 = vsel %vm1171, 0, %v2344
      %v2348 = vunpack.c.l.s4 1983009808
      %v2349 = vunpack.c.0.s8 %v2348
      %v2350 = vperm.slane %v2284, %v2349
      %v2353 = vunpack.c.l.s4 1983009808
      %v2354 = vunpack.c.0.s8 %v2353
      %v2355 = vperm.slane %v2290, %v2354
      %v2356 = vrot.slane %v2355, 4
      %v2357 = vsel %vm1171, %v2356, %v2350
      %v2358 = vrot.slane %v2350, 4
      %v2359 = vsel %vm1171, %v2355, %v2358
      %v2361 = vunpack.c.l.s4 1934713408
      %v2362 = vunpack.c.0.s8 %v2361
      %v2363 = vperm.slane %v2357, %v2362
      %v2365 = vunpack.c.l.s4 1934713408
      %v2366 = vunpack.c.0.s8 %v2365
      %v2367 = vperm.slane %v2359, %v2366
      %v2368 = vrot.slane %v2363, 4
      %v2369 = vsel %vm1171, 0, %v2368
      %v2370 = vrot.slane %v2367, 4
      %v2371 = vsel %vm1171, 0, %v2370
      %v2374 = vunpack.c.l.s4 1983009808
      %v2375 = vunpack.c.0.s8 %v2374
      %v2376 = vperm.slane %v2287, %v2375
      %v2379 = vunpack.c.l.s4 1983009808
      %v2380 = vunpack.c.0.s8 %v2379
      %v2381 = vperm.slane %v2293, %v2380
      %v2382 = vrot.slane %v2381, 4
      %v2383 = vsel %vm1171, %v2382, %v2376
      %v2384 = vrot.slane %v2376, 4
      %v2385 = vsel %vm1171, %v2381, %v2384
      %v2387 = vunpack.c.l.s4 1934713408
      %v2388 = vunpack.c.0.s8 %v2387
      %v2389 = vperm.slane %v2383, %v2388
      %v2391 = vunpack.c.l.s4 1934713408
      %v2392 = vunpack.c.0.s8 %v2391
      %v2393 = vperm.slane %v2385, %v2392
      %v2394 = vrot.slane %v2389, 4
      %v2395 = vsel %vm1171, 0, %v2394
      %v2396 = vrot.slane %v2393, 4
      %v2397 = vsel %vm1171, 0, %v2396
      %v2398 = vsel %vm1171, %v2318, %v2311
      %v2400 = vunpack.c.l.s4 1983009808
      %v2401 = vunpack.c.0.s8 %v2400
      %v2402 = vperm.slane %v2398, %v2401
      %v2403 = vrot.slane %v2319, 4
      %v2404 = vsel %vm1171, %v2403, %v2317
      %v2406 = vunpack.c.l.s4 1983009808
      %v2407 = vunpack.c.0.s8 %v2406
      %v2408 = vperm.slane %v2404, %v2407
      %v2409 = vrot.slane %v2408, 4
      %v2410 = vsel %vm1171, %v2409, %v2402
      %v2412 = vunpack.c.l.s4 1934713408
      %v2413 = vunpack.c.0.s8 %v2412
      %v2414 = vperm.slane %v2410, %v2413
      %v2415 = vrot.slane %v2414, 4
      %v2416 = vsel %vm1171, 0, %v2415
      %v2417 = vsel %vm1171, %v2344, %v2337
      %v2419 = vunpack.c.l.s4 1983009808
      %v2420 = vunpack.c.0.s8 %v2419
      %v2421 = vperm.slane %v2417, %v2420
      %v2422 = vrot.slane %v2345, 4
      %v2423 = vsel %vm1171, %v2422, %v2343
      %v2425 = vunpack.c.l.s4 1983009808
      %v2426 = vunpack.c.0.s8 %v2425
      %v2427 = vperm.slane %v2423, %v2426
      %v2428 = vrot.slane %v2427, 4
      %v2429 = vsel %vm1171, %v2428, %v2421
      %v2431 = vunpack.c.l.s4 1934713408
      %v2432 = vunpack.c.0.s8 %v2431
      %v2433 = vperm.slane %v2429, %v2432
      %v2434 = vrot.slane %v2433, 4
      %v2435 = vsel %vm1171, 0, %v2434
      %v2436 = vsel %vm1171, %v2370, %v2363
      %v2438 = vunpack.c.l.s4 1983009808
      %v2439 = vunpack.c.0.s8 %v2438
      %v2440 = vperm.slane %v2436, %v2439
      %v2441 = vrot.slane %v2371, 4
      %v2442 = vsel %vm1171, %v2441, %v2369
      %v2444 = vunpack.c.l.s4 1983009808
      %v2445 = vunpack.c.0.s8 %v2444
      %v2446 = vperm.slane %v2442, %v2445
      %v2447 = vrot.slane %v2446, 4
      %v2448 = vsel %vm1171, %v2447, %v2440
      %v2450 = vunpack.c.l.s4 1934713408
      %v2451 = vunpack.c.0.s8 %v2450
      %v2452 = vperm.slane %v2448, %v2451
      %v2453 = vrot.slane %v2452, 4
      %v2454 = vsel %vm1171, 0, %v2453
      %v2455 = vsel %vm1171, %v2396, %v2389
      %v2457 = vunpack.c.l.s4 1983009808
      %v2458 = vunpack.c.0.s8 %v2457
      %v2459 = vperm.slane %v2455, %v2458
      %v2460 = vrot.slane %v2397, 4
      %v2461 = vsel %vm1171, %v2460, %v2395
      %v2463 = vunpack.c.l.s4 1983009808
      %v2464 = vunpack.c.0.s8 %v2463
      %v2465 = vperm.slane %v2461, %v2464
      %v2466 = vrot.slane %v2465, 4
      %v2467 = vsel %vm1171, %v2466, %v2459
      %v2469 = vunpack.c.l.s4 1934713408
      %v2470 = vunpack.c.0.s8 %v2469
      %v2471 = vperm.slane %v2467, %v2470
      %v2472 = vrot.slane %v2471, 4
      %v2473 = vsel %vm1171, 0, %v2472
      %v2476 = vpack.i.b16 %v2433, %v2414
      %v2477 = vshrl.u32 %v2414, 16
      %v2478 = vshrl.u32 %v2433, 16
      %v2479 = vpack.i.b16 %v2478, %v2477
      %v2482 = vpack.i.b16 %v2435, %v2416
      %v2483 = vshrl.u32 %v2416, 16
      %v2484 = vshrl.u32 %v2435, 16
      %v2485 = vpack.i.b16 %v2484, %v2483
      %v2488 = vpack.i.b16 %v2471, %v2452
      %v2489 = vshrl.u32 %v2452, 16
      %v2490 = vshrl.u32 %v2471, 16
      %v2491 = vpack.i.b16 %v2490, %v2489
      %v2494 = vpack.i.b16 %v2473, %v2454
      %v2495 = vshrl.u32 %v2454, 16
      %v2496 = vshrl.u32 %v2473, 16
      %v2497 = vpack.i.b16 %v2496, %v2495
      %v2498 = vunpack.c.l.b16 %v2476
      %v2499 = vunpack.c.l.b16 %v2488
      %v2500 = vpack.c.b16 %v2499, %v2498
      %v2501 = vunpack.c.l.b16 %v2479
      %v2502 = vunpack.c.l.b16 %v2491
      %v2503 = vpack.c.b16 %v2502, %v2501
      %2504 = vrot.lane.b32.xlu0 %v2503, 32
      %v2505 = vpop.permute.xlu0 %2504
      %v2506 = vunpack.c.l.b16 %v2482
      %v2507 = vunpack.c.l.b16 %v2494
      %v2508 = vpack.c.b16 %v2507, %v2506
      %2509 = vrot.lane.b32.xlu0 %v2508, 64
      %v2510 = vpop.permute.xlu0 %2509
      %v2511 = vunpack.c.l.b16 %v2485
      %v2512 = vunpack.c.l.b16 %v2497
      %v2513 = vpack.c.b16 %v2512, %v2511
      %2514 = vrot.lane.b32.xlu0 %v2513, 96
      %v2515 = vpop.permute.xlu0 %2514
      %v2518 = vsel %vm1859, %v2500, %v2505
      %vm2519 = vcmask 523264
      %v2521 = vsel %vm2519, %v2518, %v2510
      %vm2522 = vcmask 785408
      %v2524 = vsel %vm2522, %v2521, %v2515
      %v2526 = vld [vmem:[%s756] sm:$0xf]
      %v2527 = vld [vmem:[%s756 + $0x4] sm:$0xf]
      %v2528 = vld [vmem:[%s756 + $0x8] sm:$0xf]
      %v2529 = vld [vmem:[%s756 + $0xc] sm:$0xf]
      %v2530 = vld [vmem:[%s756 + $0x10] sm:$0xf]
      %v2531 = vld [vmem:[%s756 + $0x14] sm:$0xf]
      %v2532 = vld [vmem:[%s756 + $0x18] sm:$0xf]
      %v2533 = vld [vmem:[%s756 + $0x1c] sm:$0xf]
      %v2534 = vld [vmem:[%s756 + $0x20] sm:$0xf]
      %v2535 = vld [vmem:[%s756 + $0x24] sm:$0xf]
      %v2536 = vld [vmem:[%s756 + $0x28] sm:$0xf]
      %v2537 = vld [vmem:[%s756 + $0x2c] sm:$0xf]
      %v2538 = vld [vmem:[%s756 + $0x30] sm:$0xf]
      %v2539 = vld [vmem:[%s756 + $0x34] sm:$0xf]
      %v2540 = vld [vmem:[%s756 + $0x38] sm:$0xf]
      %v2541 = vld [vmem:[%s756 + $0x3c] sm:$0xf]
      %v2542 = vld [vmem:[%s759] sm:$0x1]
      %v2544 = vperm.slane %v2542, 0
      %v2562 = vunpack.c.l.b16 %v2526
      %v2563 = vunpack.c.l.b16 %v2527
      %v2564 = vunpack.c.l.b16 %v2528
      %v2565 = vunpack.c.l.b16 %v2529
      %v2566 = vunpack.c.l.b16 %v2530
      %v2567 = vunpack.c.l.b16 %v2531
      %v2568 = vunpack.c.l.b16 %v2532
      %v2569 = vunpack.c.l.b16 %v2533
      %v2570 = vunpack.c.l.b16 %v2534
      %v2571 = vunpack.c.l.b16 %v2535
      %v2572 = vunpack.c.l.b16 %v2536
      %v2573 = vunpack.c.l.b16 %v2537
      %v2574 = vunpack.c.l.b16 %v2538
      %v2575 = vunpack.c.l.b16 %v2539
      %v2576 = vunpack.c.l.b16 %v2540
      %v2577 = vunpack.c.l.b16 %v2541
      %v2578 = vpack.c.b16 %v2563, %v2562
      %v2579 = vpack.c.b16 %v2565, %v2564
      %v2580 = vpack.c.b16 %v2567, %v2566
      %v2581 = vpack.c.b16 %v2569, %v2568
      %v2582 = vpack.c.b16 %v2571, %v2570
      %v2583 = vpack.c.b16 %v2573, %v2572
      %v2584 = vpack.c.b16 %v2575, %v2574
      %v2585 = vpack.c.b16 %v2577, %v2576
      %2594 = vmatpush.bf16.msra.mxu0 %v2585
      %2595 = vmatpush.bf16.msra.mxu0 %v2584
      %2596 = vmatpush.bf16.msra.mxu0 %v2583
      %2597 = vmatpush.bf16.msra.mxu0 %v2582
      %2598 = vmatpush.bf16.msra.mxu0 %v2581
      %2599 = vmatpush.bf16.msra.mxu0 %v2580
      %2600 = vmatpush.bf16.msra.mxu0 %v2579
      %2601 = vmatpush.bf16.msra.mxu0 %v2578
      %2602 = vmatmul.bf16.gmra.mxu0 %v2524
      %v2603 = vpop.f32.mrf.mxu0
      %v2604 = vadd.f32 %v2544, %v2603
      %v2605 = vpop.f32.mrf.mxu0
      %v2606 = vadd.f32 %v2544, %v2605
      %2607 = vdwg.mxu0
      %v2608 = vadd.f32 %v856, %v2604
      %v2609 = vadd.f32 %v857, %v2606
      %v2610 = vld [vmem:[%s762] sm:$0x1]
      %v2611 = vld [vmem:[%s765] sm:$0x1]
      %2612 = vadd.xlane.f32.xlu0 %v2608
      %v2613 = vpop.xlane.xlu0 %2612
      %2614 = vadd.xlane.f32.xlu0 %v2609
      %v2615 = vpop.xlane.xlu0 %2614
      %v2616 = vmul.f32 %v2613, 0.03125
      %v2617 = vmul.f32 %v2615, 0.03125
      %v2618 = vsub.f32 %v2608, %v2616
      %v2619 = vsub.f32 %v2609, %v2617
      %v2620 = vsel %vm813, %v2618, 0.0
      %v2621 = vsel %vm813, %v2619, 0.0
      %v2622 = vmul.f32 %v2620, %v2620
      %v2623 = vmul.f32 %v2621, %v2621
      %2624 = vadd.xlane.f32.xlu0 %v2622
      %v2625 = vpop.xlane.xlu0 %2624
      %2626 = vadd.xlane.f32.xlu0 %v2623
      %v2627 = vpop.xlane.xlu0 %2626
      %v2628 = vmul.f32 %v2625, 0.03125
      %v2629 = vmul.f32 %v2627, 0.03125
      %v2630 = vadd.f32 %v2628, 1e-05
      %v2631 = vadd.f32 %v2629, 1e-05
      %v2632 = vrsqrt.pop %v2630
      %v2633 = vmul.f32 %v2632, %v2630
      %v2634 = vmul.f32 %v2633, %v2632
      %v2635 = vmul.f32 0.5, %v2634
      %v2636 = vsub.f32 1.5, %v2635
      %v2637 = vmul.f32 %v2632, %v2636
      %vm2638 = vweird.f32 %v2630
      %vm2639 = vweird.f32 %v2632
      %vm2640 = vmor %vm2638, %vm2639
      %v2641 = vsel %vm2640, %v2632, %v2637
      %v2642 = vrsqrt.pop %v2631
      %v2643 = vmul.f32 %v2642, %v2631
      %v2644 = vmul.f32 %v2643, %v2642
      %v2645 = vmul.f32 0.5, %v2644
      %v2646 = vsub.f32 1.5, %v2645
      %v2647 = vmul.f32 %v2642, %v2646
      %vm2648 = vweird.f32 %v2631
      %vm2649 = vweird.f32 %v2642
      %vm2650 = vmor %vm2648, %vm2649
      %v2651 = vsel %vm2650, %v2642, %v2647
      %v2652 = vmul.f32 %v2620, %v2641
      %v2653 = vmul.f32 %v2621, %v2651
      %v2655 = vperm.slane %v2610, 0
      %v2657 = vmul.f32 %v2652, %v2655
      %v2658 = vmul.f32 %v2653, %v2655
      %v2660 = vperm.slane %v2611, 0
      %v2662 = vadd.f32 %v2657, %v2660
      %v2663 = vadd.f32 %v2658, %v2660
      %v2664 = vpack.c.bf16 %v2663, %v2662
      %v2665 = vld [vmem:[%s770] sm:$0xf]
      %v2666 = vld [vmem:[%s770 + $0x4] sm:$0xf]
      %v2667 = vld [vmem:[%s770 + $0x8] sm:$0xf]
      %v2668 = vld [vmem:[%s770 + $0xc] sm:$0xf]
      %v2669 = vld [vmem:[%s770 + $0x10] sm:$0xf]
      %v2670 = vld [vmem:[%s770 + $0x14] sm:$0xf]
      %v2671 = vld [vmem:[%s770 + $0x18] sm:$0xf]
      %v2672 = vld [vmem:[%s770 + $0x1c] sm:$0xf]
      %v2673 = vld [vmem:[%s770 + $0x20] sm:$0xf]
      %v2674 = vld [vmem:[%s770 + $0x24] sm:$0xf]
      %v2675 = vld [vmem:[%s770 + $0x28] sm:$0xf]
      %v2676 = vld [vmem:[%s770 + $0x2c] sm:$0xf]
      %v2677 = vld [vmem:[%s770 + $0x30] sm:$0xf]
      %v2678 = vld [vmem:[%s770 + $0x34] sm:$0xf]
      %v2679 = vld [vmem:[%s770 + $0x38] sm:$0xf]
      %v2680 = vld [vmem:[%s770 + $0x3c] sm:$0xf]
      %v2681 = vld [vmem:[%s773] sm:$0x1]
      %v2683 = vperm.slane %v2681, 0
      %v2701 = vunpack.c.l.b16 %v2665
      %v2702 = vunpack.c.l.b16 %v2666
      %v2703 = vunpack.c.l.b16 %v2667
      %v2704 = vunpack.c.l.b16 %v2668
      %v2705 = vunpack.c.l.b16 %v2669
      %v2706 = vunpack.c.l.b16 %v2670
      %v2707 = vunpack.c.l.b16 %v2671
      %v2708 = vunpack.c.l.b16 %v2672
      %v2709 = vunpack.c.l.b16 %v2673
      %v2710 = vunpack.c.l.b16 %v2674
      %v2711 = vunpack.c.l.b16 %v2675
      %v2712 = vunpack.c.l.b16 %v2676
      %v2713 = vunpack.c.l.b16 %v2677
      %v2714 = vunpack.c.l.b16 %v2678
      %v2715 = vunpack.c.l.b16 %v2679
      %v2716 = vunpack.c.l.b16 %v2680
      %v2717 = vpack.c.b16 %v2702, %v2701
      %v2718 = vpack.c.b16 %v2704, %v2703
      %v2719 = vpack.c.b16 %v2706, %v2705
      %v2720 = vpack.c.b16 %v2708, %v2707
      %v2721 = vpack.c.b16 %v2710, %v2709
      %v2722 = vpack.c.b16 %v2712, %v2711
      %v2723 = vpack.c.b16 %v2714, %v2713
      %v2724 = vpack.c.b16 %v2716, %v2715
      %2733 = vmatpush.bf16.msra.mxu0 %v2724
      %2734 = vmatpush.bf16.msra.mxu0 %v2723
      %2735 = vmatpush.bf16.msra.mxu0 %v2722
      %2736 = vmatpush.bf16.msra.mxu0 %v2721
      %2737 = vmatpush.bf16.msra.mxu0 %v2720
      %2738 = vmatpush.bf16.msra.mxu0 %v2719
      %2739 = vmatpush.bf16.msra.mxu0 %v2718
      %2740 = vmatpush.bf16.msra.mxu0 %v2717
      %2741 = vmatmul.bf16.gmra.mxu0 %v2664
      %v2742 = vpop.f32.mrf.mxu0
      %v2743 = vadd.f32 %v2683, %v2742
      %v2744 = vpop.f32.mrf.mxu0
      %v2745 = vadd.f32 %v2683, %v2744
      %2746 = vdwg.mxu0
      %v2747 = vmax.f32 %v2743, 0.0
      %v2748 = vmax.f32 %v2745, 0.0
      %v2749 = vpack.c.bf16 %v2748, %v2747
      %v2750 = vld [vmem:[%s778] sm:$0xf]
      %v2751 = vld [vmem:[%s778 + $0x4] sm:$0xf]
      %v2752 = vld [vmem:[%s778 + $0x8] sm:$0xf]
      %v2753 = vld [vmem:[%s778 + $0xc] sm:$0xf]
      %v2754 = vld [vmem:[%s778 + $0x10] sm:$0xf]
      %v2755 = vld [vmem:[%s778 + $0x14] sm:$0xf]
      %v2756 = vld [vmem:[%s778 + $0x18] sm:$0xf]
      %v2757 = vld [vmem:[%s778 + $0x1c] sm:$0xf]
      %v2758 = vld [vmem:[%s778 + $0x20] sm:$0xf]
      %v2759 = vld [vmem:[%s778 + $0x24] sm:$0xf]
      %v2760 = vld [vmem:[%s778 + $0x28] sm:$0xf]
      %v2761 = vld [vmem:[%s778 + $0x2c] sm:$0xf]
      %v2762 = vld [vmem:[%s778 + $0x30] sm:$0xf]
      %v2763 = vld [vmem:[%s778 + $0x34] sm:$0xf]
      %v2764 = vld [vmem:[%s778 + $0x38] sm:$0xf]
      %v2765 = vld [vmem:[%s778 + $0x3c] sm:$0xf]
      %v2766 = vld [vmem:[%s781] sm:$0x1]
      %v2768 = vperm.slane %v2766, 0
      %v2786 = vunpack.c.l.b16 %v2750
      %v2787 = vunpack.c.l.b16 %v2751
      %v2788 = vunpack.c.l.b16 %v2752
      %v2789 = vunpack.c.l.b16 %v2753
      %v2790 = vunpack.c.l.b16 %v2754
      %v2791 = vunpack.c.l.b16 %v2755
      %v2792 = vunpack.c.l.b16 %v2756
      %v2793 = vunpack.c.l.b16 %v2757
      %v2794 = vunpack.c.l.b16 %v2758
      %v2795 = vunpack.c.l.b16 %v2759
      %v2796 = vunpack.c.l.b16 %v2760
      %v2797 = vunpack.c.l.b16 %v2761
      %v2798 = vunpack.c.l.b16 %v2762
      %v2799 = vunpack.c.l.b16 %v2763
      %v2800 = vunpack.c.l.b16 %v2764
      %v2801 = vunpack.c.l.b16 %v2765
      %v2802 = vpack.c.b16 %v2787, %v2786
      %v2803 = vpack.c.b16 %v2789, %v2788
      %v2804 = vpack.c.b16 %v2791, %v2790
      %v2805 = vpack.c.b16 %v2793, %v2792
      %v2806 = vpack.c.b16 %v2795, %v2794
      %v2807 = vpack.c.b16 %v2797, %v2796
      %v2808 = vpack.c.b16 %v2799, %v2798
      %v2809 = vpack.c.b16 %v2801, %v2800
      %2818 = vmatpush.bf16.msra.mxu0 %v2809
      %2819 = vmatpush.bf16.msra.mxu0 %v2808
      %2820 = vmatpush.bf16.msra.mxu0 %v2807
      %2821 = vmatpush.bf16.msra.mxu0 %v2806
      %2822 = vmatpush.bf16.msra.mxu0 %v2805
      %2823 = vmatpush.bf16.msra.mxu0 %v2804
      %2824 = vmatpush.bf16.msra.mxu0 %v2803
      %2825 = vmatpush.bf16.msra.mxu0 %v2802
      %2826 = vmatmul.bf16.gmra.mxu0 %v2749
      %v2827 = vpop.f32.mrf.mxu0
      %v2828 = vadd.f32 %v2768, %v2827
      %v2829 = vpop.f32.mrf.mxu0
      %v2830 = vadd.f32 %v2768, %v2829
      %2831 = vdwg.mxu0
      %v2832 = vadd.f32 %v2662, %v2828
      %v2833 = vadd.f32 %v2663, %v2830
      %2834 = vst [vmem:[#allocation2] sm:$0xff] %v2832
      %2835 = vst [vmem:[#allocation2 + $0x8] sm:$0xff] %v2833
      %p2836 = scmp.eq.s32.totalorder %s32, 1
      // Predicated region
      $region89: #{crossmodal_transformer.1} parent=83 // pred_check
        %p2837 = pneg %p2836
      $region90: #{crossmodal_transformer.1} parent=83 // pred_check_branch
        %2839 = sbr.rel (%p2837) target = $region92
      $region91: #{crossmodal_transformer.1} parent=83 // pred_region
        %2840 = vst [vmem:[%s786] sm:$0xff] %v2832
        %2841 = vst [vmem:[%s786 + $0x8] sm:$0xff] %v2833
      $region92: #{crossmodal_transformer.1} parent=83 // pred_fallthru
        _
      %s2842 = smul.u32 2, %s31
      %p2843 = scmp.lt.s32.totalorder %s2842, 1
      %s2844 = scalar_select %p2843, %s2842, 1
      %s2845 = smul.addr %s2844, 8
      %s2846 = scalar_lea.vmem %s16, %s2845
      // Predicated region
      $region93: #{crossmodal_transformer.1} parent=83 // pred_check
        %p2847 = pneg %p473
      $region94: #{crossmodal_transformer.1} parent=83 // pred_check_branch
        %2849 = sbr.rel (%p2847) target = $region96
      $region95: #{crossmodal_transformer.1} parent=83 // pred_region
        %s2850 = smul.u32 2, %s31
      $region96: #{crossmodal_transformer.1} parent=83 // pred_fallthru
        _
      // Predicated region
      $region97: #{crossmodal_transformer.1} parent=83 // pred_check
        %p2851 = pneg %p473
      $region98: #{crossmodal_transformer.1} parent=83 // pred_check_branch
        %2853 = sbr.rel (%p2851) target = $region100
      $region99: #{crossmodal_transformer.1} parent=83 // pred_region
        %s2854 = smul.u32 2, %s31
        %p2855 = scmp.lt.s32.totalorder %s2854, 1
        %s2856 = scalar_select %p2855, %s2854, 1
        %s2857 = smul.addr %s2856, 8
        %s2858 = scalar_lea.vmem %s16, %s2857
      $region100: #{crossmodal_transformer.1} parent=83 // pred_fallthru
        _
    $region84: #{crossmodal_transformer.1} parent=5 // pred_fallthru
      _
    %p2859 = scmp.le.s32.totalorder 2, %s22
    // Predicated region
    $region101: #{crossmodal_transformer.1} parent=5 // pred_check
      %p2860 = pneg %p2859
    $region102: #{crossmodal_transformer.1} parent=5 // pred_check_branch
      %2862 = sbr.rel (%p2860) target = $region104
    $region103: #{crossmodal_transformer.1} parent=5 // pred_region
      %s2863 = ssub.s32 %s22, 2
    $region104: #{crossmodal_transformer.1} parent=5 // pred_fallthru
      _
  $region6: #{crossmodal_transformer.1} parent=0 // loop_footer
    %s26 = sadd.s32 1, %s22
  $region7: #{crossmodal_transformer.1} parent=0 // loop_footer_branch
    %21 = sbr.rel target = $region3
  $region8: #{crossmodal_transformer.1} parent=0 // loop_exit
    _

</llo_original>
